<compile_context>
chip_gen: v5e
topology: v5e:2x2
jax: 0.10.0
libtpu: 0.0.40
codegen_flags: <defaults>
</compile_context>

<pallas_src>
import functools

import jax
import jax.numpy as jnp
from jax.experimental import pallas as pl
from jax.experimental.pallas import tpu as pltpu

IMAGENET_MEAN = jnp.array([0.485, 0.456, 0.406], jnp.float32)
IMAGENET_STD = jnp.array([0.229, 0.224, 0.225], jnp.float32)

MATMUL_DTYPE = jnp.bfloat16   # MXU operand dtype; accumulation stays f32
LANE = 128


def _rup(v, m):
    return ((v + m - 1) // m) * m


def _detect_num_tc():
    # v7x has 2 TensorCores per chip -> split the (tiny) conv grids in two so
    # both cores get work; on v5e/v6e the grid is a serial loop, so 1 step is best.
    try:
        kind = jax.devices()[0].device_kind.lower()
    except Exception:
        return 1
    return 2 if "v7" in kind else 1


_NUM_TC = _detect_num_tc()


# ---------------------------------------------------------------------------
# Pallas kernels
# ---------------------------------------------------------------------------
def _linear_kernel(x_ref, w_ref, b_ref, o_ref, xs_ref, *, act):
    # Activation arrives as unpadded f32 [tm, K]; zero-pad K up to the weight's
    # pre-padded Kp inside VMEM (no HBM pad/cast round trip), cast to bf16 and
    # run an aligned [tm, Kp] @ [Kp, Np] MXU matmul.  Accumulate/bias/relu in f32.
    k = x_ref.shape[1]
    xs_ref[...] = jnp.zeros_like(xs_ref)
    xs_ref[:, :k] = x_ref[...]
    acc = jnp.dot(xs_ref[...].astype(w_ref.dtype), w_ref[...],
                  preferred_element_type=jnp.float32) + b_ref[...]
    if act == "relu":
        acc = jnp.maximum(acc, 0.0)
    o_ref[...] = acc


def _corr_kernel(p_ref, t_ref, o_ref):
    # Cross-correlation scores in f32 (VPU multiply + lane reduce) so top_k
    # ordering matches an f32 reference.  Single grid step covers all batches.
    o_ref[...] = jnp.sum(p_ref[...] * t_ref[...], axis=-1)


def _rcnn_kernel(r_ref, t_ref, w1a_ref, w1b_ref, b1_ref, w2_ref, b2_ref,
                 wh_ref, bh_ref, heads_ref, cls_ref, *, nb, n, tp, t_real):
    # Fused RCNN: objectness/box/refine heads + 2-layer cls MLP in one call.
    # The pair tensor is eliminated: h(b,n,t) = roi[b,n]@W1a + tmpl[b,t]@W1b + b1.
    r = r_ref[...].astype(MATMUL_DTYPE)      # [nb*n,  D]
    t = t_ref[...].astype(MATMUL_DTYPE)      # [nb*tp, D]

    heads_ref[...] = (jnp.dot(r, wh_ref[...], preferred_element_type=jnp.float32)
                      + bh_ref[...])

    h_r = jnp.dot(r, w1a_ref[...], preferred_element_type=jnp.float32)   # [nb*n,  H]
    h_t = jnp.dot(t, w1b_ref[...], preferred_element_type=jnp.float32)   # [nb*tp, H]
    b1 = b1_ref[...]
    bn = nb * n
    for ti in range(t_real):                 # static, tiny (T = 1 + nfeat)
        rows = [h_r[b * n:(b + 1) * n, :]
                + h_t[b * tp + ti:b * tp + ti + 1, :]
                for b in range(nb)]
        h = jnp.maximum(jnp.concatenate(rows, axis=0) + b1, 0.0)          # [bn, H] f32
        cls_t = (jnp.dot(h, w2_ref[...], preferred_element_type=jnp.float32)
                 + b2_ref[...])
        cls_ref[ti * bn:(ti + 1) * bn, :] = cls_t


# ---------------------------------------------------------------------------
# Pallas wrappers
# ---------------------------------------------------------------------------
def pallas_linear(x, w_prep, b_prep, act="none", n_real=None):
    """x: [M, K] f32 (unpadded K) @ pre-padded bf16 weight [Kp, Np] + bias.

    Grid is a single step (two 'parallel' steps on v7x for its dual TC)."""
    M, K = x.shape
    Kp, Np = w_prep.shape
    nblk = _NUM_TC if (_NUM_TC > 1 and M % (_NUM_TC * 8) == 0) else 1
    Mp = _rup(M, 8 * nblk)
    if Mp != M:
        x = jnp.pad(x, ((0, Mp - M), (0, 0)))
    tm = Mp // nblk
    out = pl.pallas_call(
        functools.partial(_linear_kernel, act=act),
        out_shape=jax.ShapeDtypeStruct((Mp, Np), jnp.float32),
        grid=(nblk,),
        in_specs=[
            pl.BlockSpec((tm, K), lambda i: (i, 0)),
            pl.BlockSpec((Kp, Np), lambda i: (0, 0)),
            pl.BlockSpec((1, Np), lambda i: (0, 0)),
        ],
        out_specs=pl.BlockSpec((tm, Np), lambda i: (i, 0)),
        scratch_shapes=[pltpu.VMEM((tm, Kp), jnp.float32)],
        compiler_params=pltpu.CompilerParams(dimension_semantics=("parallel",)),
    )(x, w_prep, b_prep)
    if Mp != M:
        out = out[:M]
    if n_real is not None and n_real != Np:
        out = out[:, :n_real]
    return out


def pallas_corr(patches, tmpl):
    """Correlation scores[b, m] = <template[b], patch[b, m]> in f32.

    patches: [B, M, K], tmpl: [B, 1, K] -> [B, M].  One grid step, no padding,
    no transposes, operands kept f32 for exact top_k ordering."""
    B, M, K = patches.shape
    return pl.pallas_call(
        _corr_kernel,
        out_shape=jax.ShapeDtypeStruct((B, M), jnp.float32),
        grid=(1,),
        in_specs=[
            pl.BlockSpec((B, M, K), lambda i: (0, 0, 0)),
            pl.BlockSpec((B, 1, K), lambda i: (0, 0, 0)),
        ],
        out_specs=pl.BlockSpec((B, M), lambda i: (0, 0)),
        compiler_params=pltpu.CompilerParams(dimension_semantics=("arbitrary",)),
    )(patches, tmpl)


# ---------------------------------------------------------------------------
# JAX glue (im2col, conv-as-matmul, ROI pooling)
# ---------------------------------------------------------------------------
def _im2col(x, kh, kw, stride, padding, pad_value=None):
    B, Cin, H, W = x.shape
    if padding > 0:
        if pad_value is None:
            xpad = jnp.pad(x, ((0, 0), (0, 0), (padding, padding), (padding, padding)))
        else:
            # per-channel constant padding (used for the normalization fold)
            pv = pad_value.reshape(1, -1, 1, 1)
            xpad = jnp.pad(x - pv, ((0, 0), (0, 0), (padding, padding), (padding, padding))) + pv
    else:
        xpad = x
    Ho = (H + 2 * padding - kh) // stride + 1
    Wo = (W + 2 * padding - kw) // stride + 1
    cols = []
    for i in range(kh):
        for j in range(kw):
            cols.append(xpad[:, :, i: i + stride * Ho: stride, j: j + stride * Wo: stride])
    cols = jnp.stack(cols, axis=2)           # [B, Cin, kh*kw, Ho, Wo]
    cols = cols.transpose(0, 3, 4, 1, 2)     # [B, Ho, Wo, Cin, kh*kw]
    return cols.reshape(B, Ho * Wo, Cin * kh * kw), Ho, Wo


def conv2d(x, w_prep, b_prep, n_out, kh, kw, stride=1, padding=1,
           act="relu", pad_value=None):
    """NCHW conv as im2col + single-step Pallas matmul (weights pre-padded)."""
    # TODO(synk): at realistic resolutions move the 3x3 window shifts into a
    # Pallas kernel (shifted matmul-accumulate on a VMEM-resident tile) to
    # avoid the ~kh*kw im2col HBM blow-up; at 32x32 the matmul dominates.
    B = x.shape[0]
    cols, Ho, Wo = _im2col(x, kh, kw, stride, padding, pad_value)
    out = pallas_linear(cols.reshape(B * Ho * Wo, -1), w_prep, b_prep,
                        act=act, n_real=n_out)
    return out.reshape(B, Ho, Wo, n_out).transpose(0, 3, 1, 2)


def roi_pool(feat, boxes, out_size, spatial_scale):
    """Nearest-neighbor ROI pooling via one-hot selection matmuls (no gather).

    feat [B,C,Hf,Wf], boxes [B,N,4] -> [B,N,C,S,S]."""
    # TODO(synk): a Pallas DMA-gather / dynamic-slice ROI kernel would avoid the
    # one-hot einsums entirely; kept as XLA matmuls (gather-free) for now.
    B, C, Hf, Wf = feat.shape
    grid = (jnp.arange(out_size, dtype=jnp.float32) + 0.5) / out_size
    x1, y1, x2, y2 = [boxes[..., i] * spatial_scale for i in range(4)]
    ys = y1[..., None] + (y2 - y1)[..., None] * grid
    xs = x1[..., None] + (x2 - x1)[..., None] * grid
    yi = jnp.clip(jnp.floor(ys).astype(jnp.int32), 0, Hf - 1)
    xi = jnp.clip(jnp.floor(xs).astype(jnp.int32), 0, Wf - 1)
    oh_y = jax.nn.one_hot(yi, Hf, dtype=feat.dtype)          # [B, N, S, Hf]
    oh_x = jax.nn.one_hot(xi, Wf, dtype=feat.dtype)          # [B, N, S, Wf]
    tmp = jnp.einsum("bnih,bchw->bnciw", oh_y, feat)         # [B, N, C, S, Wf]
    return jnp.einsum("bnjw,bnciw->bncij", oh_x, tmp)        # [B, N, C, S, S]


# ---------------------------------------------------------------------------
# Track_Model pieces
# ---------------------------------------------------------------------------
def _fold_norm_into_conv1(w, b):
    # (x - mean)/std folded into conv1.  Exact (including borders) because the
    # raw image is padded with the per-channel mean, which normalizes to 0.
    w_f = w * (1.0 / IMAGENET_STD)[None, :, None, None]
    b_f = b - jnp.einsum("oihw,i->o", w_f, IMAGENET_MEAN)
    return w_f, b_f


def prepare_params(params, cfg):
    """One-time weight prep (outside the jitted forward): fold normalization
    into conv1, reshape/transpose conv weights, concat the three RCNN heads,
    split cf_w1 into roi/template halves, pad to 128 lanes, cast to bf16."""
    C = cfg["head_nfeat"]
    k = cfg["roip_size"]
    D = C * k * k

    def prep_w(w):    # [K, N] -> [K, rup(N,128)] bf16 (K already lane-aligned)
        kk, n = w.shape
        return jnp.pad(w, ((0, 0), (0, _rup(n, LANE) - n))).astype(MATMUL_DTYPE)

    def prep_wk(w):   # [K, N] -> [rup(K,128), rup(N,128)] bf16 (conv weights)
        kk, n = w.shape
        return jnp.pad(w, ((0, _rup(kk, LANE) - kk),
                           (0, _rup(n, LANE) - n))).astype(MATMUL_DTYPE)

    def prep_b(b):
        n = b.shape[0]
        return jnp.pad(b, (0, _rup(n, LANE) - n)).astype(jnp.float32)[None, :]

    w1f, b1f = _fold_norm_into_conv1(params["conv1_w"], params["conv1_b"])
    w_heads = jnp.concatenate([params["op_w"], params["bb_w"], params["br_w"]], axis=1)
    b_heads = jnp.concatenate([params["op_b"], params["bb_b"], params["br_b"]], axis=0)
    cf_w1 = params["cf_w1"]
    Hh = cf_w1.shape[1]
    cf_w2 = params["cf_w2"]
    cf_w2p = jnp.pad(cf_w2, ((0, _rup(Hh, LANE) - Hh),
                             (0, _rup(cf_w2.shape[1], LANE) - cf_w2.shape[1]))
                     ).astype(jnp.float32)   # f32: keep the tiny 2nd MLP matmul exact

    return dict(
        conv1_w=prep_wk(w1f.reshape(w1f.shape[0], -1).T),
        conv1_b=prep_b(b1f),
        conv1_nout=int(w1f.shape[0]),
        conv2_w=prep_wk(params["conv2_w"].reshape(C, -1).T),
        conv2_b=prep_b(params["conv2_b"]),
        conv2_nout=int(C),
        cf_w1a=prep_w(cf_w1[:D]),        # roi half of layer-1 weight
        cf_w1b=prep_w(cf_w1[D:]),        # template half of layer-1 weight
        cf_b1=prep_b(params["cf_b1"]),
        cf_w2=cf_w2p,
        cf_b2=prep_b(params["cf_b2"]),
        heads_w=prep_w(w_heads),         # objectness(1) | box(4) | refine(4)
        heads_b=prep_b(b_heads),
    )


def backbone(prep, img):
    # tiny resnet-style stem: two strided 3x3 convs, 32x32 -> 8x8 features.
    h = conv2d(img, prep["conv1_w"], prep["conv1_b"], prep["conv1_nout"],
               kh=3, kw=3, stride=2, padding=1, act="relu", pad_value=IMAGENET_MEAN)
    h = conv2d(h, prep["conv2_w"], prep["conv2_b"], prep["conv2_nout"],
               kh=3, kw=3, stride=2, padding=1, act="relu")
    return h


def get_feats_xfa(cfg, xf, img_size, xb):
    """Template (pos / neg) features from the exemplar features."""
    scale = xf.shape[-1] / img_size
    k = cfg["roip_size"]
    if cfg["head_negff"]:
        # TODO(synk): original selects negatives via jaccard IoU < thres against RPN
        # rois; replaced with deterministic corner crops (same shapes).
        _, nfeat = cfg["nft_param"]
        Himg = float(img_size)
        neg = jnp.array([[0.0, 0.0, Himg / 2, Himg / 2],
                         [Himg / 2, Himg / 2, Himg, Himg]], jnp.float32)[:nfeat]
        neg = jnp.broadcast_to(neg[None], (xf.shape[0], nfeat, 4))
        boxes = jnp.concatenate([xb[:, None, :], neg], axis=1)  # one roi_pool call
        pooled = roi_pool(xf, boxes, k, scale)                  # [B, 1+nfeat, C, k, k]
        tmpl, xfa_neg = pooled[:, 0], pooled[:, 1:]
    else:
        tmpl = roi_pool(xf, xb[:, None, :], k, scale)[:, 0]
        xfa_neg = None
    return tmpl, tmpl, xfa_neg


def rpn_forward(cfg, yf, tmpl, img_size):
    """Cross-correlation RPN: template vs. search features -> rois, scores, roi feats."""
    B, C, Hf, Wf = yf.shape
    k = cfg["roip_size"]
    Ho, Wo = Hf - k + 1, Wf - k + 1
    patches, _, _ = _im2col(yf, k, k, stride=1, padding=0)     # [B, Ho*Wo, C*k*k] f32
    tmpl_flat = tmpl.reshape(B, 1, C * k * k)
    scores_flat = pallas_corr(patches, tmpl_flat)              # [B, Ho*Wo] f32
    score_map = scores_flat.reshape(B, 1, Ho, Wo)

    topk = cfg["rpn_topk"]
    top_vals, top_idx = jax.lax.top_k(scores_flat, topk)       # [B, topk]
    stride_img = img_size // Wf
    iy = (top_idx // Wo).astype(jnp.float32)
    ix = (top_idx % Wo).astype(jnp.float32)
    bw = float(k * stride_img)
    x1 = ix * stride_img
    y1 = iy * stride_img
    rois = jnp.stack([x1, y1, x1 + bw, y1 + bw], axis=-1)      # [B, topk, 4]

    roi_feats = roi_pool(yf, rois, k, 1.0 / stride_img)        # [B, topk, C, k, k]
    out_rpn = (score_map, rois, top_vals)
    return rois, top_vals, roi_feats, out_rpn


def rcnn_forward(prep, cfg, feats, rois):
    xfa_pos, xfa_neg, roi_feats = feats
    B, N, C, k, _ = roi_feats.shape
    D = C * k * k
    rflat = roi_feats.reshape(B * N, D)

    tmpls = xfa_pos.reshape(B, 1, D)
    if xfa_neg is not None:
        tmpls = jnp.concatenate([tmpls, xfa_neg.reshape(B, -1, D)], axis=1)
    T = tmpls.shape[1]                                         # 1 + nfeat
    Tp = _rup(T, 8)
    tmpls = jnp.pad(tmpls, ((0, 0), (0, Tp - T), (0, 0))).reshape(B * Tp, D)

    heads2d, cls2d = pl.pallas_call(
        functools.partial(_rcnn_kernel, nb=B, n=N, tp=Tp, t_real=T),
        out_shape=(jax.ShapeDtypeStruct((B * N, LANE), jnp.float32),
                   jax.ShapeDtypeStruct((T * B * N, LANE), jnp.float32)),
        grid=(1,),
        in_specs=[
            pl.BlockSpec((B * N, D), lambda i: (0, 0)),
            pl.BlockSpec((B * Tp, D), lambda i: (0, 0)),
            pl.BlockSpec(prep["cf_w1a"].shape, lambda i: (0, 0)),
            pl.BlockSpec(prep["cf_w1b"].shape, lambda i: (0, 0)),
            pl.BlockSpec(prep["cf_b1"].shape, lambda i: (0, 0)),
            pl.BlockSpec(prep["cf_w2"].shape, lambda i: (0, 0)),
            pl.BlockSpec(prep["cf_b2"].shape, lambda i: (0, 0)),
            pl.BlockSpec(prep["heads_w"].shape, lambda i: (0, 0)),
            pl.BlockSpec(prep["heads_b"].shape, lambda i: (0, 0)),
        ],
        out_specs=(pl.BlockSpec((B * N, LANE), lambda i: (0, 0)),
                   pl.BlockSpec((T * B * N, LANE), lambda i: (0, 0))),
        compiler_params=pltpu.CompilerParams(dimension_semantics=("arbitrary",)),
    )(rflat, tmpls, prep["cf_w1a"], prep["cf_w1b"], prep["cf_b1"],
      prep["cf_w2"], prep["cf_b2"], prep["heads_w"], prep["heads_b"])

    out_cf = cls2d[:, :2].reshape(T, B, N, 2).transpose(1, 2, 0, 3)  # [B, N, T, 2]
    heads = heads2d[:, :9].reshape(B, N, 9)
    out_op = heads[..., 0:1]
    out_bb = rois + heads[..., 1:5]
    out_br = heads[..., 5:9]
    return out_cf, out_op, out_bb, out_br


def track_forward(prep, cfg, x, y, xb, xfa=None):
    """Track_Model.forward: returns (out_rpn, out_rcnn)."""
    if xfa is None:
        # exemplar + search frames share one batched backbone pass.
        B = x.shape[0]
        feats = backbone(prep, jnp.concatenate([x, y], axis=0))
        xf, yf = feats[:B], feats[B:]
        xfa_in = get_feats_xfa(cfg, xf, x.shape[-1], xb)
    else:
        xfa_in = xfa
        yf = backbone(prep, y)
    rois, scores, roi_feats, out_rpn = rpn_forward(cfg, yf, xfa_in[0], img_size=y.shape[-1])
    rcnn_feats = (xfa_in[1], xfa_in[2], roi_feats)
    out_rcnn = rcnn_forward(prep, cfg, rcnn_feats, rois)
    return out_rpn, out_rcnn


# ---------------------------------------------------------------------------
# deterministic parameter init
# ---------------------------------------------------------------------------
def init_params(key, cfg):
    C = cfg["head_nfeat"]
    k = cfg["roip_size"]
    D = C * k * k
    ks = jax.random.split(key, 8)

    def w(kk, shape, scale=0.05):
        return scale * jax.random.normal(kk, shape, jnp.float32)

    return dict(
        conv1_w=w(ks[0], (16, 3, 3, 3)),
        conv1_b=jnp.zeros((16,), jnp.float32),
        conv2_w=w(ks[1], (C, 16, 3, 3)),
        conv2_b=jnp.zeros((C,), jnp.float32),
        cf_w1=w(ks[2], (2 * D, 64)),
        cf_b1=jnp.zeros((64,), jnp.float32),
        cf_w2=w(ks[3], (64, 2)),
        cf_b2=jnp.zeros((2,), jnp.float32),
        op_w=w(ks[4], (D, 1)),
        op_b=jnp.zeros((1,), jnp.float32),
        bb_w=w(ks[5], (D, 4)),
        bb_b=jnp.zeros((4,), jnp.float32),
        br_w=w(ks[6], (D, 4)),
        br_b=jnp.zeros((4,), jnp.float32),
    )


if __name__ == "__main__":
    cfg = dict(
        head_nfeat=32,
        head_negff=True,
        head_oproi=True,
        head_ctxff=False,
        roip_size=4,
        nft_param=(0.3, 2),
        rpn_topk=8,
    )

    kx, ky, kp = jax.random.split(jax.random.PRNGKey(0), 3)
    x = jax.random.uniform(kx, (2, 3, 32, 32), jnp.float32)   # exemplar frame
    y = jax.random.uniform(ky, (2, 3, 32, 32), jnp.float32)   # search frame
    xb = jnp.array([[8.0, 8.0, 24.0, 24.0], [4.0, 6.0, 20.0, 22.0]], jnp.float32)

    params = init_params(kp, cfg)
    prep = prepare_params(params, cfg)        # one-time weight prep (outside jit)

    fwd = jax.jit(lambda x_, y_, xb_: track_forward(prep, cfg, x_, y_, xb_))
    out_rpn, out_rcnn = fwd(x, y, xb)
    jax.tree_util.tree_map(jax.block_until_ready, (out_rpn, out_rcnn))

    score_map, rois, scores = out_rpn
    out_cf, out_op, out_bb, out_br = out_rcnn
    assert score_map.shape == (2, 1, 5, 5)
    assert rois.shape == (2, cfg["rpn_topk"], 4)
    assert out_cf.shape == (2, cfg["rpn_topk"], 1 + cfg["nft_param"][1], 2)
    assert out_op.shape == (2, cfg["rpn_topk"], 1)
    assert out_bb.shape == (2, cfg["rpn_topk"], 4)
    assert out_br.shape == (2, cfg["rpn_topk"], 4)
    print("KERNEL_OK")
</pallas_src>

<mosaic_0001>
module attributes {stable_mosaic.version = 11 : i64} {
  func.func @_linear_kernel(%arg0: i32, %arg1: memref<1024x27xf32, #tpu.memory_space<vmem>>, %arg2: memref<128x128xbf16, #tpu.memory_space<vmem>>, %arg3: memref<1x128xf32, #tpu.memory_space<vmem>>, %arg4: memref<1024x128xf32, #tpu.memory_space<vmem>>, %arg5: memref<1024x128xf32, #tpu.memory_space<vmem>>) attributes {dimension_semantics = [#tpu.dimension_semantics<parallel>], iteration_bounds = array<i64: 1>, scalar_prefetch = 0 : i64, scratch_operands = 1 : i64, tpu.core_type = #tpu.core_type<tc>, window_params = [{transform_indices = @transform_0, window_bounds = array<i64: 1024, 27>}, {pipeline_mode = #tpu.pipeline_mode<synchronous>, transform_indices = @transform_1, window_bounds = array<i64: 128, 128>}, {pipeline_mode = #tpu.pipeline_mode<synchronous>, transform_indices = @transform_2, window_bounds = array<i64: 1, 128>}, {transform_indices = @transform_3, window_bounds = array<i64: 1024, 128>}]} {
    %cst = arith.constant 0.000000e+00 : f32
    %0 = vector.broadcast %cst : f32 to vector<1024x128xf32>
    %c0 = arith.constant 0 : index
    %c0_0 = arith.constant 0 : index
    %1 = vector.load %arg5[%c0, %c0_0] : memref<1024x128xf32, #tpu.memory_space<vmem>>, vector<1024x128xf32>
    tpu.vector_store %arg5[%c0, %c0_0], %0 {strides = array<i32>} : memref<1024x128xf32, #tpu.memory_space<vmem>>, vector<1024x128xf32>,
    %c0_1 = arith.constant 0 : index
    %c0_2 = arith.constant 0 : index
    %2 = vector.load %arg1[%c0_1, %c0_2] : memref<1024x27xf32, #tpu.memory_space<vmem>>, vector<1024x27xf32>
    %c0_3 = arith.constant 0 : index
    %c0_4 = arith.constant 0 : index
    %3 = vector.load %arg5[%c0_3, %c0_4] : memref<1024x128xf32, #tpu.memory_space<vmem>>, vector<1024x27xf32>
    tpu.vector_store %arg5[%c0_3, %c0_4], %2 {strides = array<i32>} : memref<1024x128xf32, #tpu.memory_space<vmem>>, vector<1024x27xf32>,
    %c0_5 = arith.constant 0 : index
    %c0_6 = arith.constant 0 : index
    %4 = vector.load %arg5[%c0_5, %c0_6] : memref<1024x128xf32, #tpu.memory_space<vmem>>, vector<1024x128xf32>
    %5 = arith.truncf %4 : vector<1024x128xf32> to vector<1024x128xbf16>
    %c0_7 = arith.constant 0 : index
    %c0_8 = arith.constant 0 : index
    %6 = vector.load %arg2[%c0_7, %c0_8] : memref<128x128xbf16, #tpu.memory_space<vmem>>, vector<128x128xbf16>
    %cst_9 = arith.constant dense<0.000000e+00> : vector<1024x128xf32>
    %7 = tpu.matmul %5, %6, %cst_9 {dimension_numbers = #tpu.dot_dimension_numbers<[1], [0], [0], [1], [0, 0, 1, 1], [], []>} : vector<1024x128xbf16>, vector<128x128xbf16>, vector<1024x128xf32> -> vector<1024x128xf32>
    %c0_10 = arith.constant 0 : index
    %c0_11 = arith.constant 0 : index
    %8 = vector.load %arg3[%c0_10, %c0_11] : memref<1x128xf32, #tpu.memory_space<vmem>>, vector<1x128xf32>
    %9 = vector.broadcast %8 : vector<1x128xf32> to vector<1024x128xf32>
    %10 = arith.addf %7, %9 : vector<1024x128xf32>
    %cst_12 = arith.constant 0.000000e+00 : f32
    %11 = vector.broadcast %cst_12 : f32 to vector<1024x128xf32>
    %12 = arith.maximumf %10, %11 : vector<1024x128xf32>
    %c0_13 = arith.constant 0 : index
    %c0_14 = arith.constant 0 : index
    %13 = vector.load %arg4[%c0_13, %c0_14] : memref<1024x128xf32, #tpu.memory_space<vmem>>, vector<1024x128xf32>
    tpu.vector_store %arg4[%c0_13, %c0_14], %12 {strides = array<i32>} : memref<1024x128xf32, #tpu.memory_space<vmem>>, vector<1024x128xf32>,
    return
  }
  func.func @transform_0(%arg0: i32) -> (i32, i32) {
    %c0_i32 = arith.constant 0 : i32
    %c0_i32_0 = arith.constant 0 : i32
    return %arg0, %c0_i32 : i32, i32
  }
  func.func @transform_1(%arg0: i32) -> (i32, i32) {
    %c0_i32 = arith.constant 0 : i32
    %c0_i32_0 = arith.constant 0 : i32
    %c0_i32_1 = arith.constant 0 : i32
    return %c0_i32, %c0_i32_0 : i32, i32
  }
  func.func @transform_2(%arg0: i32) -> (i32, i32) {
    %c0_i32 = arith.constant 0 : i32
    %c0_i32_0 = arith.constant 0 : i32
    %c0_i32_1 = arith.constant 0 : i32
    return %c0_i32, %c0_i32_0 : i32, i32
  }
  func.func @transform_3(%arg0: i32) -> (i32, i32) {
    %c0_i32 = arith.constant 0 : i32
    %c0_i32_0 = arith.constant 0 : i32
    return %arg0, %c0_i32 : i32, i32
  }
}

module attributes {stable_mosaic.version = 11 : i64} {
  func.func @_linear_kernel(%arg0: i32, %arg1: memref<256x144xf32, #tpu.memory_space<vmem>>, %arg2: memref<256x128xbf16, #tpu.memory_space<vmem>>, %arg3: memref<1x128xf32, #tpu.memory_space<vmem>>, %arg4: memref<256x128xf32, #tpu.memory_space<vmem>>, %arg5: memref<256x256xf32, #tpu.memory_space<vmem>>) attributes {dimension_semantics = [#tpu.dimension_semantics<parallel>], iteration_bounds = array<i64: 1>, scalar_prefetch = 0 : i64, scratch_operands = 1 : i64, tpu.core_type = #tpu.core_type<tc>, window_params = [{transform_indices = @transform_0, window_bounds = array<i64: 256, 144>}, {pipeline_mode = #tpu.pipeline_mode<synchronous>, transform_indices = @transform_1, window_bounds = array<i64: 256, 128>}, {pipeline_mode = #tpu.pipeline_mode<synchronous>, transform_indices = @transform_2, window_bounds = array<i64: 1, 128>}, {transform_indices = @transform_3, window_bounds = array<i64: 256, 128>}]} {
    %cst = arith.constant 0.000000e+00 : f32
    %0 = vector.broadcast %cst : f32 to vector<256x256xf32>
    %c0 = arith.constant 0 : index
    %c0_0 = arith.constant 0 : index
    %1 = vector.load %arg5[%c0, %c0_0] : memref<256x256xf32, #tpu.memory_space<vmem>>, vector<256x256xf32>
    tpu.vector_store %arg5[%c0, %c0_0], %0 {strides = array<i32>} : memref<256x256xf32, #tpu.memory_space<vmem>>, vector<256x256xf32>,
    %c0_1 = arith.constant 0 : index
    %c0_2 = arith.constant 0 : index
    %2 = vector.load %arg1[%c0_1, %c0_2] : memref<256x144xf32, #tpu.memory_space<vmem>>, vector<256x144xf32>
    %c0_3 = arith.constant 0 : index
    %c0_4 = arith.constant 0 : index
    %3 = vector.load %arg5[%c0_3, %c0_4] : memref<256x256xf32, #tpu.memory_space<vmem>>, vector<256x144xf32>
    tpu.vector_store %arg5[%c0_3, %c0_4], %2 {strides = array<i32>} : memref<256x256xf32, #tpu.memory_space<vmem>>, vector<256x144xf32>,
    %c0_5 = arith.constant 0 : index
    %c0_6 = arith.constant 0 : index
    %4 = vector.load %arg5[%c0_5, %c0_6] : memref<256x256xf32, #tpu.memory_space<vmem>>, vector<256x256xf32>
    %5 = arith.truncf %4 : vector<256x256xf32> to vector<256x256xbf16>
    %c0_7 = arith.constant 0 : index
    %c0_8 = arith.constant 0 : index
    %6 = vector.load %arg2[%c0_7, %c0_8] : memref<256x128xbf16, #tpu.memory_space<vmem>>, vector<256x128xbf16>
    %cst_9 = arith.constant dense<0.000000e+00> : vector<256x128xf32>
    %7 = tpu.matmul %5, %6, %cst_9 {dimension_numbers = #tpu.dot_dimension_numbers<[1], [0], [0], [1], [0, 0, 1, 1], [], []>} : vector<256x256xbf16>, vector<256x128xbf16>, vector<256x128xf32> -> vector<256x128xf32>
    %c0_10 = arith.constant 0 : index
    %c0_11 = arith.constant 0 : index
    %8 = vector.load %arg3[%c0_10, %c0_11] : memref<1x128xf32, #tpu.memory_space<vmem>>, vector<1x128xf32>
    %9 = vector.broadcast %8 : vector<1x128xf32> to vector<256x128xf32>
    %10 = arith.addf %7, %9 : vector<256x128xf32>
    %cst_12 = arith.constant 0.000000e+00 : f32
    %11 = vector.broadcast %cst_12 : f32 to vector<256x128xf32>
    %12 = arith.maximumf %10, %11 : vector<256x128xf32>
    %c0_13 = arith.constant 0 : index
    %c0_14 = arith.constant 0 : index
    %13 = vector.load %arg4[%c0_13, %c0_14] : memref<256x128xf32, #tpu.memory_space<vmem>>, vector<256x128xf32>
    tpu.vector_store %arg4[%c0_13, %c0_14], %12 {strides = array<i32>} : memref<256x128xf32, #tpu.memory_space<vmem>>, vector<256x128xf32>,
    return
  }
  func.func @transform_0(%arg0: i32) -> (i32, i32) {
    %c0_i32 = arith.constant 0 : i32
    %c0_i32_0 = arith.constant 0 : i32
    return %arg0, %c0_i32 : i32, i32
  }
  func.func @transform_1(%arg0: i32) -> (i32, i32) {
    %c0_i32 = arith.constant 0 : i32
    %c0_i32_0 = arith.constant 0 : i32
    %c0_i32_1 = arith.constant 0 : i32
    return %c0_i32, %c0_i32_0 : i32, i32
  }
  func.func @transform_2(%arg0: i32) -> (i32, i32) {
    %c0_i32 = arith.constant 0 : i32
    %c0_i32_0 = arith.constant 0 : i32
    %c0_i32_1 = arith.constant 0 : i32
    return %c0_i32, %c0_i32_0 : i32, i32
  }
  func.func @transform_3(%arg0: i32) -> (i32, i32) {
    %c0_i32 = arith.constant 0 : i32
    %c0_i32_0 = arith.constant 0 : i32
    return %arg0, %c0_i32 : i32, i32
  }
}

module attributes {stable_mosaic.version = 11 : i64} {
  func.func @_corr_kernel(%arg0: i32, %arg1: memref<2x25x512xf32, #tpu.memory_space<vmem>>, %arg2: memref<2x1x512xf32, #tpu.memory_space<vmem>>, %arg3: memref<2x25xf32, #tpu.memory_space<vmem>>) attributes {dimension_semantics = [#tpu.dimension_semantics<arbitrary>], iteration_bounds = array<i64: 1>, scalar_prefetch = 0 : i64, scratch_operands = 0 : i64, tpu.core_type = #tpu.core_type<tc>, window_params = [{pipeline_mode = #tpu.pipeline_mode<synchronous>, transform_indices = @transform_0, window_bounds = array<i64: 2, 25, 512>}, {pipeline_mode = #tpu.pipeline_mode<synchronous>, transform_indices = @transform_1, window_bounds = array<i64: 2, 1, 512>}, {pipeline_mode = #tpu.pipeline_mode<synchronous>, transform_indices = @transform_2, window_bounds = array<i64: 2, 25>}]} {
    %c0 = arith.constant 0 : index
    %c0_0 = arith.constant 0 : index
    %c0_1 = arith.constant 0 : index
    %0 = vector.load %arg1[%c0, %c0_0, %c0_1] : memref<2x25x512xf32, #tpu.memory_space<vmem>>, vector<2x25x512xf32>
    %c0_2 = arith.constant 0 : index
    %c0_3 = arith.constant 0 : index
    %c0_4 = arith.constant 0 : index
    %1 = vector.load %arg2[%c0_2, %c0_3, %c0_4] : memref<2x1x512xf32, #tpu.memory_space<vmem>>, vector<2x1x512xf32>
    %2 = vector.broadcast %1 : vector<2x1x512xf32> to vector<2x25x512xf32>
    %3 = arith.mulf %0, %2 : vector<2x25x512xf32>
    %cst = arith.constant dense<0.000000e+00> : vector<2x25xf32>
    %4 = vector.multi_reduction <add>, %3, %cst [2] : vector<2x25x512xf32> to vector<2x25xf32>
    %c0_5 = arith.constant 0 : index
    %c0_6 = arith.constant 0 : index
    %5 = vector.load %arg3[%c0_5, %c0_6] : memref<2x25xf32, #tpu.memory_space<vmem>>, vector<2x25xf32>
    tpu.vector_store %arg3[%c0_5, %c0_6], %4 {strides = array<i32>} : memref<2x25xf32, #tpu.memory_space<vmem>>, vector<2x25xf32>,
    return
  }
  func.func @transform_0(%arg0: i32) -> (i32, i32, i32) {
    %c0_i32 = arith.constant 0 : i32
    %c0_i32_0 = arith.constant 0 : i32
    %c0_i32_1 = arith.constant 0 : i32
    %c0_i32_2 = arith.constant 0 : i32
    return %c0_i32, %c0_i32_0, %c0_i32_1 : i32, i32, i32
  }
  func.func @transform_1(%arg0: i32) -> (i32, i32, i32) {
    %c0_i32 = arith.constant 0 : i32
    %c0_i32_0 = arith.constant 0 : i32
    %c0_i32_1 = arith.constant 0 : i32
    %c0_i32_2 = arith.constant 0 : i32
    return %c0_i32, %c0_i32_0, %c0_i32_1 : i32, i32, i32
  }
  func.func @transform_2(%arg0: i32) -> (i32, i32) {
    %c0_i32 = arith.constant 0 : i32
    %c0_i32_0 = arith.constant 0 : i32
    %c0_i32_1 = arith.constant 0 : i32
    return %c0_i32, %c0_i32_0 : i32, i32
  }
}

module attributes {stable_mosaic.version = 11 : i64} {
  func.func @_rcnn_kernel(%arg0: i32, %arg1: memref<16x512xf32, #tpu.memory_space<vmem>>, %arg2: memref<16x512xf32, #tpu.memory_space<vmem>>, %arg3: memref<512x128xbf16, #tpu.memory_space<vmem>>, %arg4: memref<512x128xbf16, #tpu.memory_space<vmem>>, %arg5: memref<1x128xf32, #tpu.memory_space<vmem>>, %arg6: memref<128x128xf32, #tpu.memory_space<vmem>>, %arg7: memref<1x128xf32, #tpu.memory_space<vmem>>, %arg8: memref<512x128xbf16, #tpu.memory_space<vmem>>, %arg9: memref<1x128xf32, #tpu.memory_space<vmem>>, %arg10: memref<16x128xf32, #tpu.memory_space<vmem>>, %arg11: memref<48x128xf32, #tpu.memory_space<vmem>>) attributes {dimension_semantics = [#tpu.dimension_semantics<arbitrary>], iteration_bounds = array<i64: 1>, scalar_prefetch = 0 : i64, scratch_operands = 0 : i64, tpu.core_type = #tpu.core_type<tc>, window_params = [{pipeline_mode = #tpu.pipeline_mode<synchronous>, transform_indices = @transform_0, window_bounds = array<i64: 16, 512>}, {pipeline_mode = #tpu.pipeline_mode<synchronous>, transform_indices = @transform_1, window_bounds = array<i64: 16, 512>}, {pipeline_mode = #tpu.pipeline_mode<synchronous>, transform_indices = @transform_2, window_bounds = array<i64: 512, 128>}, {pipeline_mode = #tpu.pipeline_mode<synchronous>, transform_indices = @transform_3, window_bounds = array<i64: 512, 128>}, {pipeline_mode = #tpu.pipeline_mode<synchronous>, transform_indices = @transform_4, window_bounds = array<i64: 1, 128>}, {pipeline_mode = #tpu.pipeline_mode<synchronous>, transform_indices = @transform_5, window_bounds = array<i64: 128, 128>}, {pipeline_mode = #tpu.pipeline_mode<synchronous>, transform_indices = @transform_6, window_bounds = array<i64: 1, 128>}, {pipeline_mode = #tpu.pipeline_mode<synchronous>, transform_indices = @transform_7, window_bounds = array<i64: 512, 128>}, {pipeline_mode = #tpu.pipeline_mode<synchronous>, transform_indices = @transform_8, window_bounds = array<i64: 1, 128>}, {pipeline_mode = #tpu.pipeline_mode<synchronous>, transform_indices = @transform_9, window_bounds = array<i64: 16, 128>}, {pipeline_mode = #tpu.pipeline_mode<synchronous>, transform_indices = @transform_10, window_bounds = array<i64: 48, 128>}]} {
    %c0 = arith.constant 0 : index
    %c0_0 = arith.constant 0 : index
    %0 = vector.load %arg1[%c0, %c0_0] : memref<16x512xf32, #tpu.memory_space<vmem>>, vector<16x512xf32>
    %1 = arith.truncf %0 : vector<16x512xf32> to vector<16x512xbf16>
    %c0_1 = arith.constant 0 : index
    %c0_2 = arith.constant 0 : index
    %2 = vector.load %arg2[%c0_1, %c0_2] : memref<16x512xf32, #tpu.memory_space<vmem>>, vector<16x512xf32>
    %3 = arith.truncf %2 : vector<16x512xf32> to vector<16x512xbf16>
    %c0_3 = arith.constant 0 : index
    %c0_4 = arith.constant 0 : index
    %4 = vector.load %arg8[%c0_3, %c0_4] : memref<512x128xbf16, #tpu.memory_space<vmem>>, vector<512x128xbf16>
    %cst = arith.constant dense<0.000000e+00> : vector<16x128xf32>
    %5 = tpu.matmul %1, %4, %cst {dimension_numbers = #tpu.dot_dimension_numbers<[1], [0], [0], [1], [0, 0, 1, 1], [], []>} : vector<16x512xbf16>, vector<512x128xbf16>, vector<16x128xf32> -> vector<16x128xf32>
    %c0_5 = arith.constant 0 : index
    %c0_6 = arith.constant 0 : index
    %6 = vector.load %arg9[%c0_5, %c0_6] : memref<1x128xf32, #tpu.memory_space<vmem>>, vector<1x128xf32>
    %7 = vector.broadcast %6 : vector<1x128xf32> to vector<16x128xf32>
    %8 = arith.addf %5, %7 : vector<16x128xf32>
    %c0_7 = arith.constant 0 : index
    %c0_8 = arith.constant 0 : index
    %9 = vector.load %arg10[%c0_7, %c0_8] : memref<16x128xf32, #tpu.memory_space<vmem>>, vector<16x128xf32>
    tpu.vector_store %arg10[%c0_7, %c0_8], %8 {strides = array<i32>} : memref<16x128xf32, #tpu.memory_space<vmem>>, vector<16x128xf32>,
    %c0_9 = arith.constant 0 : index
    %c0_10 = arith.constant 0 : index
    %10 = vector.load %arg3[%c0_9, %c0_10] : memref<512x128xbf16, #tpu.memory_space<vmem>>, vector<512x128xbf16>
    %cst_11 = arith.constant dense<0.000000e+00> : vector<16x128xf32>
    %11 = tpu.matmul %1, %10, %cst_11 {dimension_numbers = #tpu.dot_dimension_numbers<[1], [0], [0], [1], [0, 0, 1, 1], [], []>} : vector<16x512xbf16>, vector<512x128xbf16>, vector<16x128xf32> -> vector<16x128xf32>
    %c0_12 = arith.constant 0 : index
    %c0_13 = arith.constant 0 : index
    %12 = vector.load %arg4[%c0_12, %c0_13] : memref<512x128xbf16, #tpu.memory_space<vmem>>, vector<512x128xbf16>
    %cst_14 = arith.constant dense<0.000000e+00> : vector<16x128xf32>
    %13 = tpu.matmul %3, %12, %cst_14 {dimension_numbers = #tpu.dot_dimension_numbers<[1], [0], [0], [1], [0, 0, 1, 1], [], []>} : vector<16x512xbf16>, vector<512x128xbf16>, vector<16x128xf32> -> vector<16x128xf32>
    %c0_15 = arith.constant 0 : index
    %c0_16 = arith.constant 0 : index
    %14 = vector.load %arg5[%c0_15, %c0_16] : memref<1x128xf32, #tpu.memory_space<vmem>>, vector<1x128xf32>
    %15 = vector.extract_strided_slice %11 {offsets = [0, 0], sizes = [8, 128], strides = [1, 1]} : vector<16x128xf32> to vector<8x128xf32>
    %16 = vector.extract_strided_slice %13 {offsets = [0, 0], sizes = [1, 128], strides = [1, 1]} : vector<16x128xf32> to vector<1x128xf32>
    %17 = vector.broadcast %16 : vector<1x128xf32> to vector<8x128xf32>
    %18 = arith.addf %15, %17 : vector<8x128xf32>
    %19 = vector.extract_strided_slice %11 {offsets = [8, 0], sizes = [8, 128], strides = [1, 1]} : vector<16x128xf32> to vector<8x128xf32>
    %20 = vector.extract_strided_slice %13 {offsets = [8, 0], sizes = [1, 128], strides = [1, 1]} : vector<16x128xf32> to vector<1x128xf32>
    %21 = vector.broadcast %20 : vector<1x128xf32> to vector<8x128xf32>
    %22 = arith.addf %19, %21 : vector<8x128xf32>
    %23 = tpu.concatenate %18, %22 in 0 : vector<8x128xf32>, vector<8x128xf32> -> vector<16x128xf32>
    %24 = vector.broadcast %14 : vector<1x128xf32> to vector<16x128xf32>
    %25 = arith.addf %23, %24 : vector<16x128xf32>
    %cst_17 = arith.constant 0.000000e+00 : f32
    %26 = vector.broadcast %cst_17 : f32 to vector<16x128xf32>
    %27 = arith.maximumf %25, %26 : vector<16x128xf32>
    %c0_18 = arith.constant 0 : index
    %c0_19 = arith.constant 0 : index
    %28 = vector.load %arg6[%c0_18, %c0_19] : memref<128x128xf32, #tpu.memory_space<vmem>>, vector<128x128xf32>
    %cst_20 = arith.constant dense<0.000000e+00> : vector<16x128xf32>
    %29 = tpu.matmul %27, %28, %cst_20 {dimension_numbers = #tpu.dot_dimension_numbers<[1], [0], [0], [1], [0, 0, 1, 1], [], []>} : vector<16x128xf32>, vector<128x128xf32>, vector<16x128xf32> -> vector<16x128xf32>
    %c0_21 = arith.constant 0 : index
    %c0_22 = arith.constant 0 : index
    %30 = vector.load %arg7[%c0_21, %c0_22] : memref<1x128xf32, #tpu.memory_space<vmem>>, vector<1x128xf32>
    %31 = vector.broadcast %30 : vector<1x128xf32> to vector<16x128xf32>
    %32 = arith.addf %29, %31 : vector<16x128xf32>
    %c0_23 = arith.constant 0 : index
    %c0_24 = arith.constant 0 : index
    %33 = vector.load %arg11[%c0_23, %c0_24] : memref<48x128xf32, #tpu.memory_space<vmem>>, vector<16x128xf32>
    tpu.vector_store %arg11[%c0_23, %c0_24], %32 {strides = array<i32>} : memref<48x128xf32, #tpu.memory_space<vmem>>, vector<16x128xf32>,
    %34 = vector.extract_strided_slice %11 {offsets = [0, 0], sizes = [8, 128], strides = [1, 1]} : vector<16x128xf32> to vector<8x128xf32>
    %35 = vector.extract_strided_slice %13 {offsets = [1, 0], sizes = [1, 128], strides = [1, 1]} : vector<16x128xf32> to vector<1x128xf32>
    %36 = vector.broadcast %35 : vector<1x128xf32> to vector<8x128xf32>
    %37 = arith.addf %34, %36 : vector<8x128xf32>
    %38 = vector.extract_strided_slice %11 {offsets = [8, 0], sizes = [8, 128], strides = [1, 1]} : vector<16x128xf32> to vector<8x128xf32>
    %39 = vector.extract_strided_slice %13 {offsets = [9, 0], sizes = [1, 128], strides = [1, 1]} : vector<16x128xf32> to vector<1x128xf32>
    %40 = vector.broadcast %39 : vector<1x128xf32> to vector<8x128xf32>
    %41 = arith.addf %38, %40 : vector<8x128xf32>
    %42 = tpu.concatenate %37, %41 in 0 : vector<8x128xf32>, vector<8x128xf32> -> vector<16x128xf32>
    %43 = vector.broadcast %14 : vector<1x128xf32> to vector<16x128xf32>
    %44 = arith.addf %42, %43 : vector<16x128xf32>
    %cst_25 = arith.constant 0.000000e+00 : f32
    %45 = vector.broadcast %cst_25 : f32 to vector<16x128xf32>
    %46 = arith.maximumf %44, %45 : vector<16x128xf32>
    %c0_26 = arith.constant 0 : index
    %c0_27 = arith.constant 0 : index
    %47 = vector.load %arg6[%c0_26, %c0_27] : memref<128x128xf32, #tpu.memory_space<vmem>>, vector<128x128xf32>
    %cst_28 = arith.constant dense<0.000000e+00> : vector<16x128xf32>
    %48 = tpu.matmul %46, %47, %cst_28 {dimension_numbers = #tpu.dot_dimension_numbers<[1], [0], [0], [1], [0, 0, 1, 1], [], []>} : vector<16x128xf32>, vector<128x128xf32>, vector<16x128xf32> -> vector<16x128xf32>
    %c0_29 = arith.constant 0 : index
    %c0_30 = arith.constant 0 : index
    %49 = vector.load %arg7[%c0_29, %c0_30] : memref<1x128xf32, #tpu.memory_space<vmem>>, vector<1x128xf32>
    %50 = vector.broadcast %49 : vector<1x128xf32> to vector<16x128xf32>
    %51 = arith.addf %48, %50 : vector<16x128xf32>
    %c16 = arith.constant 16 : index
    %c0_31 = arith.constant 0 : index
    %52 = vector.load %arg11[%c16, %c0_31] : memref<48x128xf32, #tpu.memory_space<vmem>>, vector<16x128xf32>
    tpu.vector_store %arg11[%c16, %c0_31], %51 {strides = array<i32>} : memref<48x128xf32, #tpu.memory_space<vmem>>, vector<16x128xf32>,
    %53 = vector.extract_strided_slice %11 {offsets = [0, 0], sizes = [8, 128], strides = [1, 1]} : vector<16x128xf32> to vector<8x128xf32>
    %54 = vector.extract_strided_slice %13 {offsets = [2, 0], sizes = [1, 128], strides = [1, 1]} : vector<16x128xf32> to vector<1x128xf32>
    %55 = vector.broadcast %54 : vector<1x128xf32> to vector<8x128xf32>
    %56 = arith.addf %53, %55 : vector<8x128xf32>
    %57 = vector.extract_strided_slice %11 {offsets = [8, 0], sizes = [8, 128], strides = [1, 1]} : vector<16x128xf32> to vector<8x128xf32>
    %58 = vector.extract_strided_slice %13 {offsets = [10, 0], sizes = [1, 128], strides = [1, 1]} : vector<16x128xf32> to vector<1x128xf32>
    %59 = vector.broadcast %58 : vector<1x128xf32> to vector<8x128xf32>
    %60 = arith.addf %57, %59 : vector<8x128xf32>
    %61 = tpu.concatenate %56, %60 in 0 : vector<8x128xf32>, vector<8x128xf32> -> vector<16x128xf32>
    %62 = vector.broadcast %14 : vector<1x128xf32> to vector<16x128xf32>
    %63 = arith.addf %61, %62 : vector<16x128xf32>
    %cst_32 = arith.constant 0.000000e+00 : f32
    %64 = vector.broadcast %cst_32 : f32 to vector<16x128xf32>
    %65 = arith.maximumf %63, %64 : vector<16x128xf32>
    %c0_33 = arith.constant 0 : index
    %c0_34 = arith.constant 0 : index
    %66 = vector.load %arg6[%c0_33, %c0_34] : memref<128x128xf32, #tpu.memory_space<vmem>>, vector<128x128xf32>
    %cst_35 = arith.constant dense<0.000000e+00> : vector<16x128xf32>
    %67 = tpu.matmul %65, %66, %cst_35 {dimension_numbers = #tpu.dot_dimension_numbers<[1], [0], [0], [1], [0, 0, 1, 1], [], []>} : vector<16x128xf32>, vector<128x128xf32>, vector<16x128xf32> -> vector<16x128xf32>
    %c0_36 = arith.constant 0 : index
    %c0_37 = arith.constant 0 : index
    %68 = vector.load %arg7[%c0_36, %c0_37] : memref<1x128xf32, #tpu.memory_space<vmem>>, vector<1x128xf32>
    %69 = vector.broadcast %68 : vector<1x128xf32> to vector<16x128xf32>
    %70 = arith.addf %67, %69 : vector<16x128xf32>
    %c32 = arith.constant 32 : index
    %c0_38 = arith.constant 0 : index
    %71 = vector.load %arg11[%c32, %c0_38] : memref<48x128xf32, #tpu.memory_space<vmem>>, vector<16x128xf32>
    tpu.vector_store %arg11[%c32, %c0_38], %70 {strides = array<i32>} : memref<48x128xf32, #tpu.memory_space<vmem>>, vector<16x128xf32>,
    return
  }
  func.func @transform_0(%arg0: i32) -> (i32, i32) {
    %c0_i32 = arith.constant 0 : i32
    %c0_i32_0 = arith.constant 0 : i32
    %c0_i32_1 = arith.constant 0 : i32
    return %c0_i32, %c0_i32_0 : i32, i32
  }
  func.func @transform_1(%arg0: i32) -> (i32, i32) {
    %c0_i32 = arith.constant 0 : i32
    %c0_i32_0 = arith.constant 0 : i32
    %c0_i32_1 = arith.constant 0 : i32
    return %c0_i32, %c0_i32_0 : i32, i32
  }
  func.func @transform_2(%arg0: i32) -> (i32, i32) {
    %c0_i32 = arith.constant 0 : i32
    %c0_i32_0 = arith.constant 0 : i32
    %c0_i32_1 = arith.constant 0 : i32
    return %c0_i32, %c0_i32_0 : i32, i32
  }
  func.func @transform_3(%arg0: i32) -> (i32, i32) {
    %c0_i32 = arith.constant 0 : i32
    %c0_i32_0 = arith.constant 0 : i32
    %c0_i32_1 = arith.constant 0 : i32
    return %c0_i32, %c0_i32_0 : i32, i32
  }
  func.func @transform_4(%arg0: i32) -> (i32, i32) {
    %c0_i32 = arith.constant 0 : i32
    %c0_i32_0 = arith.constant 0 : i32
    %c0_i32_1 = arith.constant 0 : i32
    return %c0_i32, %c0_i32_0 : i32, i32
  }
  func.func @transform_5(%arg0: i32) -> (i32, i32) {
    %c0_i32 = arith.constant 0 : i32
    %c0_i32_0 = arith.constant 0 : i32
    %c0_i32_1 = arith.constant 0 : i32
    return %c0_i32, %c0_i32_0 : i32, i32
  }
  func.func @transform_6(%arg0: i32) -> (i32, i32) {
    %c0_i32 = arith.constant 0 : i32
    %c0_i32_0 = arith.constant 0 : i32
    %c0_i32_1 = arith.constant 0 : i32
    return %c0_i32, %c0_i32_0 : i32, i32
  }
  func.func @transform_7(%arg0: i32) -> (i32, i32) {
    %c0_i32 = arith.constant 0 : i32
    %c0_i32_0 = arith.constant 0 : i32
    %c0_i32_1 = arith.constant 0 : i32
    return %c0_i32, %c0_i32_0 : i32, i32
  }
  func.func @transform_8(%arg0: i32) -> (i32, i32) {
    %c0_i32 = arith.constant 0 : i32
    %c0_i32_0 = arith.constant 0 : i32
    %c0_i32_1 = arith.constant 0 : i32
    return %c0_i32, %c0_i32_0 : i32, i32
  }
  func.func @transform_9(%arg0: i32) -> (i32, i32) {
    %c0_i32 = arith.constant 0 : i32
    %c0_i32_0 = arith.constant 0 : i32
    %c0_i32_1 = arith.constant 0 : i32
    return %c0_i32, %c0_i32_0 : i32, i32
  }
  func.func @transform_10(%arg0: i32) -> (i32, i32) {
    %c0_i32 = arith.constant 0 : i32
    %c0_i32_0 = arith.constant 0 : i32
    %c0_i32_1 = arith.constant 0 : i32
    return %c0_i32, %c0_i32_0 : i32, i32
  }
}

</mosaic_0001>

<llo_original>
// kernel: _lambda_.4
$region0: #{_lambda_.4}
  #allocation0 [shape = 'u32[]', space=smem, size = 0x4, offset = 0x4, fixed_abs, tag = 'smem constant byte address 0x4 - core index']
  #allocation1 [shape = 'u32[72,128]{1,0:T(1,128)}', space=vmem, size = 0x9000, scoped, tag = 'internal scratch']
  #allocation2 [shape = 'f32[1024,128]{1,0:T(8,128)}', space=vmem, size = 0x80000, scoped, tag = 'scratch operand']
  %s0 = inlined_call_operand.vmem [shape: f32[1024,27], index: 0, kind: input, shape index: {}]
  %s1 = inlined_call_operand.vmem [shape: bf16[128,128], index: 1, kind: input, shape index: {}]
  %s2 = inlined_call_operand.vmem [shape: f32[1,128], index: 2, kind: input, shape index: {}]
  %s3 = inlined_call_operand.vmem [shape: f32[1024,128], index: 3, kind: output, shape index: {}]
  %s4 = sld [smem:[#allocation0]]
  $region22: #{_lambda_.4} parent=0
    _
  %s6 = ssub.s32 1, %s4
  %s7 = scalar_select 0, %s6, %s4
  // Predicated region
  $region2: #{_lambda_.4} parent=0 // pred_check
    _
  $region3: #{_lambda_.4} parent=0 // pred_check_branch
    %9 = sbr.rel (0) target = $region5
  $region4: #{_lambda_.4} parent=0 // pred_region
    _
  $region5: #{_lambda_.4} parent=0 // pred_fallthru
    _
  // Predicated region
  $region6: #{_lambda_.4} parent=0 // pred_check
    _
  $region7: #{_lambda_.4} parent=0 // pred_check_branch
    %11 = sbr.rel (0) target = $region9
  $region8: #{_lambda_.4} parent=0 // pred_region
    _
  $region9: #{_lambda_.4} parent=0 // pred_fallthru
    _
  // Predicated region
  $region10: #{_lambda_.4} parent=0 // pred_check
    _
  $region11: #{_lambda_.4} parent=0 // pred_check_branch
    %13 = sbr.rel (0) target = $region13
  $region12: #{_lambda_.4} parent=0 // pred_region
    _
  $region13: #{_lambda_.4} parent=0 // pred_fallthru
    _
  %14 = vst [vmem:[#allocation2] sm:$0xff] 0.0
  %15 = vst [vmem:[#allocation2 + $0x8] sm:$0xff] 0.0
  %16 = vst [vmem:[#allocation2 + $0x10] sm:$0xff] 0.0
  %17 = vst [vmem:[#allocation2 + $0x18] sm:$0xff] 0.0
  %18 = vst [vmem:[#allocation2 + $0x20] sm:$0xff] 0.0
  %19 = vst [vmem:[#allocation2 + $0x28] sm:$0xff] 0.0
  %20 = vst [vmem:[#allocation2 + $0x30] sm:$0xff] 0.0
  %21 = vst [vmem:[#allocation2 + $0x38] sm:$0xff] 0.0
  %22 = vst [vmem:[#allocation2 + $0x40] sm:$0xff] 0.0
  %23 = vst [vmem:[#allocation2 + $0x48] sm:$0xff] 0.0
  %24 = vst [vmem:[#allocation2 + $0x50] sm:$0xff] 0.0
  %25 = vst [vmem:[#allocation2 + $0x58] sm:$0xff] 0.0
  %26 = vst [vmem:[#allocation2 + $0x60] sm:$0xff] 0.0
  %27 = vst [vmem:[#allocation2 + $0x68] sm:$0xff] 0.0
  %28 = vst [vmem:[#allocation2 + $0x70] sm:$0xff] 0.0
  %29 = vst [vmem:[#allocation2 + $0x78] sm:$0xff] 0.0
  %30 = vst [vmem:[#allocation2 + $0x80] sm:$0xff] 0.0
  %31 = vst [vmem:[#allocation2 + $0x88] sm:$0xff] 0.0
  %32 = vst [vmem:[#allocation2 + $0x90] sm:$0xff] 0.0
  %33 = vst [vmem:[#allocation2 + $0x98] sm:$0xff] 0.0
  %34 = vst [vmem:[#allocation2 + $0xa0] sm:$0xff] 0.0
  %35 = vst [vmem:[#allocation2 + $0xa8] sm:$0xff] 0.0
  %36 = vst [vmem:[#allocation2 + $0xb0] sm:$0xff] 0.0
  %37 = vst [vmem:[#allocation2 + $0xb8] sm:$0xff] 0.0
  %38 = vst [vmem:[#allocation2 + $0xc0] sm:$0xff] 0.0
  %39 = vst [vmem:[#allocation2 + $0xc8] sm:$0xff] 0.0
  %40 = vst [vmem:[#allocation2 + $0xd0] sm:$0xff] 0.0
  %41 = vst [vmem:[#allocation2 + $0xd8] sm:$0xff] 0.0
  %42 = vst [vmem:[#allocation2 + $0xe0] sm:$0xff] 0.0
  %43 = vst [vmem:[#allocation2 + $0xe8] sm:$0xff] 0.0
  %44 = vst [vmem:[#allocation2 + $0xf0] sm:$0xff] 0.0
  %45 = vst [vmem:[#allocation2 + $0xf8] sm:$0xff] 0.0
  %46 = vst [vmem:[#allocation2 + $0x100] sm:$0xff] 0.0
  %47 = vst [vmem:[#allocation2 + $0x108] sm:$0xff] 0.0
  %48 = vst [vmem:[#allocation2 + $0x110] sm:$0xff] 0.0
  %49 = vst [vmem:[#allocation2 + $0x118] sm:$0xff] 0.0
  %50 = vst [vmem:[#allocation2 + $0x120] sm:$0xff] 0.0
  %51 = vst [vmem:[#allocation2 + $0x128] sm:$0xff] 0.0
  %52 = vst [vmem:[#allocation2 + $0x130] sm:$0xff] 0.0
  %53 = vst [vmem:[#allocation2 + $0x138] sm:$0xff] 0.0
  %54 = vst [vmem:[#allocation2 + $0x140] sm:$0xff] 0.0
  %55 = vst [vmem:[#allocation2 + $0x148] sm:$0xff] 0.0
  %56 = vst [vmem:[#allocation2 + $0x150] sm:$0xff] 0.0
  %57 = vst [vmem:[#allocation2 + $0x158] sm:$0xff] 0.0
  %58 = vst [vmem:[#allocation2 + $0x160] sm:$0xff] 0.0
  %59 = vst [vmem:[#allocation2 + $0x168] sm:$0xff] 0.0
  %60 = vst [vmem:[#allocation2 + $0x170] sm:$0xff] 0.0
  %61 = vst [vmem:[#allocation2 + $0x178] sm:$0xff] 0.0
  %62 = vst [vmem:[#allocation2 + $0x180] sm:$0xff] 0.0
  %63 = vst [vmem:[#allocation2 + $0x188] sm:$0xff] 0.0
  %64 = vst [vmem:[#allocation2 + $0x190] sm:$0xff] 0.0
  %65 = vst [vmem:[#allocation2 + $0x198] sm:$0xff] 0.0
  %66 = vst [vmem:[#allocation2 + $0x1a0] sm:$0xff] 0.0
  %67 = vst [vmem:[#allocation2 + $0x1a8] sm:$0xff] 0.0
  %68 = vst [vmem:[#allocation2 + $0x1b0] sm:$0xff] 0.0
  %69 = vst [vmem:[#allocation2 + $0x1b8] sm:$0xff] 0.0
  %70 = vst [vmem:[#allocation2 + $0x1c0] sm:$0xff] 0.0
  %71 = vst [vmem:[#allocation2 + $0x1c8] sm:$0xff] 0.0
  %72 = vst [vmem:[#allocation2 + $0x1d0] sm:$0xff] 0.0
  %73 = vst [vmem:[#allocation2 + $0x1d8] sm:$0xff] 0.0
  %74 = vst [vmem:[#allocation2 + $0x1e0] sm:$0xff] 0.0
  %75 = vst [vmem:[#allocation2 + $0x1e8] sm:$0xff] 0.0
  %76 = vst [vmem:[#allocation2 + $0x1f0] sm:$0xff] 0.0
  %77 = vst [vmem:[#allocation2 + $0x1f8] sm:$0xff] 0.0
  %78 = vst [vmem:[#allocation2 + $0x200] sm:$0xff] 0.0
  %79 = vst [vmem:[#allocation2 + $0x208] sm:$0xff] 0.0
  %80 = vst [vmem:[#allocation2 + $0x210] sm:$0xff] 0.0
  %81 = vst [vmem:[#allocation2 + $0x218] sm:$0xff] 0.0
  %82 = vst [vmem:[#allocation2 + $0x220] sm:$0xff] 0.0
  %83 = vst [vmem:[#allocation2 + $0x228] sm:$0xff] 0.0
  %84 = vst [vmem:[#allocation2 + $0x230] sm:$0xff] 0.0
  %85 = vst [vmem:[#allocation2 + $0x238] sm:$0xff] 0.0
  %86 = vst [vmem:[#allocation2 + $0x240] sm:$0xff] 0.0
  %87 = vst [vmem:[#allocation2 + $0x248] sm:$0xff] 0.0
  %88 = vst [vmem:[#allocation2 + $0x250] sm:$0xff] 0.0
  %89 = vst [vmem:[#allocation2 + $0x258] sm:$0xff] 0.0
  %90 = vst [vmem:[#allocation2 + $0x260] sm:$0xff] 0.0
  %91 = vst [vmem:[#allocation2 + $0x268] sm:$0xff] 0.0
  %92 = vst [vmem:[#allocation2 + $0x270] sm:$0xff] 0.0
  %93 = vst [vmem:[#allocation2 + $0x278] sm:$0xff] 0.0
  %94 = vst [vmem:[#allocation2 + $0x280] sm:$0xff] 0.0
  %95 = vst [vmem:[#allocation2 + $0x288] sm:$0xff] 0.0
  %96 = vst [vmem:[#allocation2 + $0x290] sm:$0xff] 0.0
  %97 = vst [vmem:[#allocation2 + $0x298] sm:$0xff] 0.0
  %98 = vst [vmem:[#allocation2 + $0x2a0] sm:$0xff] 0.0
  %99 = vst [vmem:[#allocation2 + $0x2a8] sm:$0xff] 0.0
  %100 = vst [vmem:[#allocation2 + $0x2b0] sm:$0xff] 0.0
  %101 = vst [vmem:[#allocation2 + $0x2b8] sm:$0xff] 0.0
  %102 = vst [vmem:[#allocation2 + $0x2c0] sm:$0xff] 0.0
  %103 = vst [vmem:[#allocation2 + $0x2c8] sm:$0xff] 0.0
  %104 = vst [vmem:[#allocation2 + $0x2d0] sm:$0xff] 0.0
  %105 = vst [vmem:[#allocation2 + $0x2d8] sm:$0xff] 0.0
  %106 = vst [vmem:[#allocation2 + $0x2e0] sm:$0xff] 0.0
  %107 = vst [vmem:[#allocation2 + $0x2e8] sm:$0xff] 0.0
  %108 = vst [vmem:[#allocation2 + $0x2f0] sm:$0xff] 0.0
  %109 = vst [vmem:[#allocation2 + $0x2f8] sm:$0xff] 0.0
  %110 = vst [vmem:[#allocation2 + $0x300] sm:$0xff] 0.0
  %111 = vst [vmem:[#allocation2 + $0x308] sm:$0xff] 0.0
  %112 = vst [vmem:[#allocation2 + $0x310] sm:$0xff] 0.0
  %113 = vst [vmem:[#allocation2 + $0x318] sm:$0xff] 0.0
  %114 = vst [vmem:[#allocation2 + $0x320] sm:$0xff] 0.0
  %115 = vst [vmem:[#allocation2 + $0x328] sm:$0xff] 0.0
  %116 = vst [vmem:[#allocation2 + $0x330] sm:$0xff] 0.0
  %117 = vst [vmem:[#allocation2 + $0x338] sm:$0xff] 0.0
  %118 = vst [vmem:[#allocation2 + $0x340] sm:$0xff] 0.0
  %119 = vst [vmem:[#allocation2 + $0x348] sm:$0xff] 0.0
  %120 = vst [vmem:[#allocation2 + $0x350] sm:$0xff] 0.0
  %121 = vst [vmem:[#allocation2 + $0x358] sm:$0xff] 0.0
  %122 = vst [vmem:[#allocation2 + $0x360] sm:$0xff] 0.0
  %123 = vst [vmem:[#allocation2 + $0x368] sm:$0xff] 0.0
  %124 = vst [vmem:[#allocation2 + $0x370] sm:$0xff] 0.0
  %125 = vst [vmem:[#allocation2 + $0x378] sm:$0xff] 0.0
  %126 = vst [vmem:[#allocation2 + $0x380] sm:$0xff] 0.0
  %127 = vst [vmem:[#allocation2 + $0x388] sm:$0xff] 0.0
  %128 = vst [vmem:[#allocation2 + $0x390] sm:$0xff] 0.0
  %129 = vst [vmem:[#allocation2 + $0x398] sm:$0xff] 0.0
  %130 = vst [vmem:[#allocation2 + $0x3a0] sm:$0xff] 0.0
  %131 = vst [vmem:[#allocation2 + $0x3a8] sm:$0xff] 0.0
  %132 = vst [vmem:[#allocation2 + $0x3b0] sm:$0xff] 0.0
  %133 = vst [vmem:[#allocation2 + $0x3b8] sm:$0xff] 0.0
  %134 = vst [vmem:[#allocation2 + $0x3c0] sm:$0xff] 0.0
  %135 = vst [vmem:[#allocation2 + $0x3c8] sm:$0xff] 0.0
  %136 = vst [vmem:[#allocation2 + $0x3d0] sm:$0xff] 0.0
  %137 = vst [vmem:[#allocation2 + $0x3d8] sm:$0xff] 0.0
  %138 = vst [vmem:[#allocation2 + $0x3e0] sm:$0xff] 0.0
  %139 = vst [vmem:[#allocation2 + $0x3e8] sm:$0xff] 0.0
  %140 = vst [vmem:[#allocation2 + $0x3f0] sm:$0xff] 0.0
  %141 = vst [vmem:[#allocation2 + $0x3f8] sm:$0xff] 0.0
  %v142 = vld [vmem:[%s0] sm:$0xff]
  %v143 = vld [vmem:[%s0 + $0x8] sm:$0xff]
  %v144 = vld [vmem:[%s0 + $0x10] sm:$0xff]
  %v145 = vld [vmem:[%s0 + $0x18] sm:$0xff]
  %v146 = vld [vmem:[%s0 + $0x20] sm:$0xff]
  %v147 = vld [vmem:[%s0 + $0x28] sm:$0xff]
  %v148 = vld [vmem:[%s0 + $0x30] sm:$0xff]
  %v149 = vld [vmem:[%s0 + $0x38] sm:$0xff]
  %v150 = vld [vmem:[%s0 + $0x40] sm:$0xff]
  %v151 = vld [vmem:[%s0 + $0x48] sm:$0xff]
  %v152 = vld [vmem:[%s0 + $0x50] sm:$0xff]
  %v153 = vld [vmem:[%s0 + $0x58] sm:$0xff]
  %v154 = vld [vmem:[%s0 + $0x60] sm:$0xff]
  %v155 = vld [vmem:[%s0 + $0x68] sm:$0xff]
  %v156 = vld [vmem:[%s0 + $0x70] sm:$0xff]
  %v157 = vld [vmem:[%s0 + $0x78] sm:$0xff]
  %v158 = vld [vmem:[%s0 + $0x80] sm:$0xff]
  %v159 = vld [vmem:[%s0 + $0x88] sm:$0xff]
  %v160 = vld [vmem:[%s0 + $0x90] sm:$0xff]
  %v161 = vld [vmem:[%s0 + $0x98] sm:$0xff]
  %v162 = vld [vmem:[%s0 + $0xa0] sm:$0xff]
  %v163 = vld [vmem:[%s0 + $0xa8] sm:$0xff]
  %v164 = vld [vmem:[%s0 + $0xb0] sm:$0xff]
  %v165 = vld [vmem:[%s0 + $0xb8] sm:$0xff]
  %v166 = vld [vmem:[%s0 + $0xc0] sm:$0xff]
  %v167 = vld [vmem:[%s0 + $0xc8] sm:$0xff]
  %v168 = vld [vmem:[%s0 + $0xd0] sm:$0xff]
  %v169 = vld [vmem:[%s0 + $0xd8] sm:$0xff]
  %v170 = vld [vmem:[%s0 + $0xe0] sm:$0xff]
  %v171 = vld [vmem:[%s0 + $0xe8] sm:$0xff]
  %v172 = vld [vmem:[%s0 + $0xf0] sm:$0xff]
  %v173 = vld [vmem:[%s0 + $0xf8] sm:$0xff]
  %v174 = vld [vmem:[%s0 + $0x100] sm:$0xff]
  %v175 = vld [vmem:[%s0 + $0x108] sm:$0xff]
  %v176 = vld [vmem:[%s0 + $0x110] sm:$0xff]
  %v177 = vld [vmem:[%s0 + $0x118] sm:$0xff]
  %v178 = vld [vmem:[%s0 + $0x120] sm:$0xff]
  %v179 = vld [vmem:[%s0 + $0x128] sm:$0xff]
  %v180 = vld [vmem:[%s0 + $0x130] sm:$0xff]
  %v181 = vld [vmem:[%s0 + $0x138] sm:$0xff]
  %v182 = vld [vmem:[%s0 + $0x140] sm:$0xff]
  %v183 = vld [vmem:[%s0 + $0x148] sm:$0xff]
  %v184 = vld [vmem:[%s0 + $0x150] sm:$0xff]
  %v185 = vld [vmem:[%s0 + $0x158] sm:$0xff]
  %v186 = vld [vmem:[%s0 + $0x160] sm:$0xff]
  %v187 = vld [vmem:[%s0 + $0x168] sm:$0xff]
  %v188 = vld [vmem:[%s0 + $0x170] sm:$0xff]
  %v189 = vld [vmem:[%s0 + $0x178] sm:$0xff]
  %v190 = vld [vmem:[%s0 + $0x180] sm:$0xff]
  %v191 = vld [vmem:[%s0 + $0x188] sm:$0xff]
  %v192 = vld [vmem:[%s0 + $0x190] sm:$0xff]
  %v193 = vld [vmem:[%s0 + $0x198] sm:$0xff]
  %v194 = vld [vmem:[%s0 + $0x1a0] sm:$0xff]
  %v195 = vld [vmem:[%s0 + $0x1a8] sm:$0xff]
  %v196 = vld [vmem:[%s0 + $0x1b0] sm:$0xff]
  %v197 = vld [vmem:[%s0 + $0x1b8] sm:$0xff]
  %v198 = vld [vmem:[%s0 + $0x1c0] sm:$0xff]
  %v199 = vld [vmem:[%s0 + $0x1c8] sm:$0xff]
  %v200 = vld [vmem:[%s0 + $0x1d0] sm:$0xff]
  %v201 = vld [vmem:[%s0 + $0x1d8] sm:$0xff]
  %v202 = vld [vmem:[%s0 + $0x1e0] sm:$0xff]
  %v203 = vld [vmem:[%s0 + $0x1e8] sm:$0xff]
  %v204 = vld [vmem:[%s0 + $0x1f0] sm:$0xff]
  %v205 = vld [vmem:[%s0 + $0x1f8] sm:$0xff]
  %v206 = vld [vmem:[%s0 + $0x200] sm:$0xff]
  %v207 = vld [vmem:[%s0 + $0x208] sm:$0xff]
  %v208 = vld [vmem:[%s0 + $0x210] sm:$0xff]
  %v209 = vld [vmem:[%s0 + $0x218] sm:$0xff]
  %v210 = vld [vmem:[%s0 + $0x220] sm:$0xff]
  %v211 = vld [vmem:[%s0 + $0x228] sm:$0xff]
  %v212 = vld [vmem:[%s0 + $0x230] sm:$0xff]
  %v213 = vld [vmem:[%s0 + $0x238] sm:$0xff]
  %v214 = vld [vmem:[%s0 + $0x240] sm:$0xff]
  %v215 = vld [vmem:[%s0 + $0x248] sm:$0xff]
  %v216 = vld [vmem:[%s0 + $0x250] sm:$0xff]
  %v217 = vld [vmem:[%s0 + $0x258] sm:$0xff]
  %v218 = vld [vmem:[%s0 + $0x260] sm:$0xff]
  %v219 = vld [vmem:[%s0 + $0x268] sm:$0xff]
  %v220 = vld [vmem:[%s0 + $0x270] sm:$0xff]
  %v221 = vld [vmem:[%s0 + $0x278] sm:$0xff]
  %v222 = vld [vmem:[%s0 + $0x280] sm:$0xff]
  %v223 = vld [vmem:[%s0 + $0x288] sm:$0xff]
  %v224 = vld [vmem:[%s0 + $0x290] sm:$0xff]
  %v225 = vld [vmem:[%s0 + $0x298] sm:$0xff]
  %v226 = vld [vmem:[%s0 + $0x2a0] sm:$0xff]
  %v227 = vld [vmem:[%s0 + $0x2a8] sm:$0xff]
  %v228 = vld [vmem:[%s0 + $0x2b0] sm:$0xff]
  %v229 = vld [vmem:[%s0 + $0x2b8] sm:$0xff]
  %v230 = vld [vmem:[%s0 + $0x2c0] sm:$0xff]
  %v231 = vld [vmem:[%s0 + $0x2c8] sm:$0xff]
  %v232 = vld [vmem:[%s0 + $0x2d0] sm:$0xff]
  %v233 = vld [vmem:[%s0 + $0x2d8] sm:$0xff]
  %v234 = vld [vmem:[%s0 + $0x2e0] sm:$0xff]
  %v235 = vld [vmem:[%s0 + $0x2e8] sm:$0xff]
  %v236 = vld [vmem:[%s0 + $0x2f0] sm:$0xff]
  %v237 = vld [vmem:[%s0 + $0x2f8] sm:$0xff]
  %v238 = vld [vmem:[%s0 + $0x300] sm:$0xff]
  %v239 = vld [vmem:[%s0 + $0x308] sm:$0xff]
  %v240 = vld [vmem:[%s0 + $0x310] sm:$0xff]
  %v241 = vld [vmem:[%s0 + $0x318] sm:$0xff]
  %v242 = vld [vmem:[%s0 + $0x320] sm:$0xff]
  %v243 = vld [vmem:[%s0 + $0x328] sm:$0xff]
  %v244 = vld [vmem:[%s0 + $0x330] sm:$0xff]
  %v245 = vld [vmem:[%s0 + $0x338] sm:$0xff]
  %v246 = vld [vmem:[%s0 + $0x340] sm:$0xff]
  %v247 = vld [vmem:[%s0 + $0x348] sm:$0xff]
  %v248 = vld [vmem:[%s0 + $0x350] sm:$0xff]
  %v249 = vld [vmem:[%s0 + $0x358] sm:$0xff]
  %v250 = vld [vmem:[%s0 + $0x360] sm:$0xff]
  %v251 = vld [vmem:[%s0 + $0x368] sm:$0xff]
  %v252 = vld [vmem:[%s0 + $0x370] sm:$0xff]
  %v253 = vld [vmem:[%s0 + $0x378] sm:$0xff]
  %v254 = vld [vmem:[%s0 + $0x380] sm:$0xff]
  %v255 = vld [vmem:[%s0 + $0x388] sm:$0xff]
  %v256 = vld [vmem:[%s0 + $0x390] sm:$0xff]
  %v257 = vld [vmem:[%s0 + $0x398] sm:$0xff]
  %v258 = vld [vmem:[%s0 + $0x3a0] sm:$0xff]
  %v259 = vld [vmem:[%s0 + $0x3a8] sm:$0xff]
  %v260 = vld [vmem:[%s0 + $0x3b0] sm:$0xff]
  %v261 = vld [vmem:[%s0 + $0x3b8] sm:$0xff]
  %v262 = vld [vmem:[%s0 + $0x3c0] sm:$0xff]
  %v263 = vld [vmem:[%s0 + $0x3c8] sm:$0xff]
  %v264 = vld [vmem:[%s0 + $0x3d0] sm:$0xff]
  %v265 = vld [vmem:[%s0 + $0x3d8] sm:$0xff]
  %v266 = vld [vmem:[%s0 + $0x3e0] sm:$0xff]
  %v267 = vld [vmem:[%s0 + $0x3e8] sm:$0xff]
  %v268 = vld [vmem:[%s0 + $0x3f0] sm:$0xff]
  %v269 = vld [vmem:[%s0 + $0x3f8] sm:$0xff]
  %vm270 = vcmask 220160
  %271 = vst.msk [vmem:[#allocation2] sm:$0xff] %vm270, %v142
  %272 = vst.msk [vmem:[#allocation2 + $0x8] sm:$0xff] %vm270, %v143
  %273 = vst.msk [vmem:[#allocation2 + $0x10] sm:$0xff] %vm270, %v144
  %274 = vst.msk [vmem:[#allocation2 + $0x18] sm:$0xff] %vm270, %v145
  %275 = vst.msk [vmem:[#allocation2 + $0x20] sm:$0xff] %vm270, %v146
  %276 = vst.msk [vmem:[#allocation2 + $0x28] sm:$0xff] %vm270, %v147
  %277 = vst.msk [vmem:[#allocation2 + $0x30] sm:$0xff] %vm270, %v148
  %278 = vst.msk [vmem:[#allocation2 + $0x38] sm:$0xff] %vm270, %v149
  %279 = vst.msk [vmem:[#allocation2 + $0x40] sm:$0xff] %vm270, %v150
  %280 = vst.msk [vmem:[#allocation2 + $0x48] sm:$0xff] %vm270, %v151
  %281 = vst.msk [vmem:[#allocation2 + $0x50] sm:$0xff] %vm270, %v152
  %282 = vst.msk [vmem:[#allocation2 + $0x58] sm:$0xff] %vm270, %v153
  %283 = vst.msk [vmem:[#allocation2 + $0x60] sm:$0xff] %vm270, %v154
  %284 = vst.msk [vmem:[#allocation2 + $0x68] sm:$0xff] %vm270, %v155
  %285 = vst.msk [vmem:[#allocation2 + $0x70] sm:$0xff] %vm270, %v156
  %286 = vst.msk [vmem:[#allocation2 + $0x78] sm:$0xff] %vm270, %v157
  %287 = vst.msk [vmem:[#allocation2 + $0x80] sm:$0xff] %vm270, %v158
  %288 = vst.msk [vmem:[#allocation2 + $0x88] sm:$0xff] %vm270, %v159
  %289 = vst.msk [vmem:[#allocation2 + $0x90] sm:$0xff] %vm270, %v160
  %290 = vst.msk [vmem:[#allocation2 + $0x98] sm:$0xff] %vm270, %v161
  %291 = vst.msk [vmem:[#allocation2 + $0xa0] sm:$0xff] %vm270, %v162
  %292 = vst.msk [vmem:[#allocation2 + $0xa8] sm:$0xff] %vm270, %v163
  %293 = vst.msk [vmem:[#allocation2 + $0xb0] sm:$0xff] %vm270, %v164
  %294 = vst.msk [vmem:[#allocation2 + $0xb8] sm:$0xff] %vm270, %v165
  %295 = vst.msk [vmem:[#allocation2 + $0xc0] sm:$0xff] %vm270, %v166
  %296 = vst.msk [vmem:[#allocation2 + $0xc8] sm:$0xff] %vm270, %v167
  %297 = vst.msk [vmem:[#allocation2 + $0xd0] sm:$0xff] %vm270, %v168
  %298 = vst.msk [vmem:[#allocation2 + $0xd8] sm:$0xff] %vm270, %v169
  %299 = vst.msk [vmem:[#allocation2 + $0xe0] sm:$0xff] %vm270, %v170
  %300 = vst.msk [vmem:[#allocation2 + $0xe8] sm:$0xff] %vm270, %v171
  %301 = vst.msk [vmem:[#allocation2 + $0xf0] sm:$0xff] %vm270, %v172
  %302 = vst.msk [vmem:[#allocation2 + $0xf8] sm:$0xff] %vm270, %v173
  %303 = vst.msk [vmem:[#allocation2 + $0x100] sm:$0xff] %vm270, %v174
  %304 = vst.msk [vmem:[#allocation2 + $0x108] sm:$0xff] %vm270, %v175
  %305 = vst.msk [vmem:[#allocation2 + $0x110] sm:$0xff] %vm270, %v176
  %306 = vst.msk [vmem:[#allocation2 + $0x118] sm:$0xff] %vm270, %v177
  %307 = vst.msk [vmem:[#allocation2 + $0x120] sm:$0xff] %vm270, %v178
  %308 = vst.msk [vmem:[#allocation2 + $0x128] sm:$0xff] %vm270, %v179
  %309 = vst.msk [vmem:[#allocation2 + $0x130] sm:$0xff] %vm270, %v180
  %310 = vst.msk [vmem:[#allocation2 + $0x138] sm:$0xff] %vm270, %v181
  %311 = vst.msk [vmem:[#allocation2 + $0x140] sm:$0xff] %vm270, %v182
  %312 = vst.msk [vmem:[#allocation2 + $0x148] sm:$0xff] %vm270, %v183
  %313 = vst.msk [vmem:[#allocation2 + $0x150] sm:$0xff] %vm270, %v184
  %314 = vst.msk [vmem:[#allocation2 + $0x158] sm:$0xff] %vm270, %v185
  %315 = vst.msk [vmem:[#allocation2 + $0x160] sm:$0xff] %vm270, %v186
  %316 = vst.msk [vmem:[#allocation2 + $0x168] sm:$0xff] %vm270, %v187
  %317 = vst.msk [vmem:[#allocation2 + $0x170] sm:$0xff] %vm270, %v188
  %318 = vst.msk [vmem:[#allocation2 + $0x178] sm:$0xff] %vm270, %v189
  %319 = vst.msk [vmem:[#allocation2 + $0x180] sm:$0xff] %vm270, %v190
  %320 = vst.msk [vmem:[#allocation2 + $0x188] sm:$0xff] %vm270, %v191
  %321 = vst.msk [vmem:[#allocation2 + $0x190] sm:$0xff] %vm270, %v192
  %322 = vst.msk [vmem:[#allocation2 + $0x198] sm:$0xff] %vm270, %v193
  %323 = vst.msk [vmem:[#allocation2 + $0x1a0] sm:$0xff] %vm270, %v194
  %324 = vst.msk [vmem:[#allocation2 + $0x1a8] sm:$0xff] %vm270, %v195
  %325 = vst.msk [vmem:[#allocation2 + $0x1b0] sm:$0xff] %vm270, %v196
  %326 = vst.msk [vmem:[#allocation2 + $0x1b8] sm:$0xff] %vm270, %v197
  %327 = vst.msk [vmem:[#allocation2 + $0x1c0] sm:$0xff] %vm270, %v198
  %328 = vst.msk [vmem:[#allocation2 + $0x1c8] sm:$0xff] %vm270, %v199
  %329 = vst.msk [vmem:[#allocation2 + $0x1d0] sm:$0xff] %vm270, %v200
  %330 = vst.msk [vmem:[#allocation2 + $0x1d8] sm:$0xff] %vm270, %v201
  %331 = vst.msk [vmem:[#allocation2 + $0x1e0] sm:$0xff] %vm270, %v202
  %332 = vst.msk [vmem:[#allocation2 + $0x1e8] sm:$0xff] %vm270, %v203
  %333 = vst.msk [vmem:[#allocation2 + $0x1f0] sm:$0xff] %vm270, %v204
  %334 = vst.msk [vmem:[#allocation2 + $0x1f8] sm:$0xff] %vm270, %v205
  %335 = vst.msk [vmem:[#allocation2 + $0x200] sm:$0xff] %vm270, %v206
  %336 = vst.msk [vmem:[#allocation2 + $0x208] sm:$0xff] %vm270, %v207
  %337 = vst.msk [vmem:[#allocation2 + $0x210] sm:$0xff] %vm270, %v208
  %338 = vst.msk [vmem:[#allocation2 + $0x218] sm:$0xff] %vm270, %v209
  %339 = vst.msk [vmem:[#allocation2 + $0x220] sm:$0xff] %vm270, %v210
  %340 = vst.msk [vmem:[#allocation2 + $0x228] sm:$0xff] %vm270, %v211
  %341 = vst.msk [vmem:[#allocation2 + $0x230] sm:$0xff] %vm270, %v212
  %342 = vst.msk [vmem:[#allocation2 + $0x238] sm:$0xff] %vm270, %v213
  %343 = vst.msk [vmem:[#allocation2 + $0x240] sm:$0xff] %vm270, %v214
  %344 = vst.msk [vmem:[#allocation2 + $0x248] sm:$0xff] %vm270, %v215
  %345 = vst.msk [vmem:[#allocation2 + $0x250] sm:$0xff] %vm270, %v216
  %346 = vst.msk [vmem:[#allocation2 + $0x258] sm:$0xff] %vm270, %v217
  %347 = vst.msk [vmem:[#allocation2 + $0x260] sm:$0xff] %vm270, %v218
  %348 = vst.msk [vmem:[#allocation2 + $0x268] sm:$0xff] %vm270, %v219
  %349 = vst.msk [vmem:[#allocation2 + $0x270] sm:$0xff] %vm270, %v220
  %350 = vst.msk [vmem:[#allocation2 + $0x278] sm:$0xff] %vm270, %v221
  %351 = vst.msk [vmem:[#allocation2 + $0x280] sm:$0xff] %vm270, %v222
  %352 = vst.msk [vmem:[#allocation2 + $0x288] sm:$0xff] %vm270, %v223
  %353 = vst.msk [vmem:[#allocation2 + $0x290] sm:$0xff] %vm270, %v224
  %354 = vst.msk [vmem:[#allocation2 + $0x298] sm:$0xff] %vm270, %v225
  %355 = vst.msk [vmem:[#allocation2 + $0x2a0] sm:$0xff] %vm270, %v226
  %356 = vst.msk [vmem:[#allocation2 + $0x2a8] sm:$0xff] %vm270, %v227
  %357 = vst.msk [vmem:[#allocation2 + $0x2b0] sm:$0xff] %vm270, %v228
  %358 = vst.msk [vmem:[#allocation2 + $0x2b8] sm:$0xff] %vm270, %v229
  %359 = vst.msk [vmem:[#allocation2 + $0x2c0] sm:$0xff] %vm270, %v230
  %360 = vst.msk [vmem:[#allocation2 + $0x2c8] sm:$0xff] %vm270, %v231
  %361 = vst.msk [vmem:[#allocation2 + $0x2d0] sm:$0xff] %vm270, %v232
  %362 = vst.msk [vmem:[#allocation2 + $0x2d8] sm:$0xff] %vm270, %v233
  %363 = vst.msk [vmem:[#allocation2 + $0x2e0] sm:$0xff] %vm270, %v234
  %364 = vst.msk [vmem:[#allocation2 + $0x2e8] sm:$0xff] %vm270, %v235
  %365 = vst.msk [vmem:[#allocation2 + $0x2f0] sm:$0xff] %vm270, %v236
  %366 = vst.msk [vmem:[#allocation2 + $0x2f8] sm:$0xff] %vm270, %v237
  %367 = vst.msk [vmem:[#allocation2 + $0x300] sm:$0xff] %vm270, %v238
  %368 = vst.msk [vmem:[#allocation2 + $0x308] sm:$0xff] %vm270, %v239
  %369 = vst.msk [vmem:[#allocation2 + $0x310] sm:$0xff] %vm270, %v240
  %370 = vst.msk [vmem:[#allocation2 + $0x318] sm:$0xff] %vm270, %v241
  %371 = vst.msk [vmem:[#allocation2 + $0x320] sm:$0xff] %vm270, %v242
  %372 = vst.msk [vmem:[#allocation2 + $0x328] sm:$0xff] %vm270, %v243
  %373 = vst.msk [vmem:[#allocation2 + $0x330] sm:$0xff] %vm270, %v244
  %374 = vst.msk [vmem:[#allocation2 + $0x338] sm:$0xff] %vm270, %v245
  %375 = vst.msk [vmem:[#allocation2 + $0x340] sm:$0xff] %vm270, %v246
  %376 = vst.msk [vmem:[#allocation2 + $0x348] sm:$0xff] %vm270, %v247
  %377 = vst.msk [vmem:[#allocation2 + $0x350] sm:$0xff] %vm270, %v248
  %378 = vst.msk [vmem:[#allocation2 + $0x358] sm:$0xff] %vm270, %v249
  %379 = vst.msk [vmem:[#allocation2 + $0x360] sm:$0xff] %vm270, %v250
  %380 = vst.msk [vmem:[#allocation2 + $0x368] sm:$0xff] %vm270, %v251
  %381 = vst.msk [vmem:[#allocation2 + $0x370] sm:$0xff] %vm270, %v252
  %382 = vst.msk [vmem:[#allocation2 + $0x378] sm:$0xff] %vm270, %v253
  %383 = vst.msk [vmem:[#allocation2 + $0x380] sm:$0xff] %vm270, %v254
  %384 = vst.msk [vmem:[#allocation2 + $0x388] sm:$0xff] %vm270, %v255
  %385 = vst.msk [vmem:[#allocation2 + $0x390] sm:$0xff] %vm270, %v256
  %386 = vst.msk [vmem:[#allocation2 + $0x398] sm:$0xff] %vm270, %v257
  %387 = vst.msk [vmem:[#allocation2 + $0x3a0] sm:$0xff] %vm270, %v258
  %388 = vst.msk [vmem:[#allocation2 + $0x3a8] sm:$0xff] %vm270, %v259
  %389 = vst.msk [vmem:[#allocation2 + $0x3b0] sm:$0xff] %vm270, %v260
  %390 = vst.msk [vmem:[#allocation2 + $0x3b8] sm:$0xff] %vm270, %v261
  %391 = vst.msk [vmem:[#allocation2 + $0x3c0] sm:$0xff] %vm270, %v262
  %392 = vst.msk [vmem:[#allocation2 + $0x3c8] sm:$0xff] %vm270, %v263
  %393 = vst.msk [vmem:[#allocation2 + $0x3d0] sm:$0xff] %vm270, %v264
  %394 = vst.msk [vmem:[#allocation2 + $0x3d8] sm:$0xff] %vm270, %v265
  %395 = vst.msk [vmem:[#allocation2 + $0x3e0] sm:$0xff] %vm270, %v266
  %396 = vst.msk [vmem:[#allocation2 + $0x3e8] sm:$0xff] %vm270, %v267
  %397 = vst.msk [vmem:[#allocation2 + $0x3f0] sm:$0xff] %vm270, %v268
  %398 = vst.msk [vmem:[#allocation2 + $0x3f8] sm:$0xff] %vm270, %v269
  %v399 = vld [vmem:[#allocation2] sm:$0xff]
  %v400 = vld [vmem:[#allocation2 + $0x8] sm:$0xff]
  %v401 = vld [vmem:[#allocation2 + $0x10] sm:$0xff]
  %v402 = vld [vmem:[#allocation2 + $0x18] sm:$0xff]
  %v403 = vld [vmem:[#allocation2 + $0x20] sm:$0xff]
  %v404 = vld [vmem:[#allocation2 + $0x28] sm:$0xff]
  %v405 = vld [vmem:[#allocation2 + $0x30] sm:$0xff]
  %v406 = vld [vmem:[#allocation2 + $0x38] sm:$0xff]
  %v407 = vld [vmem:[#allocation2 + $0x40] sm:$0xff]
  %v408 = vld [vmem:[#allocation2 + $0x48] sm:$0xff]
  %v409 = vld [vmem:[#allocation2 + $0x50] sm:$0xff]
  %v410 = vld [vmem:[#allocation2 + $0x58] sm:$0xff]
  %v411 = vld [vmem:[#allocation2 + $0x60] sm:$0xff]
  %v412 = vld [vmem:[#allocation2 + $0x68] sm:$0xff]
  %v413 = vld [vmem:[#allocation2 + $0x70] sm:$0xff]
  %v414 = vld [vmem:[#allocation2 + $0x78] sm:$0xff]
  %v415 = vld [vmem:[#allocation2 + $0x80] sm:$0xff]
  %v416 = vld [vmem:[#allocation2 + $0x88] sm:$0xff]
  %v417 = vld [vmem:[#allocation2 + $0x90] sm:$0xff]
  %v418 = vld [vmem:[#allocation2 + $0x98] sm:$0xff]
  %v419 = vld [vmem:[#allocation2 + $0xa0] sm:$0xff]
  %v420 = vld [vmem:[#allocation2 + $0xa8] sm:$0xff]
  %v421 = vld [vmem:[#allocation2 + $0xb0] sm:$0xff]
  %v422 = vld [vmem:[#allocation2 + $0xb8] sm:$0xff]
  %v423 = vld [vmem:[#allocation2 + $0xc0] sm:$0xff]
  %v424 = vld [vmem:[#allocation2 + $0xc8] sm:$0xff]
  %v425 = vld [vmem:[#allocation2 + $0xd0] sm:$0xff]
  %v426 = vld [vmem:[#allocation2 + $0xd8] sm:$0xff]
  %v427 = vld [vmem:[#allocation2 + $0xe0] sm:$0xff]
  %v428 = vld [vmem:[#allocation2 + $0xe8] sm:$0xff]
  %v429 = vld [vmem:[#allocation2 + $0xf0] sm:$0xff]
  %v430 = vld [vmem:[#allocation2 + $0xf8] sm:$0xff]
  %v431 = vld [vmem:[#allocation2 + $0x100] sm:$0xff]
  %v432 = vld [vmem:[#allocation2 + $0x108] sm:$0xff]
  %v433 = vld [vmem:[#allocation2 + $0x110] sm:$0xff]
  %v434 = vld [vmem:[#allocation2 + $0x118] sm:$0xff]
  %v435 = vld [vmem:[#allocation2 + $0x120] sm:$0xff]
  %v436 = vld [vmem:[#allocation2 + $0x128] sm:$0xff]
  %v437 = vld [vmem:[#allocation2 + $0x130] sm:$0xff]
  %v438 = vld [vmem:[#allocation2 + $0x138] sm:$0xff]
  %v439 = vld [vmem:[#allocation2 + $0x140] sm:$0xff]
  %v440 = vld [vmem:[#allocation2 + $0x148] sm:$0xff]
  %v441 = vld [vmem:[#allocation2 + $0x150] sm:$0xff]
  %v442 = vld [vmem:[#allocation2 + $0x158] sm:$0xff]
  %v443 = vld [vmem:[#allocation2 + $0x160] sm:$0xff]
  %v444 = vld [vmem:[#allocation2 + $0x168] sm:$0xff]
  %v445 = vld [vmem:[#allocation2 + $0x170] sm:$0xff]
  %v446 = vld [vmem:[#allocation2 + $0x178] sm:$0xff]
  %v447 = vld [vmem:[#allocation2 + $0x180] sm:$0xff]
  %v448 = vld [vmem:[#allocation2 + $0x188] sm:$0xff]
  %v449 = vld [vmem:[#allocation2 + $0x190] sm:$0xff]
  %v450 = vld [vmem:[#allocation2 + $0x198] sm:$0xff]
  %v451 = vld [vmem:[#allocation2 + $0x1a0] sm:$0xff]
  %v452 = vld [vmem:[#allocation2 + $0x1a8] sm:$0xff]
  %v453 = vld [vmem:[#allocation2 + $0x1b0] sm:$0xff]
  %v454 = vld [vmem:[#allocation2 + $0x1b8] sm:$0xff]
  %v455 = vld [vmem:[#allocation2 + $0x1c0] sm:$0xff]
  %v456 = vld [vmem:[#allocation2 + $0x1c8] sm:$0xff]
  %v457 = vld [vmem:[#allocation2 + $0x1d0] sm:$0xff]
  %v458 = vld [vmem:[#allocation2 + $0x1d8] sm:$0xff]
  %v459 = vld [vmem:[#allocation2 + $0x1e0] sm:$0xff]
  %v460 = vld [vmem:[#allocation2 + $0x1e8] sm:$0xff]
  %v461 = vld [vmem:[#allocation2 + $0x1f0] sm:$0xff]
  %v462 = vld [vmem:[#allocation2 + $0x1f8] sm:$0xff]
  %v463 = vld [vmem:[#allocation2 + $0x200] sm:$0xff]
  %v464 = vld [vmem:[#allocation2 + $0x208] sm:$0xff]
  %v465 = vld [vmem:[#allocation2 + $0x210] sm:$0xff]
  %v466 = vld [vmem:[#allocation2 + $0x218] sm:$0xff]
  %v467 = vld [vmem:[#allocation2 + $0x220] sm:$0xff]
  %v468 = vld [vmem:[#allocation2 + $0x228] sm:$0xff]
  %v469 = vld [vmem:[#allocation2 + $0x230] sm:$0xff]
  %v470 = vld [vmem:[#allocation2 + $0x238] sm:$0xff]
  %v471 = vld [vmem:[#allocation2 + $0x240] sm:$0xff]
  %v472 = vld [vmem:[#allocation2 + $0x248] sm:$0xff]
  %v473 = vld [vmem:[#allocation2 + $0x250] sm:$0xff]
  %v474 = vld [vmem:[#allocation2 + $0x258] sm:$0xff]
  %v475 = vld [vmem:[#allocation2 + $0x260] sm:$0xff]
  %v476 = vld [vmem:[#allocation2 + $0x268] sm:$0xff]
  %v477 = vld [vmem:[#allocation2 + $0x270] sm:$0xff]
  %v478 = vld [vmem:[#allocation2 + $0x278] sm:$0xff]
  %v479 = vld [vmem:[#allocation2 + $0x280] sm:$0xff]
  %v480 = vld [vmem:[#allocation2 + $0x288] sm:$0xff]
  %v481 = vld [vmem:[#allocation2 + $0x290] sm:$0xff]
  %v482 = vld [vmem:[#allocation2 + $0x298] sm:$0xff]
  %v483 = vld [vmem:[#allocation2 + $0x2a0] sm:$0xff]
  %v484 = vld [vmem:[#allocation2 + $0x2a8] sm:$0xff]
  %v485 = vld [vmem:[#allocation2 + $0x2b0] sm:$0xff]
  %v486 = vld [vmem:[#allocation2 + $0x2b8] sm:$0xff]
  %v487 = vld [vmem:[#allocation2 + $0x2c0] sm:$0xff]
  %v488 = vld [vmem:[#allocation2 + $0x2c8] sm:$0xff]
  %v489 = vld [vmem:[#allocation2 + $0x2d0] sm:$0xff]
  %v490 = vld [vmem:[#allocation2 + $0x2d8] sm:$0xff]
  %v491 = vld [vmem:[#allocation2 + $0x2e0] sm:$0xff]
  %v492 = vld [vmem:[#allocation2 + $0x2e8] sm:$0xff]
  %v493 = vld [vmem:[#allocation2 + $0x2f0] sm:$0xff]
  %v494 = vld [vmem:[#allocation2 + $0x2f8] sm:$0xff]
  %v495 = vld [vmem:[#allocation2 + $0x300] sm:$0xff]
  %v496 = vld [vmem:[#allocation2 + $0x308] sm:$0xff]
  %v497 = vld [vmem:[#allocation2 + $0x310] sm:$0xff]
  %v498 = vld [vmem:[#allocation2 + $0x318] sm:$0xff]
  %v499 = vld [vmem:[#allocation2 + $0x320] sm:$0xff]
  %v500 = vld [vmem:[#allocation2 + $0x328] sm:$0xff]
  %v501 = vld [vmem:[#allocation2 + $0x330] sm:$0xff]
  %v502 = vld [vmem:[#allocation2 + $0x338] sm:$0xff]
  %v503 = vld [vmem:[#allocation2 + $0x340] sm:$0xff]
  %v504 = vld [vmem:[#allocation2 + $0x348] sm:$0xff]
  %v505 = vld [vmem:[#allocation2 + $0x350] sm:$0xff]
  %v506 = vld [vmem:[#allocation2 + $0x358] sm:$0xff]
  %v507 = vld [vmem:[#allocation2 + $0x360] sm:$0xff]
  %v508 = vld [vmem:[#allocation2 + $0x368] sm:$0xff]
  %v509 = vld [vmem:[#allocation2 + $0x370] sm:$0xff]
  %v510 = vld [vmem:[#allocation2 + $0x378] sm:$0xff]
  %v511 = vld [vmem:[#allocation2 + $0x380] sm:$0xff]
  %v512 = vld [vmem:[#allocation2 + $0x388] sm:$0xff]
  %v513 = vld [vmem:[#allocation2 + $0x390] sm:$0xff]
  %v514 = vld [vmem:[#allocation2 + $0x398] sm:$0xff]
  %v515 = vld [vmem:[#allocation2 + $0x3a0] sm:$0xff]
  %v516 = vld [vmem:[#allocation2 + $0x3a8] sm:$0xff]
  %v517 = vld [vmem:[#allocation2 + $0x3b0] sm:$0xff]
  %v518 = vld [vmem:[#allocation2 + $0x3b8] sm:$0xff]
  %v519 = vld [vmem:[#allocation2 + $0x3c0] sm:$0xff]
  %v520 = vld [vmem:[#allocation2 + $0x3c8] sm:$0xff]
  %v521 = vld [vmem:[#allocation2 + $0x3d0] sm:$0xff]
  %v522 = vld [vmem:[#allocation2 + $0x3d8] sm:$0xff]
  %v523 = vld [vmem:[#allocation2 + $0x3e0] sm:$0xff]
  %v524 = vld [vmem:[#allocation2 + $0x3e8] sm:$0xff]
  %v525 = vld [vmem:[#allocation2 + $0x3f0] sm:$0xff]
  %v526 = vld [vmem:[#allocation2 + $0x3f8] sm:$0xff]
  %v527 = vpack.c.bf16 %v400, %v399
  %v528 = vpack.c.bf16 %v402, %v401
  %v529 = vpack.c.bf16 %v404, %v403
  %v530 = vpack.c.bf16 %v406, %v405
  %v531 = vpack.c.bf16 %v408, %v407
  %v532 = vpack.c.bf16 %v410, %v409
  %v533 = vpack.c.bf16 %v412, %v411
  %v534 = vpack.c.bf16 %v414, %v413
  %v535 = vpack.c.bf16 %v416, %v415
  %v536 = vpack.c.bf16 %v418, %v417
  %v537 = vpack.c.bf16 %v420, %v419
  %v538 = vpack.c.bf16 %v422, %v421
  %v539 = vpack.c.bf16 %v424, %v423
  %v540 = vpack.c.bf16 %v426, %v425
  %v541 = vpack.c.bf16 %v428, %v427
  %v542 = vpack.c.bf16 %v430, %v429
  %v543 = vpack.c.bf16 %v432, %v431
  %v544 = vpack.c.bf16 %v434, %v433
  %v545 = vpack.c.bf16 %v436, %v435
  %v546 = vpack.c.bf16 %v438, %v437
  %v547 = vpack.c.bf16 %v440, %v439
  %v548 = vpack.c.bf16 %v442, %v441
  %v549 = vpack.c.bf16 %v444, %v443
  %v550 = vpack.c.bf16 %v446, %v445
  %v551 = vpack.c.bf16 %v448, %v447
  %v552 = vpack.c.bf16 %v450, %v449
  %v553 = vpack.c.bf16 %v452, %v451
  %v554 = vpack.c.bf16 %v454, %v453
  %v555 = vpack.c.bf16 %v456, %v455
  %v556 = vpack.c.bf16 %v458, %v457
  %v557 = vpack.c.bf16 %v460, %v459
  %v558 = vpack.c.bf16 %v462, %v461
  %v559 = vpack.c.bf16 %v464, %v463
  %v560 = vpack.c.bf16 %v466, %v465
  %v561 = vpack.c.bf16 %v468, %v467
  %v562 = vpack.c.bf16 %v470, %v469
  %v563 = vpack.c.bf16 %v472, %v471
  %v564 = vpack.c.bf16 %v474, %v473
  %v565 = vpack.c.bf16 %v476, %v475
  %v566 = vpack.c.bf16 %v478, %v477
  %v567 = vpack.c.bf16 %v480, %v479
  %v568 = vpack.c.bf16 %v482, %v481
  %v569 = vpack.c.bf16 %v484, %v483
  %v570 = vpack.c.bf16 %v486, %v485
  %v571 = vpack.c.bf16 %v488, %v487
  %v572 = vpack.c.bf16 %v490, %v489
  %v573 = vpack.c.bf16 %v492, %v491
  %v574 = vpack.c.bf16 %v494, %v493
  %v575 = vpack.c.bf16 %v496, %v495
  %v576 = vpack.c.bf16 %v498, %v497
  %v577 = vpack.c.bf16 %v500, %v499
  %v578 = vpack.c.bf16 %v502, %v501
  %v579 = vpack.c.bf16 %v504, %v503
  %v580 = vpack.c.bf16 %v506, %v505
  %v581 = vpack.c.bf16 %v508, %v507
  %v582 = vpack.c.bf16 %v510, %v509
  %v583 = vpack.c.bf16 %v512, %v511
  %v584 = vpack.c.bf16 %v514, %v513
  %v585 = vpack.c.bf16 %v516, %v515
  %v586 = vpack.c.bf16 %v518, %v517
  %v587 = vpack.c.bf16 %v520, %v519
  %v588 = vpack.c.bf16 %v522, %v521
  %v589 = vpack.c.bf16 %v524, %v523
  %v590 = vpack.c.bf16 %v526, %v525
  %v591 = vld [vmem:[%s1] sm:$0xf]
  %v592 = vld [vmem:[%s1 + $0x4] sm:$0xf]
  %v593 = vld [vmem:[%s1 + $0x8] sm:$0xf]
  %v594 = vld [vmem:[%s1 + $0xc] sm:$0xf]
  %v595 = vld [vmem:[%s1 + $0x10] sm:$0xf]
  %v596 = vld [vmem:[%s1 + $0x14] sm:$0xf]
  %v597 = vld [vmem:[%s1 + $0x18] sm:$0xf]
  %v598 = vld [vmem:[%s1 + $0x1c] sm:$0xf]
  %v599 = vld [vmem:[%s1 + $0x20] sm:$0xf]
  %v600 = vld [vmem:[%s1 + $0x24] sm:$0xf]
  %v601 = vld [vmem:[%s1 + $0x28] sm:$0xf]
  %v602 = vld [vmem:[%s1 + $0x2c] sm:$0xf]
  %v603 = vld [vmem:[%s1 + $0x30] sm:$0xf]
  %v604 = vld [vmem:[%s1 + $0x34] sm:$0xf]
  %v605 = vld [vmem:[%s1 + $0x38] sm:$0xf]
  %v606 = vld [vmem:[%s1 + $0x3c] sm:$0xf]
  %v607 = vld [vmem:[%s2] sm:$0x1]
  %v609 = vperm.slane %v607, 0
  %v627 = vunpack.c.l.b16 %v591
  %v628 = vunpack.c.l.b16 %v592
  %v629 = vunpack.c.l.b16 %v593
  %v630 = vunpack.c.l.b16 %v594
  %v631 = vunpack.c.l.b16 %v595
  %v632 = vunpack.c.l.b16 %v596
  %v633 = vunpack.c.l.b16 %v597
  %v634 = vunpack.c.l.b16 %v598
  %v635 = vunpack.c.l.b16 %v599
  %v636 = vunpack.c.l.b16 %v600
  %v637 = vunpack.c.l.b16 %v601
  %v638 = vunpack.c.l.b16 %v602
  %v639 = vunpack.c.l.b16 %v603
  %v640 = vunpack.c.l.b16 %v604
  %v641 = vunpack.c.l.b16 %v605
  %v642 = vunpack.c.l.b16 %v606
  %v643 = vpack.c.b16 %v628, %v627
  %v644 = vpack.c.b16 %v630, %v629
  %v645 = vpack.c.b16 %v632, %v631
  %v646 = vpack.c.b16 %v634, %v633
  %v647 = vpack.c.b16 %v636, %v635
  %v648 = vpack.c.b16 %v638, %v637
  %v649 = vpack.c.b16 %v640, %v639
  %v650 = vpack.c.b16 %v642, %v641
  %659 = vmatpush.bf16.msra.mxu0 %v650
  %660 = vmatpush.bf16.msra.mxu0 %v649
  %661 = vmatpush.bf16.msra.mxu0 %v648
  %662 = vmatpush.bf16.msra.mxu0 %v647
  %663 = vmatpush.bf16.msra.mxu0 %v646
  %664 = vmatpush.bf16.msra.mxu0 %v645
  %665 = vmatpush.bf16.msra.mxu0 %v644
  %666 = vmatpush.bf16.msra.mxu0 %v643
  %667 = vmatmul.bf16.gmra.mxu0 %v527
  %v668 = vpop.f32.mrf.mxu0
  %v669 = vadd.f32 %v609, %v668
  %v670 = vpop.f32.mrf.mxu0
  %v671 = vadd.f32 %v609, %v670
  %672 = vmatmul.bf16.gmra.mxu0 %v528
  %v673 = vpop.f32.mrf.mxu0
  %v674 = vadd.f32 %v609, %v673
  %v675 = vpop.f32.mrf.mxu0
  %v676 = vadd.f32 %v609, %v675
  %677 = vmatmul.bf16.gmra.mxu0 %v529
  %v678 = vpop.f32.mrf.mxu0
  %v679 = vadd.f32 %v609, %v678
  %v680 = vpop.f32.mrf.mxu0
  %v681 = vadd.f32 %v609, %v680
  %682 = vmatmul.bf16.gmra.mxu0 %v530
  %v683 = vpop.f32.mrf.mxu0
  %v684 = vadd.f32 %v609, %v683
  %v685 = vpop.f32.mrf.mxu0
  %v686 = vadd.f32 %v609, %v685
  %687 = vmatmul.bf16.gmra.mxu0 %v531
  %v688 = vpop.f32.mrf.mxu0
  %v689 = vadd.f32 %v609, %v688
  %v690 = vpop.f32.mrf.mxu0
  %v691 = vadd.f32 %v609, %v690
  %692 = vmatmul.bf16.gmra.mxu0 %v532
  %v693 = vpop.f32.mrf.mxu0
  %v694 = vadd.f32 %v609, %v693
  %v695 = vpop.f32.mrf.mxu0
  %v696 = vadd.f32 %v609, %v695
  %697 = vmatmul.bf16.gmra.mxu0 %v533
  %v698 = vpop.f32.mrf.mxu0
  %v699 = vadd.f32 %v609, %v698
  %v700 = vpop.f32.mrf.mxu0
  %v701 = vadd.f32 %v609, %v700
  %702 = vmatmul.bf16.gmra.mxu0 %v534
  %v703 = vpop.f32.mrf.mxu0
  %v704 = vadd.f32 %v609, %v703
  %v705 = vpop.f32.mrf.mxu0
  %v706 = vadd.f32 %v609, %v705
  %707 = vmatmul.bf16.gmra.mxu0 %v535
  %v708 = vpop.f32.mrf.mxu0
  %v709 = vadd.f32 %v609, %v708
  %v710 = vpop.f32.mrf.mxu0
  %v711 = vadd.f32 %v609, %v710
  %712 = vmatmul.bf16.gmra.mxu0 %v536
  %v713 = vpop.f32.mrf.mxu0
  %v714 = vadd.f32 %v609, %v713
  %v715 = vpop.f32.mrf.mxu0
  %v716 = vadd.f32 %v609, %v715
  %717 = vmatmul.bf16.gmra.mxu0 %v537
  %v718 = vpop.f32.mrf.mxu0
  %v719 = vadd.f32 %v609, %v718
  %v720 = vpop.f32.mrf.mxu0
  %v721 = vadd.f32 %v609, %v720
  %722 = vmatmul.bf16.gmra.mxu0 %v538
  %v723 = vpop.f32.mrf.mxu0
  %v724 = vadd.f32 %v609, %v723
  %v725 = vpop.f32.mrf.mxu0
  %v726 = vadd.f32 %v609, %v725
  %727 = vmatmul.bf16.gmra.mxu0 %v539
  %v728 = vpop.f32.mrf.mxu0
  %v729 = vadd.f32 %v609, %v728
  %v730 = vpop.f32.mrf.mxu0
  %v731 = vadd.f32 %v609, %v730
  %732 = vmatmul.bf16.gmra.mxu0 %v540
  %v733 = vpop.f32.mrf.mxu0
  %v734 = vadd.f32 %v609, %v733
  %v735 = vpop.f32.mrf.mxu0
  %v736 = vadd.f32 %v609, %v735
  %737 = vmatmul.bf16.gmra.mxu0 %v541
  %v738 = vpop.f32.mrf.mxu0
  %v739 = vadd.f32 %v609, %v738
  %v740 = vpop.f32.mrf.mxu0
  %v741 = vadd.f32 %v609, %v740
  %742 = vmatmul.bf16.gmra.mxu0 %v542
  %v743 = vpop.f32.mrf.mxu0
  %v744 = vadd.f32 %v609, %v743
  %v745 = vpop.f32.mrf.mxu0
  %v746 = vadd.f32 %v609, %v745
  %747 = vmatmul.bf16.gmra.mxu0 %v543
  %v748 = vpop.f32.mrf.mxu0
  %v749 = vadd.f32 %v609, %v748
  %v750 = vpop.f32.mrf.mxu0
  %v751 = vadd.f32 %v609, %v750
  %752 = vmatmul.bf16.gmra.mxu0 %v544
  %v753 = vpop.f32.mrf.mxu0
  %v754 = vadd.f32 %v609, %v753
  %v755 = vpop.f32.mrf.mxu0
  %v756 = vadd.f32 %v609, %v755
  %757 = vmatmul.bf16.gmra.mxu0 %v545
  %v758 = vpop.f32.mrf.mxu0
  %v759 = vadd.f32 %v609, %v758
  %v760 = vpop.f32.mrf.mxu0
  %v761 = vadd.f32 %v609, %v760
  %762 = vmatmul.bf16.gmra.mxu0 %v546
  %v763 = vpop.f32.mrf.mxu0
  %v764 = vadd.f32 %v609, %v763
  %v765 = vpop.f32.mrf.mxu0
  %v766 = vadd.f32 %v609, %v765
  %767 = vmatmul.bf16.gmra.mxu0 %v547
  %v768 = vpop.f32.mrf.mxu0
  %v769 = vadd.f32 %v609, %v768
  %v770 = vpop.f32.mrf.mxu0
  %v771 = vadd.f32 %v609, %v770
  %772 = vmatmul.bf16.gmra.mxu0 %v548
  %v773 = vpop.f32.mrf.mxu0
  %v774 = vadd.f32 %v609, %v773
  %v775 = vpop.f32.mrf.mxu0
  %v776 = vadd.f32 %v609, %v775
  %777 = vmatmul.bf16.gmra.mxu0 %v549
  %v778 = vpop.f32.mrf.mxu0
  %v779 = vadd.f32 %v609, %v778
  %v780 = vpop.f32.mrf.mxu0
  %v781 = vadd.f32 %v609, %v780
  %782 = vmatmul.bf16.gmra.mxu0 %v550
  %v783 = vpop.f32.mrf.mxu0
  %v784 = vadd.f32 %v609, %v783
  %v785 = vpop.f32.mrf.mxu0
  %v786 = vadd.f32 %v609, %v785
  %787 = vmatmul.bf16.gmra.mxu0 %v551
  %v788 = vpop.f32.mrf.mxu0
  %v789 = vadd.f32 %v609, %v788
  %v790 = vpop.f32.mrf.mxu0
  %v791 = vadd.f32 %v609, %v790
  %792 = vmatmul.bf16.gmra.mxu0 %v552
  %v793 = vpop.f32.mrf.mxu0
  %v794 = vadd.f32 %v609, %v793
  %v795 = vpop.f32.mrf.mxu0
  %v796 = vadd.f32 %v609, %v795
  %797 = vmatmul.bf16.gmra.mxu0 %v553
  %v798 = vpop.f32.mrf.mxu0
  %v799 = vadd.f32 %v609, %v798
  %v800 = vpop.f32.mrf.mxu0
  %v801 = vadd.f32 %v609, %v800
  %802 = vmatmul.bf16.gmra.mxu0 %v554
  %v803 = vpop.f32.mrf.mxu0
  %v804 = vadd.f32 %v609, %v803
  %v805 = vpop.f32.mrf.mxu0
  %v806 = vadd.f32 %v609, %v805
  %807 = vmatmul.bf16.gmra.mxu0 %v555
  %v808 = vpop.f32.mrf.mxu0
  %v809 = vadd.f32 %v609, %v808
  %v810 = vpop.f32.mrf.mxu0
  %v811 = vadd.f32 %v609, %v810
  %812 = vmatmul.bf16.gmra.mxu0 %v556
  %v813 = vpop.f32.mrf.mxu0
  %v814 = vadd.f32 %v609, %v813
  %v815 = vpop.f32.mrf.mxu0
  %v816 = vadd.f32 %v609, %v815
  %817 = vmatmul.bf16.gmra.mxu0 %v557
  %v818 = vpop.f32.mrf.mxu0
  %v819 = vadd.f32 %v609, %v818
  %v820 = vpop.f32.mrf.mxu0
  %v821 = vadd.f32 %v609, %v820
  %822 = vmatmul.bf16.gmra.mxu0 %v558
  %v823 = vpop.f32.mrf.mxu0
  %v824 = vadd.f32 %v609, %v823
  %v825 = vpop.f32.mrf.mxu0
  %v826 = vadd.f32 %v609, %v825
  %827 = vmatmul.bf16.gmra.mxu0 %v559
  %v828 = vpop.f32.mrf.mxu0
  %v829 = vadd.f32 %v609, %v828
  %v830 = vpop.f32.mrf.mxu0
  %v831 = vadd.f32 %v609, %v830
  %832 = vmatmul.bf16.gmra.mxu0 %v560
  %v833 = vpop.f32.mrf.mxu0
  %v834 = vadd.f32 %v609, %v833
  %v835 = vpop.f32.mrf.mxu0
  %v836 = vadd.f32 %v609, %v835
  %837 = vmatmul.bf16.gmra.mxu0 %v561
  %v838 = vpop.f32.mrf.mxu0
  %v839 = vadd.f32 %v609, %v838
  %v840 = vpop.f32.mrf.mxu0
  %v841 = vadd.f32 %v609, %v840
  %842 = vmatmul.bf16.gmra.mxu0 %v562
  %v843 = vpop.f32.mrf.mxu0
  %v844 = vadd.f32 %v609, %v843
  %v845 = vpop.f32.mrf.mxu0
  %v846 = vadd.f32 %v609, %v845
  %847 = vmatmul.bf16.gmra.mxu0 %v563
  %v848 = vpop.f32.mrf.mxu0
  %v849 = vadd.f32 %v609, %v848
  %v850 = vpop.f32.mrf.mxu0
  %v851 = vadd.f32 %v609, %v850
  %852 = vmatmul.bf16.gmra.mxu0 %v564
  %v853 = vpop.f32.mrf.mxu0
  %v854 = vadd.f32 %v609, %v853
  %v855 = vpop.f32.mrf.mxu0
  %v856 = vadd.f32 %v609, %v855
  %857 = vmatmul.bf16.gmra.mxu0 %v565
  %v858 = vpop.f32.mrf.mxu0
  %v859 = vadd.f32 %v609, %v858
  %v860 = vpop.f32.mrf.mxu0
  %v861 = vadd.f32 %v609, %v860
  %862 = vmatmul.bf16.gmra.mxu0 %v566
  %v863 = vpop.f32.mrf.mxu0
  %v864 = vadd.f32 %v609, %v863
  %v865 = vpop.f32.mrf.mxu0
  %v866 = vadd.f32 %v609, %v865
  %867 = vmatmul.bf16.gmra.mxu0 %v567
  %v868 = vpop.f32.mrf.mxu0
  %v869 = vadd.f32 %v609, %v868
  %v870 = vpop.f32.mrf.mxu0
  %v871 = vadd.f32 %v609, %v870
  %872 = vmatmul.bf16.gmra.mxu0 %v568
  %v873 = vpop.f32.mrf.mxu0
  %v874 = vadd.f32 %v609, %v873
  %v875 = vpop.f32.mrf.mxu0
  %v876 = vadd.f32 %v609, %v875
  %877 = vmatmul.bf16.gmra.mxu0 %v569
  %v878 = vpop.f32.mrf.mxu0
  %v879 = vadd.f32 %v609, %v878
  %v880 = vpop.f32.mrf.mxu0
  %v881 = vadd.f32 %v609, %v880
  %882 = vmatmul.bf16.gmra.mxu0 %v570
  %v883 = vpop.f32.mrf.mxu0
  %v884 = vadd.f32 %v609, %v883
  %v885 = vpop.f32.mrf.mxu0
  %v886 = vadd.f32 %v609, %v885
  %887 = vmatmul.bf16.gmra.mxu0 %v571
  %v888 = vpop.f32.mrf.mxu0
  %v889 = vadd.f32 %v609, %v888
  %v890 = vpop.f32.mrf.mxu0
  %v891 = vadd.f32 %v609, %v890
  %892 = vmatmul.bf16.gmra.mxu0 %v572
  %v893 = vpop.f32.mrf.mxu0
  %v894 = vadd.f32 %v609, %v893
  %v895 = vpop.f32.mrf.mxu0
  %v896 = vadd.f32 %v609, %v895
  %897 = vmatmul.bf16.gmra.mxu0 %v573
  %v898 = vpop.f32.mrf.mxu0
  %v899 = vadd.f32 %v609, %v898
  %v900 = vpop.f32.mrf.mxu0
  %v901 = vadd.f32 %v609, %v900
  %902 = vmatmul.bf16.gmra.mxu0 %v574
  %v903 = vpop.f32.mrf.mxu0
  %v904 = vadd.f32 %v609, %v903
  %v905 = vpop.f32.mrf.mxu0
  %v906 = vadd.f32 %v609, %v905
  %907 = vmatmul.bf16.gmra.mxu0 %v575
  %v908 = vpop.f32.mrf.mxu0
  %v909 = vadd.f32 %v609, %v908
  %v910 = vpop.f32.mrf.mxu0
  %v911 = vadd.f32 %v609, %v910
  %912 = vmatmul.bf16.gmra.mxu0 %v576
  %v913 = vpop.f32.mrf.mxu0
  %v914 = vadd.f32 %v609, %v913
  %v915 = vpop.f32.mrf.mxu0
  %v916 = vadd.f32 %v609, %v915
  %917 = vmatmul.bf16.gmra.mxu0 %v577
  %v918 = vpop.f32.mrf.mxu0
  %v919 = vadd.f32 %v609, %v918
  %v920 = vpop.f32.mrf.mxu0
  %v921 = vadd.f32 %v609, %v920
  %922 = vmatmul.bf16.gmra.mxu0 %v578
  %v923 = vpop.f32.mrf.mxu0
  %v924 = vadd.f32 %v609, %v923
  %v925 = vpop.f32.mrf.mxu0
  %v926 = vadd.f32 %v609, %v925
  %927 = vmatmul.bf16.gmra.mxu0 %v579
  %v928 = vpop.f32.mrf.mxu0
  %v929 = vadd.f32 %v609, %v928
  %v930 = vpop.f32.mrf.mxu0
  %v931 = vadd.f32 %v609, %v930
  %932 = vmatmul.bf16.gmra.mxu0 %v580
  %v933 = vpop.f32.mrf.mxu0
  %v934 = vadd.f32 %v609, %v933
  %v935 = vpop.f32.mrf.mxu0
  %v936 = vadd.f32 %v609, %v935
  %937 = vmatmul.bf16.gmra.mxu0 %v581
  %v938 = vpop.f32.mrf.mxu0
  %v939 = vadd.f32 %v609, %v938
  %v940 = vpop.f32.mrf.mxu0
  %v941 = vadd.f32 %v609, %v940
  %942 = vmatmul.bf16.gmra.mxu0 %v582
  %v943 = vpop.f32.mrf.mxu0
  %v944 = vadd.f32 %v609, %v943
  %v945 = vpop.f32.mrf.mxu0
  %v946 = vadd.f32 %v609, %v945
  %947 = vmatmul.bf16.gmra.mxu0 %v583
  %v948 = vpop.f32.mrf.mxu0
  %v949 = vadd.f32 %v609, %v948
  %v950 = vpop.f32.mrf.mxu0
  %v951 = vadd.f32 %v609, %v950
  %952 = vmatmul.bf16.gmra.mxu0 %v584
  %v953 = vpop.f32.mrf.mxu0
  %v954 = vadd.f32 %v609, %v953
  %v955 = vpop.f32.mrf.mxu0
  %v956 = vadd.f32 %v609, %v955
  %957 = vmatmul.bf16.gmra.mxu0 %v585
  %v958 = vpop.f32.mrf.mxu0
  %v959 = vadd.f32 %v609, %v958
  %v960 = vpop.f32.mrf.mxu0
  %v961 = vadd.f32 %v609, %v960
  %962 = vmatmul.bf16.gmra.mxu0 %v586
  %v963 = vpop.f32.mrf.mxu0
  %v964 = vadd.f32 %v609, %v963
  %v965 = vpop.f32.mrf.mxu0
  %v966 = vadd.f32 %v609, %v965
  %967 = vmatmul.bf16.gmra.mxu0 %v587
  %v968 = vpop.f32.mrf.mxu0
  %v969 = vadd.f32 %v609, %v968
  %v970 = vpop.f32.mrf.mxu0
  %v971 = vadd.f32 %v609, %v970
  %972 = vmatmul.bf16.gmra.mxu0 %v588
  %v973 = vpop.f32.mrf.mxu0
  %v974 = vadd.f32 %v609, %v973
  %v975 = vpop.f32.mrf.mxu0
  %v976 = vadd.f32 %v609, %v975
  %977 = vmatmul.bf16.gmra.mxu0 %v589
  %v978 = vpop.f32.mrf.mxu0
  %v979 = vadd.f32 %v609, %v978
  %v980 = vpop.f32.mrf.mxu0
  %v981 = vadd.f32 %v609, %v980
  %982 = vmatmul.bf16.gmra.mxu0 %v590
  %v983 = vpop.f32.mrf.mxu0
  %v984 = vadd.f32 %v609, %v983
  %v985 = vpop.f32.mrf.mxu0
  %v986 = vadd.f32 %v609, %v985
  %987 = vdwg.mxu0
  %v988 = vmax.f32 %v669, 0.0
  %v989 = vmax.f32 %v671, 0.0
  %v990 = vmax.f32 %v674, 0.0
  %v991 = vmax.f32 %v676, 0.0
  %v992 = vmax.f32 %v679, 0.0
  %v993 = vmax.f32 %v681, 0.0
  %v994 = vmax.f32 %v684, 0.0
  %v995 = vmax.f32 %v686, 0.0
  %v996 = vmax.f32 %v689, 0.0
  %v997 = vmax.f32 %v691, 0.0
  %v998 = vmax.f32 %v694, 0.0
  %v999 = vmax.f32 %v696, 0.0
  %v1000 = vmax.f32 %v699, 0.0
  %v1001 = vmax.f32 %v701, 0.0
  %v1002 = vmax.f32 %v704, 0.0
  %v1003 = vmax.f32 %v706, 0.0
  %v1004 = vmax.f32 %v709, 0.0
  %v1005 = vmax.f32 %v711, 0.0
  %v1006 = vmax.f32 %v714, 0.0
  %v1007 = vmax.f32 %v716, 0.0
  %v1008 = vmax.f32 %v719, 0.0
  %v1009 = vmax.f32 %v721, 0.0
  %v1010 = vmax.f32 %v724, 0.0
  %v1011 = vmax.f32 %v726, 0.0
  %v1012 = vmax.f32 %v729, 0.0
  %v1013 = vmax.f32 %v731, 0.0
  %v1014 = vmax.f32 %v734, 0.0
  %v1015 = vmax.f32 %v736, 0.0
  %v1016 = vmax.f32 %v739, 0.0
  %v1017 = vmax.f32 %v741, 0.0
  %v1018 = vmax.f32 %v744, 0.0
  %v1019 = vmax.f32 %v746, 0.0
  %v1020 = vmax.f32 %v749, 0.0
  %v1021 = vmax.f32 %v751, 0.0
  %v1022 = vmax.f32 %v754, 0.0
  %v1023 = vmax.f32 %v756, 0.0
  %v1024 = vmax.f32 %v759, 0.0
  %v1025 = vmax.f32 %v761, 0.0
  %v1026 = vmax.f32 %v764, 0.0
  %v1027 = vmax.f32 %v766, 0.0
  %v1028 = vmax.f32 %v769, 0.0
  %v1029 = vmax.f32 %v771, 0.0
  %v1030 = vmax.f32 %v774, 0.0
  %v1031 = vmax.f32 %v776, 0.0
  %v1032 = vmax.f32 %v779, 0.0
  %v1033 = vmax.f32 %v781, 0.0
  %v1034 = vmax.f32 %v784, 0.0
  %v1035 = vmax.f32 %v786, 0.0
  %v1036 = vmax.f32 %v789, 0.0
  %v1037 = vmax.f32 %v791, 0.0
  %v1038 = vmax.f32 %v794, 0.0
  %v1039 = vmax.f32 %v796, 0.0
  %v1040 = vmax.f32 %v799, 0.0
  %v1041 = vmax.f32 %v801, 0.0
  %v1042 = vmax.f32 %v804, 0.0
  %v1043 = vmax.f32 %v806, 0.0
  %v1044 = vmax.f32 %v809, 0.0
  %v1045 = vmax.f32 %v811, 0.0
  %v1046 = vmax.f32 %v814, 0.0
  %v1047 = vmax.f32 %v816, 0.0
  %v1048 = vmax.f32 %v819, 0.0
  %v1049 = vmax.f32 %v821, 0.0
  %v1050 = vmax.f32 %v824, 0.0
  %v1051 = vmax.f32 %v826, 0.0
  %v1052 = vmax.f32 %v829, 0.0
  %v1053 = vmax.f32 %v831, 0.0
  %v1054 = vmax.f32 %v834, 0.0
  %v1055 = vmax.f32 %v836, 0.0
  %v1056 = vmax.f32 %v839, 0.0
  %v1057 = vmax.f32 %v841, 0.0
  %v1058 = vmax.f32 %v844, 0.0
  %v1059 = vmax.f32 %v846, 0.0
  %v1060 = vmax.f32 %v849, 0.0
  %v1061 = vmax.f32 %v851, 0.0
  %v1062 = vmax.f32 %v854, 0.0
  %v1063 = vmax.f32 %v856, 0.0
  %v1064 = vmax.f32 %v859, 0.0
  %v1065 = vmax.f32 %v861, 0.0
  %v1066 = vmax.f32 %v864, 0.0
  %v1067 = vmax.f32 %v866, 0.0
  %v1068 = vmax.f32 %v869, 0.0
  %v1069 = vmax.f32 %v871, 0.0
  %v1070 = vmax.f32 %v874, 0.0
  %v1071 = vmax.f32 %v876, 0.0
  %v1072 = vmax.f32 %v879, 0.0
  %v1073 = vmax.f32 %v881, 0.0
  %v1074 = vmax.f32 %v884, 0.0
  %v1075 = vmax.f32 %v886, 0.0
  %v1076 = vmax.f32 %v889, 0.0
  %v1077 = vmax.f32 %v891, 0.0
  %v1078 = vmax.f32 %v894, 0.0
  %v1079 = vmax.f32 %v896, 0.0
  %v1080 = vmax.f32 %v899, 0.0
  %v1081 = vmax.f32 %v901, 0.0
  %v1082 = vmax.f32 %v904, 0.0
  %v1083 = vmax.f32 %v906, 0.0
  %v1084 = vmax.f32 %v909, 0.0
  %v1085 = vmax.f32 %v911, 0.0
  %v1086 = vmax.f32 %v914, 0.0
  %v1087 = vmax.f32 %v916, 0.0
  %v1088 = vmax.f32 %v919, 0.0
  %v1089 = vmax.f32 %v921, 0.0
  %v1090 = vmax.f32 %v924, 0.0
  %v1091 = vmax.f32 %v926, 0.0
  %v1092 = vmax.f32 %v929, 0.0
  %v1093 = vmax.f32 %v931, 0.0
  %v1094 = vmax.f32 %v934, 0.0
  %v1095 = vmax.f32 %v936, 0.0
  %v1096 = vmax.f32 %v939, 0.0
  %v1097 = vmax.f32 %v941, 0.0
  %v1098 = vmax.f32 %v944, 0.0
  %v1099 = vmax.f32 %v946, 0.0
  %v1100 = vmax.f32 %v949, 0.0
  %v1101 = vmax.f32 %v951, 0.0
  %v1102 = vmax.f32 %v954, 0.0
  %v1103 = vmax.f32 %v956, 0.0
  %v1104 = vmax.f32 %v959, 0.0
  %v1105 = vmax.f32 %v961, 0.0
  %v1106 = vmax.f32 %v964, 0.0
  %v1107 = vmax.f32 %v966, 0.0
  %v1108 = vmax.f32 %v969, 0.0
  %v1109 = vmax.f32 %v971, 0.0
  %v1110 = vmax.f32 %v974, 0.0
  %v1111 = vmax.f32 %v976, 0.0
  %v1112 = vmax.f32 %v979, 0.0
  %v1113 = vmax.f32 %v981, 0.0
  %v1114 = vmax.f32 %v984, 0.0
  %v1115 = vmax.f32 %v986, 0.0
  %1116 = vst [vmem:[%s3] sm:$0xff] %v988
  %1117 = vst [vmem:[%s3 + $0x8] sm:$0xff] %v989
  %1118 = vst [vmem:[%s3 + $0x10] sm:$0xff] %v990
  %1119 = vst [vmem:[%s3 + $0x18] sm:$0xff] %v991
  %1120 = vst [vmem:[%s3 + $0x20] sm:$0xff] %v992
  %1121 = vst [vmem:[%s3 + $0x28] sm:$0xff] %v993
  %1122 = vst [vmem:[%s3 + $0x30] sm:$0xff] %v994
  %1123 = vst [vmem:[%s3 + $0x38] sm:$0xff] %v995
  %1124 = vst [vmem:[%s3 + $0x40] sm:$0xff] %v996
  %1125 = vst [vmem:[%s3 + $0x48] sm:$0xff] %v997
  %1126 = vst [vmem:[%s3 + $0x50] sm:$0xff] %v998
  %1127 = vst [vmem:[%s3 + $0x58] sm:$0xff] %v999
  %1128 = vst [vmem:[%s3 + $0x60] sm:$0xff] %v1000
  %1129 = vst [vmem:[%s3 + $0x68] sm:$0xff] %v1001
  %1130 = vst [vmem:[%s3 + $0x70] sm:$0xff] %v1002
  %1131 = vst [vmem:[%s3 + $0x78] sm:$0xff] %v1003
  %1132 = vst [vmem:[%s3 + $0x80] sm:$0xff] %v1004
  %1133 = vst [vmem:[%s3 + $0x88] sm:$0xff] %v1005
  %1134 = vst [vmem:[%s3 + $0x90] sm:$0xff] %v1006
  %1135 = vst [vmem:[%s3 + $0x98] sm:$0xff] %v1007
  %1136 = vst [vmem:[%s3 + $0xa0] sm:$0xff] %v1008
  %1137 = vst [vmem:[%s3 + $0xa8] sm:$0xff] %v1009
  %1138 = vst [vmem:[%s3 + $0xb0] sm:$0xff] %v1010
  %1139 = vst [vmem:[%s3 + $0xb8] sm:$0xff] %v1011
  %1140 = vst [vmem:[%s3 + $0xc0] sm:$0xff] %v1012
  %1141 = vst [vmem:[%s3 + $0xc8] sm:$0xff] %v1013
  %1142 = vst [vmem:[%s3 + $0xd0] sm:$0xff] %v1014
  %1143 = vst [vmem:[%s3 + $0xd8] sm:$0xff] %v1015
  %1144 = vst [vmem:[%s3 + $0xe0] sm:$0xff] %v1016
  %1145 = vst [vmem:[%s3 + $0xe8] sm:$0xff] %v1017
  %1146 = vst [vmem:[%s3 + $0xf0] sm:$0xff] %v1018
  %1147 = vst [vmem:[%s3 + $0xf8] sm:$0xff] %v1019
  %1148 = vst [vmem:[%s3 + $0x100] sm:$0xff] %v1020
  %1149 = vst [vmem:[%s3 + $0x108] sm:$0xff] %v1021
  %1150 = vst [vmem:[%s3 + $0x110] sm:$0xff] %v1022
  %1151 = vst [vmem:[%s3 + $0x118] sm:$0xff] %v1023
  %1152 = vst [vmem:[%s3 + $0x120] sm:$0xff] %v1024
  %1153 = vst [vmem:[%s3 + $0x128] sm:$0xff] %v1025
  %1154 = vst [vmem:[%s3 + $0x130] sm:$0xff] %v1026
  %1155 = vst [vmem:[%s3 + $0x138] sm:$0xff] %v1027
  %1156 = vst [vmem:[%s3 + $0x140] sm:$0xff] %v1028
  %1157 = vst [vmem:[%s3 + $0x148] sm:$0xff] %v1029
  %1158 = vst [vmem:[%s3 + $0x150] sm:$0xff] %v1030
  %1159 = vst [vmem:[%s3 + $0x158] sm:$0xff] %v1031
  %1160 = vst [vmem:[%s3 + $0x160] sm:$0xff] %v1032
  %1161 = vst [vmem:[%s3 + $0x168] sm:$0xff] %v1033
  %1162 = vst [vmem:[%s3 + $0x170] sm:$0xff] %v1034
  %1163 = vst [vmem:[%s3 + $0x178] sm:$0xff] %v1035
  %1164 = vst [vmem:[%s3 + $0x180] sm:$0xff] %v1036
  %1165 = vst [vmem:[%s3 + $0x188] sm:$0xff] %v1037
  %1166 = vst [vmem:[%s3 + $0x190] sm:$0xff] %v1038
  %1167 = vst [vmem:[%s3 + $0x198] sm:$0xff] %v1039
  %1168 = vst [vmem:[%s3 + $0x1a0] sm:$0xff] %v1040
  %1169 = vst [vmem:[%s3 + $0x1a8] sm:$0xff] %v1041
  %1170 = vst [vmem:[%s3 + $0x1b0] sm:$0xff] %v1042
  %1171 = vst [vmem:[%s3 + $0x1b8] sm:$0xff] %v1043
  %1172 = vst [vmem:[%s3 + $0x1c0] sm:$0xff] %v1044
  %1173 = vst [vmem:[%s3 + $0x1c8] sm:$0xff] %v1045
  %1174 = vst [vmem:[%s3 + $0x1d0] sm:$0xff] %v1046
  %1175 = vst [vmem:[%s3 + $0x1d8] sm:$0xff] %v1047
  %1176 = vst [vmem:[%s3 + $0x1e0] sm:$0xff] %v1048
  %1177 = vst [vmem:[%s3 + $0x1e8] sm:$0xff] %v1049
  %1178 = vst [vmem:[%s3 + $0x1f0] sm:$0xff] %v1050
  %1179 = vst [vmem:[%s3 + $0x1f8] sm:$0xff] %v1051
  %1180 = vst [vmem:[%s3 + $0x200] sm:$0xff] %v1052
  %1181 = vst [vmem:[%s3 + $0x208] sm:$0xff] %v1053
  %1182 = vst [vmem:[%s3 + $0x210] sm:$0xff] %v1054
  %1183 = vst [vmem:[%s3 + $0x218] sm:$0xff] %v1055
  %1184 = vst [vmem:[%s3 + $0x220] sm:$0xff] %v1056
  %1185 = vst [vmem:[%s3 + $0x228] sm:$0xff] %v1057
  %1186 = vst [vmem:[%s3 + $0x230] sm:$0xff] %v1058
  %1187 = vst [vmem:[%s3 + $0x238] sm:$0xff] %v1059
  %1188 = vst [vmem:[%s3 + $0x240] sm:$0xff] %v1060
  %1189 = vst [vmem:[%s3 + $0x248] sm:$0xff] %v1061
  %1190 = vst [vmem:[%s3 + $0x250] sm:$0xff] %v1062
  %1191 = vst [vmem:[%s3 + $0x258] sm:$0xff] %v1063
  %1192 = vst [vmem:[%s3 + $0x260] sm:$0xff] %v1064
  %1193 = vst [vmem:[%s3 + $0x268] sm:$0xff] %v1065
  %1194 = vst [vmem:[%s3 + $0x270] sm:$0xff] %v1066
  %1195 = vst [vmem:[%s3 + $0x278] sm:$0xff] %v1067
  %1196 = vst [vmem:[%s3 + $0x280] sm:$0xff] %v1068
  %1197 = vst [vmem:[%s3 + $0x288] sm:$0xff] %v1069
  %1198 = vst [vmem:[%s3 + $0x290] sm:$0xff] %v1070
  %1199 = vst [vmem:[%s3 + $0x298] sm:$0xff] %v1071
  %1200 = vst [vmem:[%s3 + $0x2a0] sm:$0xff] %v1072
  %1201 = vst [vmem:[%s3 + $0x2a8] sm:$0xff] %v1073
  %1202 = vst [vmem:[%s3 + $0x2b0] sm:$0xff] %v1074
  %1203 = vst [vmem:[%s3 + $0x2b8] sm:$0xff] %v1075
  %1204 = vst [vmem:[%s3 + $0x2c0] sm:$0xff] %v1076
  %1205 = vst [vmem:[%s3 + $0x2c8] sm:$0xff] %v1077
  %1206 = vst [vmem:[%s3 + $0x2d0] sm:$0xff] %v1078
  %1207 = vst [vmem:[%s3 + $0x2d8] sm:$0xff] %v1079
  %1208 = vst [vmem:[%s3 + $0x2e0] sm:$0xff] %v1080
  %1209 = vst [vmem:[%s3 + $0x2e8] sm:$0xff] %v1081
  %1210 = vst [vmem:[%s3 + $0x2f0] sm:$0xff] %v1082
  %1211 = vst [vmem:[%s3 + $0x2f8] sm:$0xff] %v1083
  %1212 = vst [vmem:[%s3 + $0x300] sm:$0xff] %v1084
  %1213 = vst [vmem:[%s3 + $0x308] sm:$0xff] %v1085
  %1214 = vst [vmem:[%s3 + $0x310] sm:$0xff] %v1086
  %1215 = vst [vmem:[%s3 + $0x318] sm:$0xff] %v1087
  %1216 = vst [vmem:[%s3 + $0x320] sm:$0xff] %v1088
  %1217 = vst [vmem:[%s3 + $0x328] sm:$0xff] %v1089
  %1218 = vst [vmem:[%s3 + $0x330] sm:$0xff] %v1090
  %1219 = vst [vmem:[%s3 + $0x338] sm:$0xff] %v1091
  %1220 = vst [vmem:[%s3 + $0x340] sm:$0xff] %v1092
  %1221 = vst [vmem:[%s3 + $0x348] sm:$0xff] %v1093
  %1222 = vst [vmem:[%s3 + $0x350] sm:$0xff] %v1094
  %1223 = vst [vmem:[%s3 + $0x358] sm:$0xff] %v1095
  %1224 = vst [vmem:[%s3 + $0x360] sm:$0xff] %v1096
  %1225 = vst [vmem:[%s3 + $0x368] sm:$0xff] %v1097
  %1226 = vst [vmem:[%s3 + $0x370] sm:$0xff] %v1098
  %1227 = vst [vmem:[%s3 + $0x378] sm:$0xff] %v1099
  %1228 = vst [vmem:[%s3 + $0x380] sm:$0xff] %v1100
  %1229 = vst [vmem:[%s3 + $0x388] sm:$0xff] %v1101
  %1230 = vst [vmem:[%s3 + $0x390] sm:$0xff] %v1102
  %1231 = vst [vmem:[%s3 + $0x398] sm:$0xff] %v1103
  %1232 = vst [vmem:[%s3 + $0x3a0] sm:$0xff] %v1104
  %1233 = vst [vmem:[%s3 + $0x3a8] sm:$0xff] %v1105
  %1234 = vst [vmem:[%s3 + $0x3b0] sm:$0xff] %v1106
  %1235 = vst [vmem:[%s3 + $0x3b8] sm:$0xff] %v1107
  %1236 = vst [vmem:[%s3 + $0x3c0] sm:$0xff] %v1108
  %1237 = vst [vmem:[%s3 + $0x3c8] sm:$0xff] %v1109
  %1238 = vst [vmem:[%s3 + $0x3d0] sm:$0xff] %v1110
  %1239 = vst [vmem:[%s3 + $0x3d8] sm:$0xff] %v1111
  %1240 = vst [vmem:[%s3 + $0x3e0] sm:$0xff] %v1112
  %1241 = vst [vmem:[%s3 + $0x3e8] sm:$0xff] %v1113
  %1242 = vst [vmem:[%s3 + $0x3f0] sm:$0xff] %v1114
  %1243 = vst [vmem:[%s3 + $0x3f8] sm:$0xff] %v1115
  // Predicated region
  $region14: #{_lambda_.4} parent=0 // pred_check
    _
  $region15: #{_lambda_.4} parent=0 // pred_check_branch
    %1245 = sbr.rel (0) target = $region17
  $region16: #{_lambda_.4} parent=0 // pred_region
    _
  $region17: #{_lambda_.4} parent=0 // pred_fallthru
    _
  // Predicated region
  $region18: #{_lambda_.4} parent=0 // pred_check
    _
  $region19: #{_lambda_.4} parent=0 // pred_check_branch
    %1247 = sbr.rel (0) target = $region21
  $region20: #{_lambda_.4} parent=0 // pred_region
    _
  $region21: #{_lambda_.4} parent=0 // pred_fallthru
    _

// kernel: _lambda_.5
$region0: #{_lambda_.5}
  #allocation0 [shape = 'u32[]', space=smem, size = 0x4, offset = 0x4, fixed_abs, tag = 'smem constant byte address 0x4 - core index']
  #allocation1 [shape = 'u32[72,128]{1,0:T(1,128)}', space=vmem, size = 0x9000, scoped, tag = 'internal scratch']
  #allocation2 [shape = 'f32[256,256]{1,0:T(8,128)}', space=vmem, size = 0x40000, scoped, tag = 'scratch operand']
  %s0 = inlined_call_operand.vmem [shape: f32[256,144], index: 0, kind: input, shape index: {}]
  %s1 = inlined_call_operand.vmem [shape: bf16[256,128], index: 1, kind: input, shape index: {}]
  %s2 = inlined_call_operand.vmem [shape: f32[1,128], index: 2, kind: input, shape index: {}]
  %s3 = inlined_call_operand.vmem [shape: f32[256,128], index: 3, kind: output, shape index: {}]
  %s4 = sld [smem:[#allocation0]]
  $region22: #{_lambda_.5} parent=0
    _
  %s6 = ssub.s32 1, %s4
  %s7 = scalar_select 0, %s6, %s4
  // Predicated region
  $region2: #{_lambda_.5} parent=0 // pred_check
    _
  $region3: #{_lambda_.5} parent=0 // pred_check_branch
    %9 = sbr.rel (0) target = $region5
  $region4: #{_lambda_.5} parent=0 // pred_region
    _
  $region5: #{_lambda_.5} parent=0 // pred_fallthru
    _
  // Predicated region
  $region6: #{_lambda_.5} parent=0 // pred_check
    _
  $region7: #{_lambda_.5} parent=0 // pred_check_branch
    %11 = sbr.rel (0) target = $region9
  $region8: #{_lambda_.5} parent=0 // pred_region
    _
  $region9: #{_lambda_.5} parent=0 // pred_fallthru
    _
  // Predicated region
  $region10: #{_lambda_.5} parent=0 // pred_check
    _
  $region11: #{_lambda_.5} parent=0 // pred_check_branch
    %13 = sbr.rel (0) target = $region13
  $region12: #{_lambda_.5} parent=0 // pred_region
    _
  $region13: #{_lambda_.5} parent=0 // pred_fallthru
    _
  %14 = vst [vmem:[#allocation2] sm:$0xff] 0.0
  %15 = vst [vmem:[#allocation2 + $0x8] sm:$0xff] 0.0
  %16 = vst [vmem:[#allocation2 + $0x10] sm:$0xff] 0.0
  %17 = vst [vmem:[#allocation2 + $0x18] sm:$0xff] 0.0
  %18 = vst [vmem:[#allocation2 + $0x20] sm:$0xff] 0.0
  %19 = vst [vmem:[#allocation2 + $0x28] sm:$0xff] 0.0
  %20 = vst [vmem:[#allocation2 + $0x30] sm:$0xff] 0.0
  %21 = vst [vmem:[#allocation2 + $0x38] sm:$0xff] 0.0
  %22 = vst [vmem:[#allocation2 + $0x40] sm:$0xff] 0.0
  %23 = vst [vmem:[#allocation2 + $0x48] sm:$0xff] 0.0
  %24 = vst [vmem:[#allocation2 + $0x50] sm:$0xff] 0.0
  %25 = vst [vmem:[#allocation2 + $0x58] sm:$0xff] 0.0
  %26 = vst [vmem:[#allocation2 + $0x60] sm:$0xff] 0.0
  %27 = vst [vmem:[#allocation2 + $0x68] sm:$0xff] 0.0
  %28 = vst [vmem:[#allocation2 + $0x70] sm:$0xff] 0.0
  %29 = vst [vmem:[#allocation2 + $0x78] sm:$0xff] 0.0
  %30 = vst [vmem:[#allocation2 + $0x80] sm:$0xff] 0.0
  %31 = vst [vmem:[#allocation2 + $0x88] sm:$0xff] 0.0
  %32 = vst [vmem:[#allocation2 + $0x90] sm:$0xff] 0.0
  %33 = vst [vmem:[#allocation2 + $0x98] sm:$0xff] 0.0
  %34 = vst [vmem:[#allocation2 + $0xa0] sm:$0xff] 0.0
  %35 = vst [vmem:[#allocation2 + $0xa8] sm:$0xff] 0.0
  %36 = vst [vmem:[#allocation2 + $0xb0] sm:$0xff] 0.0
  %37 = vst [vmem:[#allocation2 + $0xb8] sm:$0xff] 0.0
  %38 = vst [vmem:[#allocation2 + $0xc0] sm:$0xff] 0.0
  %39 = vst [vmem:[#allocation2 + $0xc8] sm:$0xff] 0.0
  %40 = vst [vmem:[#allocation2 + $0xd0] sm:$0xff] 0.0
  %41 = vst [vmem:[#allocation2 + $0xd8] sm:$0xff] 0.0
  %42 = vst [vmem:[#allocation2 + $0xe0] sm:$0xff] 0.0
  %43 = vst [vmem:[#allocation2 + $0xe8] sm:$0xff] 0.0
  %44 = vst [vmem:[#allocation2 + $0xf0] sm:$0xff] 0.0
  %45 = vst [vmem:[#allocation2 + $0xf8] sm:$0xff] 0.0
  %46 = vst [vmem:[#allocation2 + $0x100] sm:$0xff] 0.0
  %47 = vst [vmem:[#allocation2 + $0x108] sm:$0xff] 0.0
  %48 = vst [vmem:[#allocation2 + $0x110] sm:$0xff] 0.0
  %49 = vst [vmem:[#allocation2 + $0x118] sm:$0xff] 0.0
  %50 = vst [vmem:[#allocation2 + $0x120] sm:$0xff] 0.0
  %51 = vst [vmem:[#allocation2 + $0x128] sm:$0xff] 0.0
  %52 = vst [vmem:[#allocation2 + $0x130] sm:$0xff] 0.0
  %53 = vst [vmem:[#allocation2 + $0x138] sm:$0xff] 0.0
  %54 = vst [vmem:[#allocation2 + $0x140] sm:$0xff] 0.0
  %55 = vst [vmem:[#allocation2 + $0x148] sm:$0xff] 0.0
  %56 = vst [vmem:[#allocation2 + $0x150] sm:$0xff] 0.0
  %57 = vst [vmem:[#allocation2 + $0x158] sm:$0xff] 0.0
  %58 = vst [vmem:[#allocation2 + $0x160] sm:$0xff] 0.0
  %59 = vst [vmem:[#allocation2 + $0x168] sm:$0xff] 0.0
  %60 = vst [vmem:[#allocation2 + $0x170] sm:$0xff] 0.0
  %61 = vst [vmem:[#allocation2 + $0x178] sm:$0xff] 0.0
  %62 = vst [vmem:[#allocation2 + $0x180] sm:$0xff] 0.0
  %63 = vst [vmem:[#allocation2 + $0x188] sm:$0xff] 0.0
  %64 = vst [vmem:[#allocation2 + $0x190] sm:$0xff] 0.0
  %65 = vst [vmem:[#allocation2 + $0x198] sm:$0xff] 0.0
  %66 = vst [vmem:[#allocation2 + $0x1a0] sm:$0xff] 0.0
  %67 = vst [vmem:[#allocation2 + $0x1a8] sm:$0xff] 0.0
  %68 = vst [vmem:[#allocation2 + $0x1b0] sm:$0xff] 0.0
  %69 = vst [vmem:[#allocation2 + $0x1b8] sm:$0xff] 0.0
  %70 = vst [vmem:[#allocation2 + $0x1c0] sm:$0xff] 0.0
  %71 = vst [vmem:[#allocation2 + $0x1c8] sm:$0xff] 0.0
  %72 = vst [vmem:[#allocation2 + $0x1d0] sm:$0xff] 0.0
  %73 = vst [vmem:[#allocation2 + $0x1d8] sm:$0xff] 0.0
  %74 = vst [vmem:[#allocation2 + $0x1e0] sm:$0xff] 0.0
  %75 = vst [vmem:[#allocation2 + $0x1e8] sm:$0xff] 0.0
  %76 = vst [vmem:[#allocation2 + $0x1f0] sm:$0xff] 0.0
  %77 = vst [vmem:[#allocation2 + $0x1f8] sm:$0xff] 0.0
  %v78 = vld [vmem:[%s0] sm:$0xff]
  %v79 = vld [vmem:[%s0 + $0x8] sm:$0xff]
  %v80 = vld [vmem:[%s0 + $0x10] sm:$0xff]
  %v81 = vld [vmem:[%s0 + $0x18] sm:$0xff]
  %v82 = vld [vmem:[%s0 + $0x20] sm:$0xff]
  %v83 = vld [vmem:[%s0 + $0x28] sm:$0xff]
  %v84 = vld [vmem:[%s0 + $0x30] sm:$0xff]
  %v85 = vld [vmem:[%s0 + $0x38] sm:$0xff]
  %v86 = vld [vmem:[%s0 + $0x40] sm:$0xff]
  %v87 = vld [vmem:[%s0 + $0x48] sm:$0xff]
  %v88 = vld [vmem:[%s0 + $0x50] sm:$0xff]
  %v89 = vld [vmem:[%s0 + $0x58] sm:$0xff]
  %v90 = vld [vmem:[%s0 + $0x60] sm:$0xff]
  %v91 = vld [vmem:[%s0 + $0x68] sm:$0xff]
  %v92 = vld [vmem:[%s0 + $0x70] sm:$0xff]
  %v93 = vld [vmem:[%s0 + $0x78] sm:$0xff]
  %v94 = vld [vmem:[%s0 + $0x80] sm:$0xff]
  %v95 = vld [vmem:[%s0 + $0x88] sm:$0xff]
  %v96 = vld [vmem:[%s0 + $0x90] sm:$0xff]
  %v97 = vld [vmem:[%s0 + $0x98] sm:$0xff]
  %v98 = vld [vmem:[%s0 + $0xa0] sm:$0xff]
  %v99 = vld [vmem:[%s0 + $0xa8] sm:$0xff]
  %v100 = vld [vmem:[%s0 + $0xb0] sm:$0xff]
  %v101 = vld [vmem:[%s0 + $0xb8] sm:$0xff]
  %v102 = vld [vmem:[%s0 + $0xc0] sm:$0xff]
  %v103 = vld [vmem:[%s0 + $0xc8] sm:$0xff]
  %v104 = vld [vmem:[%s0 + $0xd0] sm:$0xff]
  %v105 = vld [vmem:[%s0 + $0xd8] sm:$0xff]
  %v106 = vld [vmem:[%s0 + $0xe0] sm:$0xff]
  %v107 = vld [vmem:[%s0 + $0xe8] sm:$0xff]
  %v108 = vld [vmem:[%s0 + $0xf0] sm:$0xff]
  %v109 = vld [vmem:[%s0 + $0xf8] sm:$0xff]
  %v110 = vld [vmem:[%s0 + $0x100] sm:$0xff]
  %v111 = vld [vmem:[%s0 + $0x108] sm:$0xff]
  %v112 = vld [vmem:[%s0 + $0x110] sm:$0xff]
  %v113 = vld [vmem:[%s0 + $0x118] sm:$0xff]
  %v114 = vld [vmem:[%s0 + $0x120] sm:$0xff]
  %v115 = vld [vmem:[%s0 + $0x128] sm:$0xff]
  %v116 = vld [vmem:[%s0 + $0x130] sm:$0xff]
  %v117 = vld [vmem:[%s0 + $0x138] sm:$0xff]
  %v118 = vld [vmem:[%s0 + $0x140] sm:$0xff]
  %v119 = vld [vmem:[%s0 + $0x148] sm:$0xff]
  %v120 = vld [vmem:[%s0 + $0x150] sm:$0xff]
  %v121 = vld [vmem:[%s0 + $0x158] sm:$0xff]
  %v122 = vld [vmem:[%s0 + $0x160] sm:$0xff]
  %v123 = vld [vmem:[%s0 + $0x168] sm:$0xff]
  %v124 = vld [vmem:[%s0 + $0x170] sm:$0xff]
  %v125 = vld [vmem:[%s0 + $0x178] sm:$0xff]
  %v126 = vld [vmem:[%s0 + $0x180] sm:$0xff]
  %v127 = vld [vmem:[%s0 + $0x188] sm:$0xff]
  %v128 = vld [vmem:[%s0 + $0x190] sm:$0xff]
  %v129 = vld [vmem:[%s0 + $0x198] sm:$0xff]
  %v130 = vld [vmem:[%s0 + $0x1a0] sm:$0xff]
  %v131 = vld [vmem:[%s0 + $0x1a8] sm:$0xff]
  %v132 = vld [vmem:[%s0 + $0x1b0] sm:$0xff]
  %v133 = vld [vmem:[%s0 + $0x1b8] sm:$0xff]
  %v134 = vld [vmem:[%s0 + $0x1c0] sm:$0xff]
  %v135 = vld [vmem:[%s0 + $0x1c8] sm:$0xff]
  %v136 = vld [vmem:[%s0 + $0x1d0] sm:$0xff]
  %v137 = vld [vmem:[%s0 + $0x1d8] sm:$0xff]
  %v138 = vld [vmem:[%s0 + $0x1e0] sm:$0xff]
  %v139 = vld [vmem:[%s0 + $0x1e8] sm:$0xff]
  %v140 = vld [vmem:[%s0 + $0x1f0] sm:$0xff]
  %v141 = vld [vmem:[%s0 + $0x1f8] sm:$0xff]
  %142 = vst [vmem:[#allocation2] sm:$0xff] %v78
  %vm143 = vcmask 130048
  %144 = vst.msk [vmem:[#allocation2 + $0x8] sm:$0xff] %vm143, %v79
  %145 = vst [vmem:[#allocation2 + $0x10] sm:$0xff] %v80
  %146 = vst.msk [vmem:[#allocation2 + $0x18] sm:$0xff] %vm143, %v81
  %147 = vst [vmem:[#allocation2 + $0x20] sm:$0xff] %v82
  %148 = vst.msk [vmem:[#allocation2 + $0x28] sm:$0xff] %vm143, %v83
  %149 = vst [vmem:[#allocation2 + $0x30] sm:$0xff] %v84
  %150 = vst.msk [vmem:[#allocation2 + $0x38] sm:$0xff] %vm143, %v85
  %151 = vst [vmem:[#allocation2 + $0x40] sm:$0xff] %v86
  %152 = vst.msk [vmem:[#allocation2 + $0x48] sm:$0xff] %vm143, %v87
  %153 = vst [vmem:[#allocation2 + $0x50] sm:$0xff] %v88
  %154 = vst.msk [vmem:[#allocation2 + $0x58] sm:$0xff] %vm143, %v89
  %155 = vst [vmem:[#allocation2 + $0x60] sm:$0xff] %v90
  %156 = vst.msk [vmem:[#allocation2 + $0x68] sm:$0xff] %vm143, %v91
  %157 = vst [vmem:[#allocation2 + $0x70] sm:$0xff] %v92
  %158 = vst.msk [vmem:[#allocation2 + $0x78] sm:$0xff] %vm143, %v93
  %159 = vst [vmem:[#allocation2 + $0x80] sm:$0xff] %v94
  %160 = vst.msk [vmem:[#allocation2 + $0x88] sm:$0xff] %vm143, %v95
  %161 = vst [vmem:[#allocation2 + $0x90] sm:$0xff] %v96
  %162 = vst.msk [vmem:[#allocation2 + $0x98] sm:$0xff] %vm143, %v97
  %163 = vst [vmem:[#allocation2 + $0xa0] sm:$0xff] %v98
  %164 = vst.msk [vmem:[#allocation2 + $0xa8] sm:$0xff] %vm143, %v99
  %165 = vst [vmem:[#allocation2 + $0xb0] sm:$0xff] %v100
  %166 = vst.msk [vmem:[#allocation2 + $0xb8] sm:$0xff] %vm143, %v101
  %167 = vst [vmem:[#allocation2 + $0xc0] sm:$0xff] %v102
  %168 = vst.msk [vmem:[#allocation2 + $0xc8] sm:$0xff] %vm143, %v103
  %169 = vst [vmem:[#allocation2 + $0xd0] sm:$0xff] %v104
  %170 = vst.msk [vmem:[#allocation2 + $0xd8] sm:$0xff] %vm143, %v105
  %171 = vst [vmem:[#allocation2 + $0xe0] sm:$0xff] %v106
  %172 = vst.msk [vmem:[#allocation2 + $0xe8] sm:$0xff] %vm143, %v107
  %173 = vst [vmem:[#allocation2 + $0xf0] sm:$0xff] %v108
  %174 = vst.msk [vmem:[#allocation2 + $0xf8] sm:$0xff] %vm143, %v109
  %175 = vst [vmem:[#allocation2 + $0x100] sm:$0xff] %v110
  %176 = vst.msk [vmem:[#allocation2 + $0x108] sm:$0xff] %vm143, %v111
  %177 = vst [vmem:[#allocation2 + $0x110] sm:$0xff] %v112
  %178 = vst.msk [vmem:[#allocation2 + $0x118] sm:$0xff] %vm143, %v113
  %179 = vst [vmem:[#allocation2 + $0x120] sm:$0xff] %v114
  %180 = vst.msk [vmem:[#allocation2 + $0x128] sm:$0xff] %vm143, %v115
  %181 = vst [vmem:[#allocation2 + $0x130] sm:$0xff] %v116
  %182 = vst.msk [vmem:[#allocation2 + $0x138] sm:$0xff] %vm143, %v117
  %183 = vst [vmem:[#allocation2 + $0x140] sm:$0xff] %v118
  %184 = vst.msk [vmem:[#allocation2 + $0x148] sm:$0xff] %vm143, %v119
  %185 = vst [vmem:[#allocation2 + $0x150] sm:$0xff] %v120
  %186 = vst.msk [vmem:[#allocation2 + $0x158] sm:$0xff] %vm143, %v121
  %187 = vst [vmem:[#allocation2 + $0x160] sm:$0xff] %v122
  %188 = vst.msk [vmem:[#allocation2 + $0x168] sm:$0xff] %vm143, %v123
  %189 = vst [vmem:[#allocation2 + $0x170] sm:$0xff] %v124
  %190 = vst.msk [vmem:[#allocation2 + $0x178] sm:$0xff] %vm143, %v125
  %191 = vst [vmem:[#allocation2 + $0x180] sm:$0xff] %v126
  %192 = vst.msk [vmem:[#allocation2 + $0x188] sm:$0xff] %vm143, %v127
  %193 = vst [vmem:[#allocation2 + $0x190] sm:$0xff] %v128
  %194 = vst.msk [vmem:[#allocation2 + $0x198] sm:$0xff] %vm143, %v129
  %195 = vst [vmem:[#allocation2 + $0x1a0] sm:$0xff] %v130
  %196 = vst.msk [vmem:[#allocation2 + $0x1a8] sm:$0xff] %vm143, %v131
  %197 = vst [vmem:[#allocation2 + $0x1b0] sm:$0xff] %v132
  %198 = vst.msk [vmem:[#allocation2 + $0x1b8] sm:$0xff] %vm143, %v133
  %199 = vst [vmem:[#allocation2 + $0x1c0] sm:$0xff] %v134
  %200 = vst.msk [vmem:[#allocation2 + $0x1c8] sm:$0xff] %vm143, %v135
  %201 = vst [vmem:[#allocation2 + $0x1d0] sm:$0xff] %v136
  %202 = vst.msk [vmem:[#allocation2 + $0x1d8] sm:$0xff] %vm143, %v137
  %203 = vst [vmem:[#allocation2 + $0x1e0] sm:$0xff] %v138
  %204 = vst.msk [vmem:[#allocation2 + $0x1e8] sm:$0xff] %vm143, %v139
  %205 = vst [vmem:[#allocation2 + $0x1f0] sm:$0xff] %v140
  %206 = vst.msk [vmem:[#allocation2 + $0x1f8] sm:$0xff] %vm143, %v141
  %v207 = vld [vmem:[#allocation2] sm:$0xff]
  %v208 = vld [vmem:[#allocation2 + $0x8] sm:$0xff]
  %v209 = vld [vmem:[#allocation2 + $0x10] sm:$0xff]
  %v210 = vld [vmem:[#allocation2 + $0x18] sm:$0xff]
  %v211 = vld [vmem:[#allocation2 + $0x20] sm:$0xff]
  %v212 = vld [vmem:[#allocation2 + $0x28] sm:$0xff]
  %v213 = vld [vmem:[#allocation2 + $0x30] sm:$0xff]
  %v214 = vld [vmem:[#allocation2 + $0x38] sm:$0xff]
  %v215 = vld [vmem:[#allocation2 + $0x40] sm:$0xff]
  %v216 = vld [vmem:[#allocation2 + $0x48] sm:$0xff]
  %v217 = vld [vmem:[#allocation2 + $0x50] sm:$0xff]
  %v218 = vld [vmem:[#allocation2 + $0x58] sm:$0xff]
  %v219 = vld [vmem:[#allocation2 + $0x60] sm:$0xff]
  %v220 = vld [vmem:[#allocation2 + $0x68] sm:$0xff]
  %v221 = vld [vmem:[#allocation2 + $0x70] sm:$0xff]
  %v222 = vld [vmem:[#allocation2 + $0x78] sm:$0xff]
  %v223 = vld [vmem:[#allocation2 + $0x80] sm:$0xff]
  %v224 = vld [vmem:[#allocation2 + $0x88] sm:$0xff]
  %v225 = vld [vmem:[#allocation2 + $0x90] sm:$0xff]
  %v226 = vld [vmem:[#allocation2 + $0x98] sm:$0xff]
  %v227 = vld [vmem:[#allocation2 + $0xa0] sm:$0xff]
  %v228 = vld [vmem:[#allocation2 + $0xa8] sm:$0xff]
  %v229 = vld [vmem:[#allocation2 + $0xb0] sm:$0xff]
  %v230 = vld [vmem:[#allocation2 + $0xb8] sm:$0xff]
  %v231 = vld [vmem:[#allocation2 + $0xc0] sm:$0xff]
  %v232 = vld [vmem:[#allocation2 + $0xc8] sm:$0xff]
  %v233 = vld [vmem:[#allocation2 + $0xd0] sm:$0xff]
  %v234 = vld [vmem:[#allocation2 + $0xd8] sm:$0xff]
  %v235 = vld [vmem:[#allocation2 + $0xe0] sm:$0xff]
  %v236 = vld [vmem:[#allocation2 + $0xe8] sm:$0xff]
  %v237 = vld [vmem:[#allocation2 + $0xf0] sm:$0xff]
  %v238 = vld [vmem:[#allocation2 + $0xf8] sm:$0xff]
  %v239 = vld [vmem:[#allocation2 + $0x100] sm:$0xff]
  %v240 = vld [vmem:[#allocation2 + $0x108] sm:$0xff]
  %v241 = vld [vmem:[#allocation2 + $0x110] sm:$0xff]
  %v242 = vld [vmem:[#allocation2 + $0x118] sm:$0xff]
  %v243 = vld [vmem:[#allocation2 + $0x120] sm:$0xff]
  %v244 = vld [vmem:[#allocation2 + $0x128] sm:$0xff]
  %v245 = vld [vmem:[#allocation2 + $0x130] sm:$0xff]
  %v246 = vld [vmem:[#allocation2 + $0x138] sm:$0xff]
  %v247 = vld [vmem:[#allocation2 + $0x140] sm:$0xff]
  %v248 = vld [vmem:[#allocation2 + $0x148] sm:$0xff]
  %v249 = vld [vmem:[#allocation2 + $0x150] sm:$0xff]
  %v250 = vld [vmem:[#allocation2 + $0x158] sm:$0xff]
  %v251 = vld [vmem:[#allocation2 + $0x160] sm:$0xff]
  %v252 = vld [vmem:[#allocation2 + $0x168] sm:$0xff]
  %v253 = vld [vmem:[#allocation2 + $0x170] sm:$0xff]
  %v254 = vld [vmem:[#allocation2 + $0x178] sm:$0xff]
  %v255 = vld [vmem:[#allocation2 + $0x180] sm:$0xff]
  %v256 = vld [vmem:[#allocation2 + $0x188] sm:$0xff]
  %v257 = vld [vmem:[#allocation2 + $0x190] sm:$0xff]
  %v258 = vld [vmem:[#allocation2 + $0x198] sm:$0xff]
  %v259 = vld [vmem:[#allocation2 + $0x1a0] sm:$0xff]
  %v260 = vld [vmem:[#allocation2 + $0x1a8] sm:$0xff]
  %v261 = vld [vmem:[#allocation2 + $0x1b0] sm:$0xff]
  %v262 = vld [vmem:[#allocation2 + $0x1b8] sm:$0xff]
  %v263 = vld [vmem:[#allocation2 + $0x1c0] sm:$0xff]
  %v264 = vld [vmem:[#allocation2 + $0x1c8] sm:$0xff]
  %v265 = vld [vmem:[#allocation2 + $0x1d0] sm:$0xff]
  %v266 = vld [vmem:[#allocation2 + $0x1d8] sm:$0xff]
  %v267 = vld [vmem:[#allocation2 + $0x1e0] sm:$0xff]
  %v268 = vld [vmem:[#allocation2 + $0x1e8] sm:$0xff]
  %v269 = vld [vmem:[#allocation2 + $0x1f0] sm:$0xff]
  %v270 = vld [vmem:[#allocation2 + $0x1f8] sm:$0xff]
  %v271 = vpack.c.bf16 %v209, %v207
  %v272 = vpack.c.bf16 %v210, %v208
  %v273 = vpack.c.bf16 %v213, %v211
  %v274 = vpack.c.bf16 %v214, %v212
  %v275 = vpack.c.bf16 %v217, %v215
  %v276 = vpack.c.bf16 %v218, %v216
  %v277 = vpack.c.bf16 %v221, %v219
  %v278 = vpack.c.bf16 %v222, %v220
  %v279 = vpack.c.bf16 %v225, %v223
  %v280 = vpack.c.bf16 %v226, %v224
  %v281 = vpack.c.bf16 %v229, %v227
  %v282 = vpack.c.bf16 %v230, %v228
  %v283 = vpack.c.bf16 %v233, %v231
  %v284 = vpack.c.bf16 %v234, %v232
  %v285 = vpack.c.bf16 %v237, %v235
  %v286 = vpack.c.bf16 %v238, %v236
  %v287 = vpack.c.bf16 %v241, %v239
  %v288 = vpack.c.bf16 %v242, %v240
  %v289 = vpack.c.bf16 %v245, %v243
  %v290 = vpack.c.bf16 %v246, %v244
  %v291 = vpack.c.bf16 %v249, %v247
  %v292 = vpack.c.bf16 %v250, %v248
  %v293 = vpack.c.bf16 %v253, %v251
  %v294 = vpack.c.bf16 %v254, %v252
  %v295 = vpack.c.bf16 %v257, %v255
  %v296 = vpack.c.bf16 %v258, %v256
  %v297 = vpack.c.bf16 %v261, %v259
  %v298 = vpack.c.bf16 %v262, %v260
  %v299 = vpack.c.bf16 %v265, %v263
  %v300 = vpack.c.bf16 %v266, %v264
  %v301 = vpack.c.bf16 %v269, %v267
  %v302 = vpack.c.bf16 %v270, %v268
  %v303 = vld [vmem:[%s1] sm:$0xf]
  %v304 = vld [vmem:[%s1 + $0x4] sm:$0xf]
  %v305 = vld [vmem:[%s1 + $0x8] sm:$0xf]
  %v306 = vld [vmem:[%s1 + $0xc] sm:$0xf]
  %v307 = vld [vmem:[%s1 + $0x10] sm:$0xf]
  %v308 = vld [vmem:[%s1 + $0x14] sm:$0xf]
  %v309 = vld [vmem:[%s1 + $0x18] sm:$0xf]
  %v310 = vld [vmem:[%s1 + $0x1c] sm:$0xf]
  %v311 = vld [vmem:[%s1 + $0x20] sm:$0xf]
  %v312 = vld [vmem:[%s1 + $0x24] sm:$0xf]
  %v313 = vld [vmem:[%s1 + $0x28] sm:$0xf]
  %v314 = vld [vmem:[%s1 + $0x2c] sm:$0xf]
  %v315 = vld [vmem:[%s1 + $0x30] sm:$0xf]
  %v316 = vld [vmem:[%s1 + $0x34] sm:$0xf]
  %v317 = vld [vmem:[%s1 + $0x38] sm:$0xf]
  %v318 = vld [vmem:[%s1 + $0x3c] sm:$0xf]
  %v319 = vld [vmem:[%s1 + $0x40] sm:$0xf]
  %v320 = vld [vmem:[%s1 + $0x44] sm:$0xf]
  %v321 = vld [vmem:[%s1 + $0x48] sm:$0xf]
  %v322 = vld [vmem:[%s1 + $0x4c] sm:$0xf]
  %v323 = vld [vmem:[%s1 + $0x50] sm:$0xf]
  %v324 = vld [vmem:[%s1 + $0x54] sm:$0xf]
  %v325 = vld [vmem:[%s1 + $0x58] sm:$0xf]
  %v326 = vld [vmem:[%s1 + $0x5c] sm:$0xf]
  %v327 = vld [vmem:[%s1 + $0x60] sm:$0xf]
  %v328 = vld [vmem:[%s1 + $0x64] sm:$0xf]
  %v329 = vld [vmem:[%s1 + $0x68] sm:$0xf]
  %v330 = vld [vmem:[%s1 + $0x6c] sm:$0xf]
  %v331 = vld [vmem:[%s1 + $0x70] sm:$0xf]
  %v332 = vld [vmem:[%s1 + $0x74] sm:$0xf]
  %v333 = vld [vmem:[%s1 + $0x78] sm:$0xf]
  %v334 = vld [vmem:[%s1 + $0x7c] sm:$0xf]
  %v335 = vld [vmem:[%s2] sm:$0x1]
  %v337 = vperm.slane %v335, 0
  %v371 = vunpack.c.l.b16 %v303
  %v372 = vunpack.c.l.b16 %v304
  %v373 = vunpack.c.l.b16 %v305
  %v374 = vunpack.c.l.b16 %v306
  %v375 = vunpack.c.l.b16 %v307
  %v376 = vunpack.c.l.b16 %v308
  %v377 = vunpack.c.l.b16 %v309
  %v378 = vunpack.c.l.b16 %v310
  %v379 = vunpack.c.l.b16 %v311
  %v380 = vunpack.c.l.b16 %v312
  %v381 = vunpack.c.l.b16 %v313
  %v382 = vunpack.c.l.b16 %v314
  %v383 = vunpack.c.l.b16 %v315
  %v384 = vunpack.c.l.b16 %v316
  %v385 = vunpack.c.l.b16 %v317
  %v386 = vunpack.c.l.b16 %v318
  %v387 = vunpack.c.l.b16 %v319
  %v388 = vunpack.c.l.b16 %v320
  %v389 = vunpack.c.l.b16 %v321
  %v390 = vunpack.c.l.b16 %v322
  %v391 = vunpack.c.l.b16 %v323
  %v392 = vunpack.c.l.b16 %v324
  %v393 = vunpack.c.l.b16 %v325
  %v394 = vunpack.c.l.b16 %v326
  %v395 = vunpack.c.l.b16 %v327
  %v396 = vunpack.c.l.b16 %v328
  %v397 = vunpack.c.l.b16 %v329
  %v398 = vunpack.c.l.b16 %v330
  %v399 = vunpack.c.l.b16 %v331
  %v400 = vunpack.c.l.b16 %v332
  %v401 = vunpack.c.l.b16 %v333
  %v402 = vunpack.c.l.b16 %v334
  %v403 = vpack.c.b16 %v372, %v371
  %v404 = vpack.c.b16 %v374, %v373
  %v405 = vpack.c.b16 %v376, %v375
  %v406 = vpack.c.b16 %v378, %v377
  %v407 = vpack.c.b16 %v380, %v379
  %v408 = vpack.c.b16 %v382, %v381
  %v409 = vpack.c.b16 %v384, %v383
  %v410 = vpack.c.b16 %v386, %v385
  %v411 = vpack.c.b16 %v388, %v387
  %v412 = vpack.c.b16 %v390, %v389
  %v413 = vpack.c.b16 %v392, %v391
  %v414 = vpack.c.b16 %v394, %v393
  %v415 = vpack.c.b16 %v396, %v395
  %v416 = vpack.c.b16 %v398, %v397
  %v417 = vpack.c.b16 %v400, %v399
  %v418 = vpack.c.b16 %v402, %v401
  %435 = vmatpush.bf16.msra.mxu0 %v410
  %436 = vmatpush.bf16.msra.mxu0 %v409
  %437 = vmatpush.bf16.msra.mxu0 %v408
  %438 = vmatpush.bf16.msra.mxu0 %v407
  %439 = vmatpush.bf16.msra.mxu0 %v406
  %440 = vmatpush.bf16.msra.mxu0 %v405
  %441 = vmatpush.bf16.msra.mxu0 %v404
  %442 = vmatpush.bf16.msra.mxu0 %v403
  %443 = vmatmul.bf16.gmra.mxu0 %v271
  %v444 = vpop.f32.mrf.mxu0
  %v445 = vadd.f32 %v337, %v444
  %v446 = vpop.f32.mrf.mxu0
  %v447 = vadd.f32 %v337, %v446
  %448 = vmatmul.bf16.gmra.mxu0 %v273
  %v449 = vpop.f32.mrf.mxu0
  %v450 = vadd.f32 %v337, %v449
  %v451 = vpop.f32.mrf.mxu0
  %v452 = vadd.f32 %v337, %v451
  %453 = vmatmul.bf16.gmra.mxu0 %v275
  %v454 = vpop.f32.mrf.mxu0
  %v455 = vadd.f32 %v337, %v454
  %v456 = vpop.f32.mrf.mxu0
  %v457 = vadd.f32 %v337, %v456
  %458 = vmatmul.bf16.gmra.mxu0 %v277
  %v459 = vpop.f32.mrf.mxu0
  %v460 = vadd.f32 %v337, %v459
  %v461 = vpop.f32.mrf.mxu0
  %v462 = vadd.f32 %v337, %v461
  %463 = vmatmul.bf16.gmra.mxu0 %v279
  %v464 = vpop.f32.mrf.mxu0
  %v465 = vadd.f32 %v337, %v464
  %v466 = vpop.f32.mrf.mxu0
  %v467 = vadd.f32 %v337, %v466
  %468 = vmatmul.bf16.gmra.mxu0 %v281
  %v469 = vpop.f32.mrf.mxu0
  %v470 = vadd.f32 %v337, %v469
  %v471 = vpop.f32.mrf.mxu0
  %v472 = vadd.f32 %v337, %v471
  %473 = vmatmul.bf16.gmra.mxu0 %v283
  %v474 = vpop.f32.mrf.mxu0
  %v475 = vadd.f32 %v337, %v474
  %v476 = vpop.f32.mrf.mxu0
  %v477 = vadd.f32 %v337, %v476
  %478 = vmatmul.bf16.gmra.mxu0 %v285
  %v479 = vpop.f32.mrf.mxu0
  %v480 = vadd.f32 %v337, %v479
  %v481 = vpop.f32.mrf.mxu0
  %v482 = vadd.f32 %v337, %v481
  %483 = vmatmul.bf16.gmra.mxu0 %v287
  %v484 = vpop.f32.mrf.mxu0
  %v485 = vadd.f32 %v337, %v484
  %v486 = vpop.f32.mrf.mxu0
  %v487 = vadd.f32 %v337, %v486
  %488 = vmatmul.bf16.gmra.mxu0 %v289
  %v489 = vpop.f32.mrf.mxu0
  %v490 = vadd.f32 %v337, %v489
  %v491 = vpop.f32.mrf.mxu0
  %v492 = vadd.f32 %v337, %v491
  %493 = vmatmul.bf16.gmra.mxu0 %v291
  %v494 = vpop.f32.mrf.mxu0
  %v495 = vadd.f32 %v337, %v494
  %v496 = vpop.f32.mrf.mxu0
  %v497 = vadd.f32 %v337, %v496
  %498 = vmatmul.bf16.gmra.mxu0 %v293
  %v499 = vpop.f32.mrf.mxu0
  %v500 = vadd.f32 %v337, %v499
  %v501 = vpop.f32.mrf.mxu0
  %v502 = vadd.f32 %v337, %v501
  %503 = vmatmul.bf16.gmra.mxu0 %v295
  %v504 = vpop.f32.mrf.mxu0
  %v505 = vadd.f32 %v337, %v504
  %v506 = vpop.f32.mrf.mxu0
  %v507 = vadd.f32 %v337, %v506
  %508 = vmatmul.bf16.gmra.mxu0 %v297
  %v509 = vpop.f32.mrf.mxu0
  %v510 = vadd.f32 %v337, %v509
  %v511 = vpop.f32.mrf.mxu0
  %v512 = vadd.f32 %v337, %v511
  %513 = vmatmul.bf16.gmra.mxu0 %v299
  %v514 = vpop.f32.mrf.mxu0
  %v515 = vadd.f32 %v337, %v514
  %v516 = vpop.f32.mrf.mxu0
  %v517 = vadd.f32 %v337, %v516
  %518 = vmatmul.bf16.gmra.mxu0 %v301
  %v519 = vpop.f32.mrf.mxu0
  %v520 = vadd.f32 %v337, %v519
  %v521 = vpop.f32.mrf.mxu0
  %v522 = vadd.f32 %v337, %v521
  %523 = vdwg.mxu0
  %524 = vmatpush.bf16.msra.mxu0 %v418
  %525 = vmatpush.bf16.msra.mxu0 %v417
  %526 = vmatpush.bf16.msra.mxu0 %v416
  %527 = vmatpush.bf16.msra.mxu0 %v415
  %528 = vmatpush.bf16.msra.mxu0 %v414
  %529 = vmatpush.bf16.msra.mxu0 %v413
  %530 = vmatpush.bf16.msra.mxu0 %v412
  %531 = vmatpush.bf16.msra.mxu0 %v411
  %532 = vmatmul.bf16.gmra.mxu0 %v272
  %v533 = vpop.f32.mrf.mxu0
  %v534 = vadd.f32 %v445, %v533
  %v535 = vpop.f32.mrf.mxu0
  %v536 = vadd.f32 %v447, %v535
  %537 = vmatmul.bf16.gmra.mxu0 %v274
  %v538 = vpop.f32.mrf.mxu0
  %v539 = vadd.f32 %v450, %v538
  %v540 = vpop.f32.mrf.mxu0
  %v541 = vadd.f32 %v452, %v540
  %542 = vmatmul.bf16.gmra.mxu0 %v276
  %v543 = vpop.f32.mrf.mxu0
  %v544 = vadd.f32 %v455, %v543
  %v545 = vpop.f32.mrf.mxu0
  %v546 = vadd.f32 %v457, %v545
  %547 = vmatmul.bf16.gmra.mxu0 %v278
  %v548 = vpop.f32.mrf.mxu0
  %v549 = vadd.f32 %v460, %v548
  %v550 = vpop.f32.mrf.mxu0
  %v551 = vadd.f32 %v462, %v550
  %552 = vmatmul.bf16.gmra.mxu0 %v280
  %v553 = vpop.f32.mrf.mxu0
  %v554 = vadd.f32 %v465, %v553
  %v555 = vpop.f32.mrf.mxu0
  %v556 = vadd.f32 %v467, %v555
  %557 = vmatmul.bf16.gmra.mxu0 %v282
  %v558 = vpop.f32.mrf.mxu0
  %v559 = vadd.f32 %v470, %v558
  %v560 = vpop.f32.mrf.mxu0
  %v561 = vadd.f32 %v472, %v560
  %562 = vmatmul.bf16.gmra.mxu0 %v284
  %v563 = vpop.f32.mrf.mxu0
  %v564 = vadd.f32 %v475, %v563
  %v565 = vpop.f32.mrf.mxu0
  %v566 = vadd.f32 %v477, %v565
  %567 = vmatmul.bf16.gmra.mxu0 %v286
  %v568 = vpop.f32.mrf.mxu0
  %v569 = vadd.f32 %v480, %v568
  %v570 = vpop.f32.mrf.mxu0
  %v571 = vadd.f32 %v482, %v570
  %572 = vmatmul.bf16.gmra.mxu0 %v288
  %v573 = vpop.f32.mrf.mxu0
  %v574 = vadd.f32 %v485, %v573
  %v575 = vpop.f32.mrf.mxu0
  %v576 = vadd.f32 %v487, %v575
  %577 = vmatmul.bf16.gmra.mxu0 %v290
  %v578 = vpop.f32.mrf.mxu0
  %v579 = vadd.f32 %v490, %v578
  %v580 = vpop.f32.mrf.mxu0
  %v581 = vadd.f32 %v492, %v580
  %582 = vmatmul.bf16.gmra.mxu0 %v292
  %v583 = vpop.f32.mrf.mxu0
  %v584 = vadd.f32 %v495, %v583
  %v585 = vpop.f32.mrf.mxu0
  %v586 = vadd.f32 %v497, %v585
  %587 = vmatmul.bf16.gmra.mxu0 %v294
  %v588 = vpop.f32.mrf.mxu0
  %v589 = vadd.f32 %v500, %v588
  %v590 = vpop.f32.mrf.mxu0
  %v591 = vadd.f32 %v502, %v590
  %592 = vmatmul.bf16.gmra.mxu0 %v296
  %v593 = vpop.f32.mrf.mxu0
  %v594 = vadd.f32 %v505, %v593
  %v595 = vpop.f32.mrf.mxu0
  %v596 = vadd.f32 %v507, %v595
  %597 = vmatmul.bf16.gmra.mxu0 %v298
  %v598 = vpop.f32.mrf.mxu0
  %v599 = vadd.f32 %v510, %v598
  %v600 = vpop.f32.mrf.mxu0
  %v601 = vadd.f32 %v512, %v600
  %602 = vmatmul.bf16.gmra.mxu0 %v300
  %v603 = vpop.f32.mrf.mxu0
  %v604 = vadd.f32 %v515, %v603
  %v605 = vpop.f32.mrf.mxu0
  %v606 = vadd.f32 %v517, %v605
  %607 = vmatmul.bf16.gmra.mxu0 %v302
  %v608 = vpop.f32.mrf.mxu0
  %v609 = vadd.f32 %v520, %v608
  %v610 = vpop.f32.mrf.mxu0
  %v611 = vadd.f32 %v522, %v610
  %612 = vdwg.mxu0
  %v613 = vmax.f32 %v534, 0.0
  %v614 = vmax.f32 %v536, 0.0
  %v615 = vmax.f32 %v539, 0.0
  %v616 = vmax.f32 %v541, 0.0
  %v617 = vmax.f32 %v544, 0.0
  %v618 = vmax.f32 %v546, 0.0
  %v619 = vmax.f32 %v549, 0.0
  %v620 = vmax.f32 %v551, 0.0
  %v621 = vmax.f32 %v554, 0.0
  %v622 = vmax.f32 %v556, 0.0
  %v623 = vmax.f32 %v559, 0.0
  %v624 = vmax.f32 %v561, 0.0
  %v625 = vmax.f32 %v564, 0.0
  %v626 = vmax.f32 %v566, 0.0
  %v627 = vmax.f32 %v569, 0.0
  %v628 = vmax.f32 %v571, 0.0
  %v629 = vmax.f32 %v574, 0.0
  %v630 = vmax.f32 %v576, 0.0
  %v631 = vmax.f32 %v579, 0.0
  %v632 = vmax.f32 %v581, 0.0
  %v633 = vmax.f32 %v584, 0.0
  %v634 = vmax.f32 %v586, 0.0
  %v635 = vmax.f32 %v589, 0.0
  %v636 = vmax.f32 %v591, 0.0
  %v637 = vmax.f32 %v594, 0.0
  %v638 = vmax.f32 %v596, 0.0
  %v639 = vmax.f32 %v599, 0.0
  %v640 = vmax.f32 %v601, 0.0
  %v641 = vmax.f32 %v604, 0.0
  %v642 = vmax.f32 %v606, 0.0
  %v643 = vmax.f32 %v609, 0.0
  %v644 = vmax.f32 %v611, 0.0
  %645 = vst [vmem:[%s3] sm:$0xff] %v613
  %646 = vst [vmem:[%s3 + $0x8] sm:$0xff] %v614
  %647 = vst [vmem:[%s3 + $0x10] sm:$0xff] %v615
  %648 = vst [vmem:[%s3 + $0x18] sm:$0xff] %v616
  %649 = vst [vmem:[%s3 + $0x20] sm:$0xff] %v617
  %650 = vst [vmem:[%s3 + $0x28] sm:$0xff] %v618
  %651 = vst [vmem:[%s3 + $0x30] sm:$0xff] %v619
  %652 = vst [vmem:[%s3 + $0x38] sm:$0xff] %v620
  %653 = vst [vmem:[%s3 + $0x40] sm:$0xff] %v621
  %654 = vst [vmem:[%s3 + $0x48] sm:$0xff] %v622
  %655 = vst [vmem:[%s3 + $0x50] sm:$0xff] %v623
  %656 = vst [vmem:[%s3 + $0x58] sm:$0xff] %v624
  %657 = vst [vmem:[%s3 + $0x60] sm:$0xff] %v625
  %658 = vst [vmem:[%s3 + $0x68] sm:$0xff] %v626
  %659 = vst [vmem:[%s3 + $0x70] sm:$0xff] %v627
  %660 = vst [vmem:[%s3 + $0x78] sm:$0xff] %v628
  %661 = vst [vmem:[%s3 + $0x80] sm:$0xff] %v629
  %662 = vst [vmem:[%s3 + $0x88] sm:$0xff] %v630
  %663 = vst [vmem:[%s3 + $0x90] sm:$0xff] %v631
  %664 = vst [vmem:[%s3 + $0x98] sm:$0xff] %v632
  %665 = vst [vmem:[%s3 + $0xa0] sm:$0xff] %v633
  %666 = vst [vmem:[%s3 + $0xa8] sm:$0xff] %v634
  %667 = vst [vmem:[%s3 + $0xb0] sm:$0xff] %v635
  %668 = vst [vmem:[%s3 + $0xb8] sm:$0xff] %v636
  %669 = vst [vmem:[%s3 + $0xc0] sm:$0xff] %v637
  %670 = vst [vmem:[%s3 + $0xc8] sm:$0xff] %v638
  %671 = vst [vmem:[%s3 + $0xd0] sm:$0xff] %v639
  %672 = vst [vmem:[%s3 + $0xd8] sm:$0xff] %v640
  %673 = vst [vmem:[%s3 + $0xe0] sm:$0xff] %v641
  %674 = vst [vmem:[%s3 + $0xe8] sm:$0xff] %v642
  %675 = vst [vmem:[%s3 + $0xf0] sm:$0xff] %v643
  %676 = vst [vmem:[%s3 + $0xf8] sm:$0xff] %v644
  // Predicated region
  $region14: #{_lambda_.5} parent=0 // pred_check
    _
  $region15: #{_lambda_.5} parent=0 // pred_check_branch
    %678 = sbr.rel (0) target = $region17
  $region16: #{_lambda_.5} parent=0 // pred_region
    _
  $region17: #{_lambda_.5} parent=0 // pred_fallthru
    _
  // Predicated region
  $region18: #{_lambda_.5} parent=0 // pred_check
    _
  $region19: #{_lambda_.5} parent=0 // pred_check_branch
    %680 = sbr.rel (0) target = $region21
  $region20: #{_lambda_.5} parent=0 // pred_region
    _
  $region21: #{_lambda_.5} parent=0 // pred_fallthru
    _

// kernel: squeeze.0
$region0: #{squeeze.0}
  %s0 = inlined_call_operand.vmem [shape: f32[2,1,32,4,4], index: 0, kind: input, shape index: {}]
  %s1 = inlined_call_operand.vmem [shape: f32[2,1,512], index: 1, kind: output, shape index: {}]
  $region1: #{squeeze.0} parent=0
    #allocation0 [shape = 'u8[32768]{0}', space=vmem, size = 0x8000, scoped, tag = 'scoped mem for output reshape']
    #allocation1 [shape = 'u8[262144]{0}', space=vmem, size = 0x40000, scoped, tag = 'scoped mem for input reshape']
    %s3 = ssub.s32 16, 1
    %s4 = scalar_lea.vmem %s0, 252
    %v5 = vld [vmem:[%s4] sm:%s3]
    %s6 = scalar_lea.vmem [#allocation1], 504
    %7 = vst [vmem:[%s6] sm:%s3] %v5
    %s8 = scalar_lea.vmem %s0, 248
    %v9 = vld [vmem:[%s8] sm:%s3]
    %s10 = scalar_lea.vmem [#allocation1], 496
    %11 = vst [vmem:[%s10] sm:%s3] %v9
    %s12 = scalar_lea.vmem %s0, 244
    %v13 = vld [vmem:[%s12] sm:%s3]
    %s14 = scalar_lea.vmem [#allocation1], 488
    %15 = vst [vmem:[%s14] sm:%s3] %v13
    %s16 = scalar_lea.vmem %s0, 240
    %v17 = vld [vmem:[%s16] sm:%s3]
    %s18 = scalar_lea.vmem [#allocation1], 480
    %19 = vst [vmem:[%s18] sm:%s3] %v17
    %s20 = scalar_lea.vmem %s0, 236
    %v21 = vld [vmem:[%s20] sm:%s3]
    %s22 = scalar_lea.vmem [#allocation1], 472
    %23 = vst [vmem:[%s22] sm:%s3] %v21
    %s24 = scalar_lea.vmem %s0, 232
    %v25 = vld [vmem:[%s24] sm:%s3]
    %s26 = scalar_lea.vmem [#allocation1], 464
    %27 = vst [vmem:[%s26] sm:%s3] %v25
    %s28 = scalar_lea.vmem %s0, 228
    %v29 = vld [vmem:[%s28] sm:%s3]
    %s30 = scalar_lea.vmem [#allocation1], 456
    %31 = vst [vmem:[%s30] sm:%s3] %v29
    %s32 = scalar_lea.vmem %s0, 224
    %v33 = vld [vmem:[%s32] sm:%s3]
    %s34 = scalar_lea.vmem [#allocation1], 448
    %35 = vst [vmem:[%s34] sm:%s3] %v33
    %s36 = scalar_lea.vmem %s0, 220
    %v37 = vld [vmem:[%s36] sm:%s3]
    %s38 = scalar_lea.vmem [#allocation1], 440
    %39 = vst [vmem:[%s38] sm:%s3] %v37
    %s40 = scalar_lea.vmem %s0, 216
    %v41 = vld [vmem:[%s40] sm:%s3]
    %s42 = scalar_lea.vmem [#allocation1], 432
    %43 = vst [vmem:[%s42] sm:%s3] %v41
    %s44 = scalar_lea.vmem %s0, 212
    %v45 = vld [vmem:[%s44] sm:%s3]
    %s46 = scalar_lea.vmem [#allocation1], 424
    %47 = vst [vmem:[%s46] sm:%s3] %v45
    %s48 = scalar_lea.vmem %s0, 208
    %v49 = vld [vmem:[%s48] sm:%s3]
    %s50 = scalar_lea.vmem [#allocation1], 416
    %51 = vst [vmem:[%s50] sm:%s3] %v49
    %s52 = scalar_lea.vmem %s0, 204
    %v53 = vld [vmem:[%s52] sm:%s3]
    %s54 = scalar_lea.vmem [#allocation1], 408
    %55 = vst [vmem:[%s54] sm:%s3] %v53
    %s56 = scalar_lea.vmem %s0, 200
    %v57 = vld [vmem:[%s56] sm:%s3]
    %s58 = scalar_lea.vmem [#allocation1], 400
    %59 = vst [vmem:[%s58] sm:%s3] %v57
    %s60 = scalar_lea.vmem %s0, 196
    %v61 = vld [vmem:[%s60] sm:%s3]
    %s62 = scalar_lea.vmem [#allocation1], 392
    %63 = vst [vmem:[%s62] sm:%s3] %v61
    %s64 = scalar_lea.vmem %s0, 192
    %v65 = vld [vmem:[%s64] sm:%s3]
    %s66 = scalar_lea.vmem [#allocation1], 384
    %67 = vst [vmem:[%s66] sm:%s3] %v65
    %s68 = scalar_lea.vmem %s0, 188
    %v69 = vld [vmem:[%s68] sm:%s3]
    %s70 = scalar_lea.vmem [#allocation1], 376
    %71 = vst [vmem:[%s70] sm:%s3] %v69
    %s72 = scalar_lea.vmem %s0, 184
    %v73 = vld [vmem:[%s72] sm:%s3]
    %s74 = scalar_lea.vmem [#allocation1], 368
    %75 = vst [vmem:[%s74] sm:%s3] %v73
    %s76 = scalar_lea.vmem %s0, 180
    %v77 = vld [vmem:[%s76] sm:%s3]
    %s78 = scalar_lea.vmem [#allocation1], 360
    %79 = vst [vmem:[%s78] sm:%s3] %v77
    %s80 = scalar_lea.vmem %s0, 176
    %v81 = vld [vmem:[%s80] sm:%s3]
    %s82 = scalar_lea.vmem [#allocation1], 352
    %83 = vst [vmem:[%s82] sm:%s3] %v81
    %s84 = scalar_lea.vmem %s0, 172
    %v85 = vld [vmem:[%s84] sm:%s3]
    %s86 = scalar_lea.vmem [#allocation1], 344
    %87 = vst [vmem:[%s86] sm:%s3] %v85
    %s88 = scalar_lea.vmem %s0, 168
    %v89 = vld [vmem:[%s88] sm:%s3]
    %s90 = scalar_lea.vmem [#allocation1], 336
    %91 = vst [vmem:[%s90] sm:%s3] %v89
    %s92 = scalar_lea.vmem %s0, 164
    %v93 = vld [vmem:[%s92] sm:%s3]
    %s94 = scalar_lea.vmem [#allocation1], 328
    %95 = vst [vmem:[%s94] sm:%s3] %v93
    %s96 = scalar_lea.vmem %s0, 160
    %v97 = vld [vmem:[%s96] sm:%s3]
    %s98 = scalar_lea.vmem [#allocation1], 320
    %99 = vst [vmem:[%s98] sm:%s3] %v97
    %s100 = scalar_lea.vmem %s0, 156
    %v101 = vld [vmem:[%s100] sm:%s3]
    %s102 = scalar_lea.vmem [#allocation1], 312
    %103 = vst [vmem:[%s102] sm:%s3] %v101
    %s104 = scalar_lea.vmem %s0, 152
    %v105 = vld [vmem:[%s104] sm:%s3]
    %s106 = scalar_lea.vmem [#allocation1], 304
    %107 = vst [vmem:[%s106] sm:%s3] %v105
    %s108 = scalar_lea.vmem %s0, 148
    %v109 = vld [vmem:[%s108] sm:%s3]
    %s110 = scalar_lea.vmem [#allocation1], 296
    %111 = vst [vmem:[%s110] sm:%s3] %v109
    %s112 = scalar_lea.vmem %s0, 144
    %v113 = vld [vmem:[%s112] sm:%s3]
    %s114 = scalar_lea.vmem [#allocation1], 288
    %115 = vst [vmem:[%s114] sm:%s3] %v113
    %s116 = scalar_lea.vmem %s0, 140
    %v117 = vld [vmem:[%s116] sm:%s3]
    %s118 = scalar_lea.vmem [#allocation1], 280
    %119 = vst [vmem:[%s118] sm:%s3] %v117
    %s120 = scalar_lea.vmem %s0, 136
    %v121 = vld [vmem:[%s120] sm:%s3]
    %s122 = scalar_lea.vmem [#allocation1], 272
    %123 = vst [vmem:[%s122] sm:%s3] %v121
    %s124 = scalar_lea.vmem %s0, 132
    %v125 = vld [vmem:[%s124] sm:%s3]
    %s126 = scalar_lea.vmem [#allocation1], 264
    %127 = vst [vmem:[%s126] sm:%s3] %v125
    %s128 = scalar_lea.vmem %s0, 128
    %v129 = vld [vmem:[%s128] sm:%s3]
    %s130 = scalar_lea.vmem [#allocation1], 256
    %131 = vst [vmem:[%s130] sm:%s3] %v129
    %s132 = scalar_lea.vmem %s0, 124
    %v133 = vld [vmem:[%s132] sm:%s3]
    %s134 = scalar_lea.vmem [#allocation1], 248
    %135 = vst [vmem:[%s134] sm:%s3] %v133
    %s136 = scalar_lea.vmem %s0, 120
    %v137 = vld [vmem:[%s136] sm:%s3]
    %s138 = scalar_lea.vmem [#allocation1], 240
    %139 = vst [vmem:[%s138] sm:%s3] %v137
    %s140 = scalar_lea.vmem %s0, 116
    %v141 = vld [vmem:[%s140] sm:%s3]
    %s142 = scalar_lea.vmem [#allocation1], 232
    %143 = vst [vmem:[%s142] sm:%s3] %v141
    %s144 = scalar_lea.vmem %s0, 112
    %v145 = vld [vmem:[%s144] sm:%s3]
    %s146 = scalar_lea.vmem [#allocation1], 224
    %147 = vst [vmem:[%s146] sm:%s3] %v145
    %s148 = scalar_lea.vmem %s0, 108
    %v149 = vld [vmem:[%s148] sm:%s3]
    %s150 = scalar_lea.vmem [#allocation1], 216
    %151 = vst [vmem:[%s150] sm:%s3] %v149
    %s152 = scalar_lea.vmem %s0, 104
    %v153 = vld [vmem:[%s152] sm:%s3]
    %s154 = scalar_lea.vmem [#allocation1], 208
    %155 = vst [vmem:[%s154] sm:%s3] %v153
    %s156 = scalar_lea.vmem %s0, 100
    %v157 = vld [vmem:[%s156] sm:%s3]
    %s158 = scalar_lea.vmem [#allocation1], 200
    %159 = vst [vmem:[%s158] sm:%s3] %v157
    %s160 = scalar_lea.vmem %s0, 96
    %v161 = vld [vmem:[%s160] sm:%s3]
    %s162 = scalar_lea.vmem [#allocation1], 192
    %163 = vst [vmem:[%s162] sm:%s3] %v161
    %s164 = scalar_lea.vmem %s0, 92
    %v165 = vld [vmem:[%s164] sm:%s3]
    %s166 = scalar_lea.vmem [#allocation1], 184
    %167 = vst [vmem:[%s166] sm:%s3] %v165
    %s168 = scalar_lea.vmem %s0, 88
    %v169 = vld [vmem:[%s168] sm:%s3]
    %s170 = scalar_lea.vmem [#allocation1], 176
    %171 = vst [vmem:[%s170] sm:%s3] %v169
    %s172 = scalar_lea.vmem %s0, 84
    %v173 = vld [vmem:[%s172] sm:%s3]
    %s174 = scalar_lea.vmem [#allocation1], 168
    %175 = vst [vmem:[%s174] sm:%s3] %v173
    %s176 = scalar_lea.vmem %s0, 80
    %v177 = vld [vmem:[%s176] sm:%s3]
    %s178 = scalar_lea.vmem [#allocation1], 160
    %179 = vst [vmem:[%s178] sm:%s3] %v177
    %s180 = scalar_lea.vmem %s0, 76
    %v181 = vld [vmem:[%s180] sm:%s3]
    %s182 = scalar_lea.vmem [#allocation1], 152
    %183 = vst [vmem:[%s182] sm:%s3] %v181
    %s184 = scalar_lea.vmem %s0, 72
    %v185 = vld [vmem:[%s184] sm:%s3]
    %s186 = scalar_lea.vmem [#allocation1], 144
    %187 = vst [vmem:[%s186] sm:%s3] %v185
    %s188 = scalar_lea.vmem %s0, 68
    %v189 = vld [vmem:[%s188] sm:%s3]
    %s190 = scalar_lea.vmem [#allocation1], 136
    %191 = vst [vmem:[%s190] sm:%s3] %v189
    %s192 = scalar_lea.vmem %s0, 64
    %v193 = vld [vmem:[%s192] sm:%s3]
    %s194 = scalar_lea.vmem [#allocation1], 128
    %195 = vst [vmem:[%s194] sm:%s3] %v193
    %s196 = scalar_lea.vmem %s0, 60
    %v197 = vld [vmem:[%s196] sm:%s3]
    %s198 = scalar_lea.vmem [#allocation1], 120
    %199 = vst [vmem:[%s198] sm:%s3] %v197
    %s200 = scalar_lea.vmem %s0, 56
    %v201 = vld [vmem:[%s200] sm:%s3]
    %s202 = scalar_lea.vmem [#allocation1], 112
    %203 = vst [vmem:[%s202] sm:%s3] %v201
    %s204 = scalar_lea.vmem %s0, 52
    %v205 = vld [vmem:[%s204] sm:%s3]
    %s206 = scalar_lea.vmem [#allocation1], 104
    %207 = vst [vmem:[%s206] sm:%s3] %v205
    %s208 = scalar_lea.vmem %s0, 48
    %v209 = vld [vmem:[%s208] sm:%s3]
    %s210 = scalar_lea.vmem [#allocation1], 96
    %211 = vst [vmem:[%s210] sm:%s3] %v209
    %s212 = scalar_lea.vmem %s0, 44
    %v213 = vld [vmem:[%s212] sm:%s3]
    %s214 = scalar_lea.vmem [#allocation1], 88
    %215 = vst [vmem:[%s214] sm:%s3] %v213
    %s216 = scalar_lea.vmem %s0, 40
    %v217 = vld [vmem:[%s216] sm:%s3]
    %s218 = scalar_lea.vmem [#allocation1], 80
    %219 = vst [vmem:[%s218] sm:%s3] %v217
    %s220 = scalar_lea.vmem %s0, 36
    %v221 = vld [vmem:[%s220] sm:%s3]
    %s222 = scalar_lea.vmem [#allocation1], 72
    %223 = vst [vmem:[%s222] sm:%s3] %v221
    %s224 = scalar_lea.vmem %s0, 32
    %v225 = vld [vmem:[%s224] sm:%s3]
    %s226 = scalar_lea.vmem [#allocation1], 64
    %227 = vst [vmem:[%s226] sm:%s3] %v225
    %s228 = scalar_lea.vmem %s0, 28
    %v229 = vld [vmem:[%s228] sm:%s3]
    %s230 = scalar_lea.vmem [#allocation1], 56
    %231 = vst [vmem:[%s230] sm:%s3] %v229
    %s232 = scalar_lea.vmem %s0, 24
    %v233 = vld [vmem:[%s232] sm:%s3]
    %s234 = scalar_lea.vmem [#allocation1], 48
    %235 = vst [vmem:[%s234] sm:%s3] %v233
    %s236 = scalar_lea.vmem %s0, 20
    %v237 = vld [vmem:[%s236] sm:%s3]
    %s238 = scalar_lea.vmem [#allocation1], 40
    %239 = vst [vmem:[%s238] sm:%s3] %v237
    %s240 = scalar_lea.vmem %s0, 16
    %v241 = vld [vmem:[%s240] sm:%s3]
    %s242 = scalar_lea.vmem [#allocation1], 32
    %243 = vst [vmem:[%s242] sm:%s3] %v241
    %s244 = scalar_lea.vmem %s0, 12
    %v245 = vld [vmem:[%s244] sm:%s3]
    %s246 = scalar_lea.vmem [#allocation1], 24
    %247 = vst [vmem:[%s246] sm:%s3] %v245
    %s248 = scalar_lea.vmem %s0, 8
    %v249 = vld [vmem:[%s248] sm:%s3]
    %s250 = scalar_lea.vmem [#allocation1], 16
    %251 = vst [vmem:[%s250] sm:%s3] %v249
    %s252 = scalar_lea.vmem %s0, 4
    %v253 = vld [vmem:[%s252] sm:%s3]
    %s254 = scalar_lea.vmem [#allocation1], 8
    %255 = vst [vmem:[%s254] sm:%s3] %v253
    %v256 = vld [vmem:[%s0] sm:%s3]
    %257 = vst [vmem:[#allocation1] sm:%s3] %v256
    %v258 = vld [vmem:[#allocation1] sm:$0x1]
    %s259 = scalar_lea.vmem [#allocation1], 63
    %v260 = vld [vmem:[%s259] sm:$0x2]
    %vm261 = vcmask 1041409
    %v262 = vsel %vm261, %v260, %v258
    %s263 = scalar_lea.vmem [#allocation1], 126
    %v264 = vld [vmem:[%s263] sm:$0x4]
    %vm265 = vcmask 1042434
    %v266 = vsel %vm265, %v264, %v262
    %s267 = scalar_lea.vmem [#allocation1], 189
    %v268 = vld [vmem:[%s267] sm:$0x8]
    %vm269 = vcmask 1043459
    %v270 = vsel %vm269, %v268, %v266
    %s271 = scalar_lea.vmem [#allocation1], 252
    %v272 = vld [vmem:[%s271] sm:$0x10]
    %vm273 = vcmask 1044484
    %v274 = vsel %vm273, %v272, %v270
    %s275 = scalar_lea.vmem [#allocation1], 315
    %v276 = vld [vmem:[%s275] sm:$0x20]
    %vm277 = vcmask 1045509
    %v278 = vsel %vm277, %v276, %v274
    %s279 = scalar_lea.vmem [#allocation1], 378
    %v280 = vld [vmem:[%s279] sm:$0x40]
    %vm281 = vcmask 1046534
    %v282 = vsel %vm281, %v280, %v278
    %s283 = scalar_lea.vmem [#allocation1], 441
    %v284 = vld [vmem:[%s283] sm:$0x80]
    %vm285 = vcmask 1047559
    %v286 = vsel %vm285, %v284, %v282
    %vm287 = vcmask 31744
    %288 = vst.msk [vmem:[#allocation0] ss:$8 sm:$0xf] %vm287, %v286
    %289 = vst.msk [vmem:[#allocation0] ss:$8 sm:$0xf0] %vm287, %v286
    %s290 = scalar_lea.vmem [#allocation1], 59
    %v291 = vld [vmem:[%s290] sm:$0x1]
    %s292 = scalar_lea.vmem [#allocation1], 122
    %v293 = vld [vmem:[%s292] sm:$0x2]
    %vm294 = vcmask 1041409
    %v295 = vsel %vm294, %v293, %v291
    %s296 = scalar_lea.vmem [#allocation1], 185
    %v297 = vld [vmem:[%s296] sm:$0x4]
    %vm298 = vcmask 1042434
    %v299 = vsel %vm298, %v297, %v295
    %s300 = scalar_lea.vmem [#allocation1], 248
    %v301 = vld [vmem:[%s300] sm:$0x8]
    %vm302 = vcmask 1043459
    %v303 = vsel %vm302, %v301, %v299
    %s304 = scalar_lea.vmem [#allocation1], 311
    %v305 = vld [vmem:[%s304] sm:$0x10]
    %vm306 = vcmask 1044484
    %v307 = vsel %vm306, %v305, %v303
    %s308 = scalar_lea.vmem [#allocation1], 374
    %v309 = vld [vmem:[%s308] sm:$0x20]
    %vm310 = vcmask 1045509
    %v311 = vsel %vm310, %v309, %v307
    %s312 = scalar_lea.vmem [#allocation1], 437
    %v313 = vld [vmem:[%s312] sm:$0x40]
    %vm314 = vcmask 1046534
    %v315 = vsel %vm314, %v313, %v311
    %s316 = scalar_lea.vmem [#allocation1], 500
    %v317 = vld [vmem:[%s316] sm:$0x80]
    %vm318 = vcmask 1047559
    %v319 = vsel %vm318, %v317, %v315
    %320 = vrot.lane.b32.xlu0 %v319, 124
    %v321 = vpop.permute.xlu0 %320
    %vm322 = vcmask 1048544
    %323 = vst.msk [vmem:[#allocation0] ss:$8 sm:$0xf] %vm322, %v321
    %324 = vst.msk [vmem:[#allocation0] ss:$8 sm:$0xf0] %vm322, %v321
    %s325 = scalar_lea.vmem [#allocation1], 58
    %v326 = vld [vmem:[%s325] sm:$0x1]
    %s327 = scalar_lea.vmem [#allocation1], 121
    %v328 = vld [vmem:[%s327] sm:$0x2]
    %vm329 = vcmask 1041409
    %v330 = vsel %vm329, %v328, %v326
    %s331 = scalar_lea.vmem [#allocation1], 184
    %v332 = vld [vmem:[%s331] sm:$0x4]
    %vm333 = vcmask 1042434
    %v334 = vsel %vm333, %v332, %v330
    %s335 = scalar_lea.vmem [#allocation1], 247
    %v336 = vld [vmem:[%s335] sm:$0x8]
    %vm337 = vcmask 1043459
    %v338 = vsel %vm337, %v336, %v334
    %s339 = scalar_lea.vmem [#allocation1], 310
    %v340 = vld [vmem:[%s339] sm:$0x10]
    %vm341 = vcmask 1044484
    %v342 = vsel %vm341, %v340, %v338
    %s343 = scalar_lea.vmem [#allocation1], 373
    %v344 = vld [vmem:[%s343] sm:$0x20]
    %vm345 = vcmask 1045509
    %v346 = vsel %vm345, %v344, %v342
    %s347 = scalar_lea.vmem [#allocation1], 436
    %v348 = vld [vmem:[%s347] sm:$0x40]
    %vm349 = vcmask 1046534
    %v350 = vsel %vm349, %v348, %v346
    %s351 = scalar_lea.vmem [#allocation1], 499
    %v352 = vld [vmem:[%s351] sm:$0x80]
    %vm353 = vcmask 1047559
    %v354 = vsel %vm353, %v352, %v350
    %355 = vrot.lane.b32.xlu0 %v354, 120
    %v356 = vpop.permute.xlu0 %355
    %vm357 = vcmask 1015744
    %358 = vst.msk [vmem:[#allocation0] ss:$8 sm:$0xf] %vm357, %v356
    %359 = vst.msk [vmem:[#allocation0] ss:$8 sm:$0xf0] %vm357, %v356
    %s360 = scalar_lea.vmem [#allocation1], 57
    %v361 = vld [vmem:[%s360] sm:$0x1]
    %s362 = scalar_lea.vmem [#allocation1], 120
    %v363 = vld [vmem:[%s362] sm:$0x2]
    %vm364 = vcmask 1041409
    %v365 = vsel %vm364, %v363, %v361
    %s366 = scalar_lea.vmem [#allocation1], 183
    %v367 = vld [vmem:[%s366] sm:$0x4]
    %vm368 = vcmask 1042434
    %v369 = vsel %vm368, %v367, %v365
    %s370 = scalar_lea.vmem [#allocation1], 246
    %v371 = vld [vmem:[%s370] sm:$0x8]
    %vm372 = vcmask 1043459
    %v373 = vsel %vm372, %v371, %v369
    %s374 = scalar_lea.vmem [#allocation1], 309
    %v375 = vld [vmem:[%s374] sm:$0x10]
    %vm376 = vcmask 1044484
    %v377 = vsel %vm376, %v375, %v373
    %s378 = scalar_lea.vmem [#allocation1], 372
    %v379 = vld [vmem:[%s378] sm:$0x20]
    %vm380 = vcmask 1045509
    %v381 = vsel %vm380, %v379, %v377
    %s382 = scalar_lea.vmem [#allocation1], 435
    %v383 = vld [vmem:[%s382] sm:$0x40]
    %vm384 = vcmask 1046534
    %v385 = vsel %vm384, %v383, %v381
    %s386 = scalar_lea.vmem [#allocation1], 498
    %v387 = vld [vmem:[%s386] sm:$0x80]
    %vm388 = vcmask 1047559
    %v389 = vsel %vm388, %v387, %v385
    %390 = vrot.lane.b32.xlu0 %v389, 116
    %v391 = vpop.permute.xlu0 %390
    %vm392 = vcmask 982944
    %393 = vst.msk [vmem:[#allocation0] ss:$8 sm:$0xf] %vm392, %v391
    %394 = vst.msk [vmem:[#allocation0] ss:$8 sm:$0xf0] %vm392, %v391
    %s395 = scalar_lea.vmem [#allocation1], 56
    %v396 = vld [vmem:[%s395] sm:$0x1]
    %s397 = scalar_lea.vmem [#allocation1], 119
    %v398 = vld [vmem:[%s397] sm:$0x2]
    %vm399 = vcmask 1041409
    %v400 = vsel %vm399, %v398, %v396
    %s401 = scalar_lea.vmem [#allocation1], 182
    %v402 = vld [vmem:[%s401] sm:$0x4]
    %vm403 = vcmask 1042434
    %v404 = vsel %vm403, %v402, %v400
    %s405 = scalar_lea.vmem [#allocation1], 245
    %v406 = vld [vmem:[%s405] sm:$0x8]
    %vm407 = vcmask 1043459
    %v408 = vsel %vm407, %v406, %v404
    %s409 = scalar_lea.vmem [#allocation1], 308
    %v410 = vld [vmem:[%s409] sm:$0x10]
    %vm411 = vcmask 1044484
    %v412 = vsel %vm411, %v410, %v408
    %s413 = scalar_lea.vmem [#allocation1], 371
    %v414 = vld [vmem:[%s413] sm:$0x20]
    %vm415 = vcmask 1045509
    %v416 = vsel %vm415, %v414, %v412
    %s417 = scalar_lea.vmem [#allocation1], 434
    %v418 = vld [vmem:[%s417] sm:$0x40]
    %vm419 = vcmask 1046534
    %v420 = vsel %vm419, %v418, %v416
    %s421 = scalar_lea.vmem [#allocation1], 497
    %v422 = vld [vmem:[%s421] sm:$0x80]
    %vm423 = vcmask 1047559
    %v424 = vsel %vm423, %v422, %v420
    %425 = vrot.lane.b32.xlu0 %v424, 112
    %v426 = vpop.permute.xlu0 %425
    %vm427 = vcmask 950144
    %428 = vst.msk [vmem:[#allocation0] ss:$8 sm:$0xf] %vm427, %v426
    %429 = vst.msk [vmem:[#allocation0] ss:$8 sm:$0xf0] %vm427, %v426
    %s430 = scalar_lea.vmem [#allocation1], 51
    %v431 = vld [vmem:[%s430] sm:$0x1]
    %s432 = scalar_lea.vmem [#allocation1], 114
    %v433 = vld [vmem:[%s432] sm:$0x2]
    %vm434 = vcmask 1041409
    %v435 = vsel %vm434, %v433, %v431
    %s436 = scalar_lea.vmem [#allocation1], 177
    %v437 = vld [vmem:[%s436] sm:$0x4]
    %vm438 = vcmask 1042434
    %v439 = vsel %vm438, %v437, %v435
    %s440 = scalar_lea.vmem [#allocation1], 240
    %v441 = vld [vmem:[%s440] sm:$0x8]
    %vm442 = vcmask 1043459
    %v443 = vsel %vm442, %v441, %v439
    %s444 = scalar_lea.vmem [#allocation1], 303
    %v445 = vld [vmem:[%s444] sm:$0x10]
    %vm446 = vcmask 1044484
    %v447 = vsel %vm446, %v445, %v443
    %s448 = scalar_lea.vmem [#allocation1], 366
    %v449 = vld [vmem:[%s448] sm:$0x20]
    %vm450 = vcmask 1045509
    %v451 = vsel %vm450, %v449, %v447
    %s452 = scalar_lea.vmem [#allocation1], 429
    %v453 = vld [vmem:[%s452] sm:$0x40]
    %vm454 = vcmask 1046534
    %v455 = vsel %vm454, %v453, %v451
    %s456 = scalar_lea.vmem [#allocation1], 492
    %v457 = vld [vmem:[%s456] sm:$0x80]
    %vm458 = vcmask 1047559
    %v459 = vsel %vm458, %v457, %v455
    %460 = vrot.lane.b32.xlu0 %v459, 108
    %v461 = vpop.permute.xlu0 %460
    %vm462 = vcmask 917344
    %463 = vst.msk [vmem:[#allocation0] ss:$8 sm:$0xf] %vm462, %v461
    %464 = vst.msk [vmem:[#allocation0] ss:$8 sm:$0xf0] %vm462, %v461
    %s465 = scalar_lea.vmem [#allocation1], 50
    %v466 = vld [vmem:[%s465] sm:$0x1]
    %s467 = scalar_lea.vmem [#allocation1], 113
    %v468 = vld [vmem:[%s467] sm:$0x2]
    %vm469 = vcmask 1041409
    %v470 = vsel %vm469, %v468, %v466
    %s471 = scalar_lea.vmem [#allocation1], 176
    %v472 = vld [vmem:[%s471] sm:$0x4]
    %vm473 = vcmask 1042434
    %v474 = vsel %vm473, %v472, %v470
    %s475 = scalar_lea.vmem [#allocation1], 239
    %v476 = vld [vmem:[%s475] sm:$0x8]
    %vm477 = vcmask 1043459
    %v478 = vsel %vm477, %v476, %v474
    %s479 = scalar_lea.vmem [#allocation1], 302
    %v480 = vld [vmem:[%s479] sm:$0x10]
    %vm481 = vcmask 1044484
    %v482 = vsel %vm481, %v480, %v478
    %s483 = scalar_lea.vmem [#allocation1], 365
    %v484 = vld [vmem:[%s483] sm:$0x20]
    %vm485 = vcmask 1045509
    %v486 = vsel %vm485, %v484, %v482
    %s487 = scalar_lea.vmem [#allocation1], 428
    %v488 = vld [vmem:[%s487] sm:$0x40]
    %vm489 = vcmask 1046534
    %v490 = vsel %vm489, %v488, %v486
    %s491 = scalar_lea.vmem [#allocation1], 491
    %v492 = vld [vmem:[%s491] sm:$0x80]
    %vm493 = vcmask 1047559
    %v494 = vsel %vm493, %v492, %v490
    %495 = vrot.lane.b32.xlu0 %v494, 104
    %v496 = vpop.permute.xlu0 %495
    %vm497 = vcmask 884544
    %498 = vst.msk [vmem:[#allocation0] ss:$8 sm:$0xf] %vm497, %v496
    %499 = vst.msk [vmem:[#allocation0] ss:$8 sm:$0xf0] %vm497, %v496
    %s500 = scalar_lea.vmem [#allocation1], 49
    %v501 = vld [vmem:[%s500] sm:$0x1]
    %s502 = scalar_lea.vmem [#allocation1], 112
    %v503 = vld [vmem:[%s502] sm:$0x2]
    %vm504 = vcmask 1041409
    %v505 = vsel %vm504, %v503, %v501
    %s506 = scalar_lea.vmem [#allocation1], 175
    %v507 = vld [vmem:[%s506] sm:$0x4]
    %vm508 = vcmask 1042434
    %v509 = vsel %vm508, %v507, %v505
    %s510 = scalar_lea.vmem [#allocation1], 238
    %v511 = vld [vmem:[%s510] sm:$0x8]
    %vm512 = vcmask 1043459
    %v513 = vsel %vm512, %v511, %v509
    %s514 = scalar_lea.vmem [#allocation1], 301
    %v515 = vld [vmem:[%s514] sm:$0x10]
    %vm516 = vcmask 1044484
    %v517 = vsel %vm516, %v515, %v513
    %s518 = scalar_lea.vmem [#allocation1], 364
    %v519 = vld [vmem:[%s518] sm:$0x20]
    %vm520 = vcmask 1045509
    %v521 = vsel %vm520, %v519, %v517
    %s522 = scalar_lea.vmem [#allocation1], 427
    %v523 = vld [vmem:[%s522] sm:$0x40]
    %vm524 = vcmask 1046534
    %v525 = vsel %vm524, %v523, %v521
    %s526 = scalar_lea.vmem [#allocation1], 490
    %v527 = vld [vmem:[%s526] sm:$0x80]
    %vm528 = vcmask 1047559
    %v529 = vsel %vm528, %v527, %v525
    %530 = vrot.lane.b32.xlu0 %v529, 100
    %v531 = vpop.permute.xlu0 %530
    %vm532 = vcmask 851744
    %533 = vst.msk [vmem:[#allocation0] ss:$8 sm:$0xf] %vm532, %v531
    %534 = vst.msk [vmem:[#allocation0] ss:$8 sm:$0xf0] %vm532, %v531
    %s535 = scalar_lea.vmem [#allocation1], 48
    %v536 = vld [vmem:[%s535] sm:$0x1]
    %s537 = scalar_lea.vmem [#allocation1], 111
    %v538 = vld [vmem:[%s537] sm:$0x2]
    %vm539 = vcmask 1041409
    %v540 = vsel %vm539, %v538, %v536
    %s541 = scalar_lea.vmem [#allocation1], 174
    %v542 = vld [vmem:[%s541] sm:$0x4]
    %vm543 = vcmask 1042434
    %v544 = vsel %vm543, %v542, %v540
    %s545 = scalar_lea.vmem [#allocation1], 237
    %v546 = vld [vmem:[%s545] sm:$0x8]
    %vm547 = vcmask 1043459
    %v548 = vsel %vm547, %v546, %v544
    %s549 = scalar_lea.vmem [#allocation1], 300
    %v550 = vld [vmem:[%s549] sm:$0x10]
    %vm551 = vcmask 1044484
    %v552 = vsel %vm551, %v550, %v548
    %s553 = scalar_lea.vmem [#allocation1], 363
    %v554 = vld [vmem:[%s553] sm:$0x20]
    %vm555 = vcmask 1045509
    %v556 = vsel %vm555, %v554, %v552
    %s557 = scalar_lea.vmem [#allocation1], 426
    %v558 = vld [vmem:[%s557] sm:$0x40]
    %vm559 = vcmask 1046534
    %v560 = vsel %vm559, %v558, %v556
    %s561 = scalar_lea.vmem [#allocation1], 489
    %v562 = vld [vmem:[%s561] sm:$0x80]
    %vm563 = vcmask 1047559
    %v564 = vsel %vm563, %v562, %v560
    %565 = vrot.lane.b32.xlu0 %v564, 96
    %v566 = vpop.permute.xlu0 %565
    %vm567 = vcmask 818944
    %568 = vst.msk [vmem:[#allocation0] ss:$8 sm:$0xf] %vm567, %v566
    %569 = vst.msk [vmem:[#allocation0] ss:$8 sm:$0xf0] %vm567, %v566
    %s570 = scalar_lea.vmem [#allocation1], 43
    %v571 = vld [vmem:[%s570] sm:$0x1]
    %s572 = scalar_lea.vmem [#allocation1], 106
    %v573 = vld [vmem:[%s572] sm:$0x2]
    %vm574 = vcmask 1041409
    %v575 = vsel %vm574, %v573, %v571
    %s576 = scalar_lea.vmem [#allocation1], 169
    %v577 = vld [vmem:[%s576] sm:$0x4]
    %vm578 = vcmask 1042434
    %v579 = vsel %vm578, %v577, %v575
    %s580 = scalar_lea.vmem [#allocation1], 232
    %v581 = vld [vmem:[%s580] sm:$0x8]
    %vm582 = vcmask 1043459
    %v583 = vsel %vm582, %v581, %v579
    %s584 = scalar_lea.vmem [#allocation1], 295
    %v585 = vld [vmem:[%s584] sm:$0x10]
    %vm586 = vcmask 1044484
    %v587 = vsel %vm586, %v585, %v583
    %s588 = scalar_lea.vmem [#allocation1], 358
    %v589 = vld [vmem:[%s588] sm:$0x20]
    %vm590 = vcmask 1045509
    %v591 = vsel %vm590, %v589, %v587
    %s592 = scalar_lea.vmem [#allocation1], 421
    %v593 = vld [vmem:[%s592] sm:$0x40]
    %vm594 = vcmask 1046534
    %v595 = vsel %vm594, %v593, %v591
    %s596 = scalar_lea.vmem [#allocation1], 484
    %v597 = vld [vmem:[%s596] sm:$0x80]
    %vm598 = vcmask 1047559
    %v599 = vsel %vm598, %v597, %v595
    %600 = vrot.lane.b32.xlu0 %v599, 92
    %v601 = vpop.permute.xlu0 %600
    %vm602 = vcmask 786144
    %603 = vst.msk [vmem:[#allocation0] ss:$8 sm:$0xf] %vm602, %v601
    %604 = vst.msk [vmem:[#allocation0] ss:$8 sm:$0xf0] %vm602, %v601
    %s605 = scalar_lea.vmem [#allocation1], 42
    %v606 = vld [vmem:[%s605] sm:$0x1]
    %s607 = scalar_lea.vmem [#allocation1], 105
    %v608 = vld [vmem:[%s607] sm:$0x2]
    %vm609 = vcmask 1041409
    %v610 = vsel %vm609, %v608, %v606
    %s611 = scalar_lea.vmem [#allocation1], 168
    %v612 = vld [vmem:[%s611] sm:$0x4]
    %vm613 = vcmask 1042434
    %v614 = vsel %vm613, %v612, %v610
    %s615 = scalar_lea.vmem [#allocation1], 231
    %v616 = vld [vmem:[%s615] sm:$0x8]
    %vm617 = vcmask 1043459
    %v618 = vsel %vm617, %v616, %v614
    %s619 = scalar_lea.vmem [#allocation1], 294
    %v620 = vld [vmem:[%s619] sm:$0x10]
    %vm621 = vcmask 1044484
    %v622 = vsel %vm621, %v620, %v618
    %s623 = scalar_lea.vmem [#allocation1], 357
    %v624 = vld [vmem:[%s623] sm:$0x20]
    %vm625 = vcmask 1045509
    %v626 = vsel %vm625, %v624, %v622
    %s627 = scalar_lea.vmem [#allocation1], 420
    %v628 = vld [vmem:[%s627] sm:$0x40]
    %vm629 = vcmask 1046534
    %v630 = vsel %vm629, %v628, %v626
    %s631 = scalar_lea.vmem [#allocation1], 483
    %v632 = vld [vmem:[%s631] sm:$0x80]
    %vm633 = vcmask 1047559
    %v634 = vsel %vm633, %v632, %v630
    %635 = vrot.lane.b32.xlu0 %v634, 88
    %v636 = vpop.permute.xlu0 %635
    %vm637 = vcmask 753344
    %638 = vst.msk [vmem:[#allocation0] ss:$8 sm:$0xf] %vm637, %v636
    %639 = vst.msk [vmem:[#allocation0] ss:$8 sm:$0xf0] %vm637, %v636
    %s640 = scalar_lea.vmem [#allocation1], 41
    %v641 = vld [vmem:[%s640] sm:$0x1]
    %s642 = scalar_lea.vmem [#allocation1], 104
    %v643 = vld [vmem:[%s642] sm:$0x2]
    %vm644 = vcmask 1041409
    %v645 = vsel %vm644, %v643, %v641
    %s646 = scalar_lea.vmem [#allocation1], 167
    %v647 = vld [vmem:[%s646] sm:$0x4]
    %vm648 = vcmask 1042434
    %v649 = vsel %vm648, %v647, %v645
    %s650 = scalar_lea.vmem [#allocation1], 230
    %v651 = vld [vmem:[%s650] sm:$0x8]
    %vm652 = vcmask 1043459
    %v653 = vsel %vm652, %v651, %v649
    %s654 = scalar_lea.vmem [#allocation1], 293
    %v655 = vld [vmem:[%s654] sm:$0x10]
    %vm656 = vcmask 1044484
    %v657 = vsel %vm656, %v655, %v653
    %s658 = scalar_lea.vmem [#allocation1], 356
    %v659 = vld [vmem:[%s658] sm:$0x20]
    %vm660 = vcmask 1045509
    %v661 = vsel %vm660, %v659, %v657
    %s662 = scalar_lea.vmem [#allocation1], 419
    %v663 = vld [vmem:[%s662] sm:$0x40]
    %vm664 = vcmask 1046534
    %v665 = vsel %vm664, %v663, %v661
    %s666 = scalar_lea.vmem [#allocation1], 482
    %v667 = vld [vmem:[%s666] sm:$0x80]
    %vm668 = vcmask 1047559
    %v669 = vsel %vm668, %v667, %v665
    %670 = vrot.lane.b32.xlu0 %v669, 84
    %v671 = vpop.permute.xlu0 %670
    %vm672 = vcmask 720544
    %673 = vst.msk [vmem:[#allocation0] ss:$8 sm:$0xf] %vm672, %v671
    %674 = vst.msk [vmem:[#allocation0] ss:$8 sm:$0xf0] %vm672, %v671
    %s675 = scalar_lea.vmem [#allocation1], 40
    %v676 = vld [vmem:[%s675] sm:$0x1]
    %s677 = scalar_lea.vmem [#allocation1], 103
    %v678 = vld [vmem:[%s677] sm:$0x2]
    %vm679 = vcmask 1041409
    %v680 = vsel %vm679, %v678, %v676
    %s681 = scalar_lea.vmem [#allocation1], 166
    %v682 = vld [vmem:[%s681] sm:$0x4]
    %vm683 = vcmask 1042434
    %v684 = vsel %vm683, %v682, %v680
    %s685 = scalar_lea.vmem [#allocation1], 229
    %v686 = vld [vmem:[%s685] sm:$0x8]
    %vm687 = vcmask 1043459
    %v688 = vsel %vm687, %v686, %v684
    %s689 = scalar_lea.vmem [#allocation1], 292
    %v690 = vld [vmem:[%s689] sm:$0x10]
    %vm691 = vcmask 1044484
    %v692 = vsel %vm691, %v690, %v688
    %s693 = scalar_lea.vmem [#allocation1], 355
    %v694 = vld [vmem:[%s693] sm:$0x20]
    %vm695 = vcmask 1045509
    %v696 = vsel %vm695, %v694, %v692
    %s697 = scalar_lea.vmem [#allocation1], 418
    %v698 = vld [vmem:[%s697] sm:$0x40]
    %vm699 = vcmask 1046534
    %v700 = vsel %vm699, %v698, %v696
    %s701 = scalar_lea.vmem [#allocation1], 481
    %v702 = vld [vmem:[%s701] sm:$0x80]
    %vm703 = vcmask 1047559
    %v704 = vsel %vm703, %v702, %v700
    %705 = vrot.lane.b32.xlu0 %v704, 80
    %v706 = vpop.permute.xlu0 %705
    %vm707 = vcmask 687744
    %708 = vst.msk [vmem:[#allocation0] ss:$8 sm:$0xf] %vm707, %v706
    %709 = vst.msk [vmem:[#allocation0] ss:$8 sm:$0xf0] %vm707, %v706
    %s710 = scalar_lea.vmem [#allocation1], 35
    %v711 = vld [vmem:[%s710] sm:$0x1]
    %s712 = scalar_lea.vmem [#allocation1], 98
    %v713 = vld [vmem:[%s712] sm:$0x2]
    %vm714 = vcmask 1041409
    %v715 = vsel %vm714, %v713, %v711
    %s716 = scalar_lea.vmem [#allocation1], 161
    %v717 = vld [vmem:[%s716] sm:$0x4]
    %vm718 = vcmask 1042434
    %v719 = vsel %vm718, %v717, %v715
    %s720 = scalar_lea.vmem [#allocation1], 224
    %v721 = vld [vmem:[%s720] sm:$0x8]
    %vm722 = vcmask 1043459
    %v723 = vsel %vm722, %v721, %v719
    %s724 = scalar_lea.vmem [#allocation1], 287
    %v725 = vld [vmem:[%s724] sm:$0x10]
    %vm726 = vcmask 1044484
    %v727 = vsel %vm726, %v725, %v723
    %s728 = scalar_lea.vmem [#allocation1], 350
    %v729 = vld [vmem:[%s728] sm:$0x20]
    %vm730 = vcmask 1045509
    %v731 = vsel %vm730, %v729, %v727
    %s732 = scalar_lea.vmem [#allocation1], 413
    %v733 = vld [vmem:[%s732] sm:$0x40]
    %vm734 = vcmask 1046534
    %v735 = vsel %vm734, %v733, %v731
    %s736 = scalar_lea.vmem [#allocation1], 476
    %v737 = vld [vmem:[%s736] sm:$0x80]
    %vm738 = vcmask 1047559
    %v739 = vsel %vm738, %v737, %v735
    %740 = vrot.lane.b32.xlu0 %v739, 76
    %v741 = vpop.permute.xlu0 %740
    %vm742 = vcmask 654944
    %743 = vst.msk [vmem:[#allocation0] ss:$8 sm:$0xf] %vm742, %v741
    %744 = vst.msk [vmem:[#allocation0] ss:$8 sm:$0xf0] %vm742, %v741
    %s745 = scalar_lea.vmem [#allocation1], 34
    %v746 = vld [vmem:[%s745] sm:$0x1]
    %s747 = scalar_lea.vmem [#allocation1], 97
    %v748 = vld [vmem:[%s747] sm:$0x2]
    %vm749 = vcmask 1041409
    %v750 = vsel %vm749, %v748, %v746
    %s751 = scalar_lea.vmem [#allocation1], 160
    %v752 = vld [vmem:[%s751] sm:$0x4]
    %vm753 = vcmask 1042434
    %v754 = vsel %vm753, %v752, %v750
    %s755 = scalar_lea.vmem [#allocation1], 223
    %v756 = vld [vmem:[%s755] sm:$0x8]
    %vm757 = vcmask 1043459
    %v758 = vsel %vm757, %v756, %v754
    %s759 = scalar_lea.vmem [#allocation1], 286
    %v760 = vld [vmem:[%s759] sm:$0x10]
    %vm761 = vcmask 1044484
    %v762 = vsel %vm761, %v760, %v758
    %s763 = scalar_lea.vmem [#allocation1], 349
    %v764 = vld [vmem:[%s763] sm:$0x20]
    %vm765 = vcmask 1045509
    %v766 = vsel %vm765, %v764, %v762
    %s767 = scalar_lea.vmem [#allocation1], 412
    %v768 = vld [vmem:[%s767] sm:$0x40]
    %vm769 = vcmask 1046534
    %v770 = vsel %vm769, %v768, %v766
    %s771 = scalar_lea.vmem [#allocation1], 475
    %v772 = vld [vmem:[%s771] sm:$0x80]
    %vm773 = vcmask 1047559
    %v774 = vsel %vm773, %v772, %v770
    %775 = vrot.lane.b32.xlu0 %v774, 72
    %v776 = vpop.permute.xlu0 %775
    %vm777 = vcmask 622144
    %778 = vst.msk [vmem:[#allocation0] ss:$8 sm:$0xf] %vm777, %v776
    %779 = vst.msk [vmem:[#allocation0] ss:$8 sm:$0xf0] %vm777, %v776
    %s780 = scalar_lea.vmem [#allocation1], 33
    %v781 = vld [vmem:[%s780] sm:$0x1]
    %s782 = scalar_lea.vmem [#allocation1], 96
    %v783 = vld [vmem:[%s782] sm:$0x2]
    %vm784 = vcmask 1041409
    %v785 = vsel %vm784, %v783, %v781
    %s786 = scalar_lea.vmem [#allocation1], 159
    %v787 = vld [vmem:[%s786] sm:$0x4]
    %vm788 = vcmask 1042434
    %v789 = vsel %vm788, %v787, %v785
    %s790 = scalar_lea.vmem [#allocation1], 222
    %v791 = vld [vmem:[%s790] sm:$0x8]
    %vm792 = vcmask 1043459
    %v793 = vsel %vm792, %v791, %v789
    %s794 = scalar_lea.vmem [#allocation1], 285
    %v795 = vld [vmem:[%s794] sm:$0x10]
    %vm796 = vcmask 1044484
    %v797 = vsel %vm796, %v795, %v793
    %s798 = scalar_lea.vmem [#allocation1], 348
    %v799 = vld [vmem:[%s798] sm:$0x20]
    %vm800 = vcmask 1045509
    %v801 = vsel %vm800, %v799, %v797
    %s802 = scalar_lea.vmem [#allocation1], 411
    %v803 = vld [vmem:[%s802] sm:$0x40]
    %vm804 = vcmask 1046534
    %v805 = vsel %vm804, %v803, %v801
    %s806 = scalar_lea.vmem [#allocation1], 474
    %v807 = vld [vmem:[%s806] sm:$0x80]
    %vm808 = vcmask 1047559
    %v809 = vsel %vm808, %v807, %v805
    %810 = vrot.lane.b32.xlu0 %v809, 68
    %v811 = vpop.permute.xlu0 %810
    %vm812 = vcmask 589344
    %813 = vst.msk [vmem:[#allocation0] ss:$8 sm:$0xf] %vm812, %v811
    %814 = vst.msk [vmem:[#allocation0] ss:$8 sm:$0xf0] %vm812, %v811
    %s815 = scalar_lea.vmem [#allocation1], 32
    %v816 = vld [vmem:[%s815] sm:$0x1]
    %s817 = scalar_lea.vmem [#allocation1], 95
    %v818 = vld [vmem:[%s817] sm:$0x2]
    %vm819 = vcmask 1041409
    %v820 = vsel %vm819, %v818, %v816
    %s821 = scalar_lea.vmem [#allocation1], 158
    %v822 = vld [vmem:[%s821] sm:$0x4]
    %vm823 = vcmask 1042434
    %v824 = vsel %vm823, %v822, %v820
    %s825 = scalar_lea.vmem [#allocation1], 221
    %v826 = vld [vmem:[%s825] sm:$0x8]
    %vm827 = vcmask 1043459
    %v828 = vsel %vm827, %v826, %v824
    %s829 = scalar_lea.vmem [#allocation1], 284
    %v830 = vld [vmem:[%s829] sm:$0x10]
    %vm831 = vcmask 1044484
    %v832 = vsel %vm831, %v830, %v828
    %s833 = scalar_lea.vmem [#allocation1], 347
    %v834 = vld [vmem:[%s833] sm:$0x20]
    %vm835 = vcmask 1045509
    %v836 = vsel %vm835, %v834, %v832
    %s837 = scalar_lea.vmem [#allocation1], 410
    %v838 = vld [vmem:[%s837] sm:$0x40]
    %vm839 = vcmask 1046534
    %v840 = vsel %vm839, %v838, %v836
    %s841 = scalar_lea.vmem [#allocation1], 473
    %v842 = vld [vmem:[%s841] sm:$0x80]
    %vm843 = vcmask 1047559
    %v844 = vsel %vm843, %v842, %v840
    %845 = vrot.lane.b32.xlu0 %v844, 64
    %v846 = vpop.permute.xlu0 %845
    %vm847 = vcmask 556544
    %848 = vst.msk [vmem:[#allocation0] ss:$8 sm:$0xf] %vm847, %v846
    %849 = vst.msk [vmem:[#allocation0] ss:$8 sm:$0xf0] %vm847, %v846
    %s850 = scalar_lea.vmem [#allocation1], 27
    %v851 = vld [vmem:[%s850] sm:$0x1]
    %s852 = scalar_lea.vmem [#allocation1], 90
    %v853 = vld [vmem:[%s852] sm:$0x2]
    %vm854 = vcmask 1041409
    %v855 = vsel %vm854, %v853, %v851
    %s856 = scalar_lea.vmem [#allocation1], 153
    %v857 = vld [vmem:[%s856] sm:$0x4]
    %vm858 = vcmask 1042434
    %v859 = vsel %vm858, %v857, %v855
    %s860 = scalar_lea.vmem [#allocation1], 216
    %v861 = vld [vmem:[%s860] sm:$0x8]
    %vm862 = vcmask 1043459
    %v863 = vsel %vm862, %v861, %v859
    %s864 = scalar_lea.vmem [#allocation1], 279
    %v865 = vld [vmem:[%s864] sm:$0x10]
    %vm866 = vcmask 1044484
    %v867 = vsel %vm866, %v865, %v863
    %s868 = scalar_lea.vmem [#allocation1], 342
    %v869 = vld [vmem:[%s868] sm:$0x20]
    %vm870 = vcmask 1045509
    %v871 = vsel %vm870, %v869, %v867
    %s872 = scalar_lea.vmem [#allocation1], 405
    %v873 = vld [vmem:[%s872] sm:$0x40]
    %vm874 = vcmask 1046534
    %v875 = vsel %vm874, %v873, %v871
    %s876 = scalar_lea.vmem [#allocation1], 468
    %v877 = vld [vmem:[%s876] sm:$0x80]
    %vm878 = vcmask 1047559
    %v879 = vsel %vm878, %v877, %v875
    %880 = vrot.lane.b32.xlu0 %v879, 60
    %v881 = vpop.permute.xlu0 %880
    %vm882 = vcmask 523744
    %883 = vst.msk [vmem:[#allocation0] ss:$8 sm:$0xf] %vm882, %v881
    %884 = vst.msk [vmem:[#allocation0] ss:$8 sm:$0xf0] %vm882, %v881
    %s885 = scalar_lea.vmem [#allocation1], 26
    %v886 = vld [vmem:[%s885] sm:$0x1]
    %s887 = scalar_lea.vmem [#allocation1], 89
    %v888 = vld [vmem:[%s887] sm:$0x2]
    %vm889 = vcmask 1041409
    %v890 = vsel %vm889, %v888, %v886
    %s891 = scalar_lea.vmem [#allocation1], 152
    %v892 = vld [vmem:[%s891] sm:$0x4]
    %vm893 = vcmask 1042434
    %v894 = vsel %vm893, %v892, %v890
    %s895 = scalar_lea.vmem [#allocation1], 215
    %v896 = vld [vmem:[%s895] sm:$0x8]
    %vm897 = vcmask 1043459
    %v898 = vsel %vm897, %v896, %v894
    %s899 = scalar_lea.vmem [#allocation1], 278
    %v900 = vld [vmem:[%s899] sm:$0x10]
    %vm901 = vcmask 1044484
    %v902 = vsel %vm901, %v900, %v898
    %s903 = scalar_lea.vmem [#allocation1], 341
    %v904 = vld [vmem:[%s903] sm:$0x20]
    %vm905 = vcmask 1045509
    %v906 = vsel %vm905, %v904, %v902
    %s907 = scalar_lea.vmem [#allocation1], 404
    %v908 = vld [vmem:[%s907] sm:$0x40]
    %vm909 = vcmask 1046534
    %v910 = vsel %vm909, %v908, %v906
    %s911 = scalar_lea.vmem [#allocation1], 467
    %v912 = vld [vmem:[%s911] sm:$0x80]
    %vm913 = vcmask 1047559
    %v914 = vsel %vm913, %v912, %v910
    %915 = vrot.lane.b32.xlu0 %v914, 56
    %v916 = vpop.permute.xlu0 %915
    %vm917 = vcmask 490944
    %918 = vst.msk [vmem:[#allocation0] ss:$8 sm:$0xf] %vm917, %v916
    %919 = vst.msk [vmem:[#allocation0] ss:$8 sm:$0xf0] %vm917, %v916
    %s920 = scalar_lea.vmem [#allocation1], 25
    %v921 = vld [vmem:[%s920] sm:$0x1]
    %s922 = scalar_lea.vmem [#allocation1], 88
    %v923 = vld [vmem:[%s922] sm:$0x2]
    %vm924 = vcmask 1041409
    %v925 = vsel %vm924, %v923, %v921
    %s926 = scalar_lea.vmem [#allocation1], 151
    %v927 = vld [vmem:[%s926] sm:$0x4]
    %vm928 = vcmask 1042434
    %v929 = vsel %vm928, %v927, %v925
    %s930 = scalar_lea.vmem [#allocation1], 214
    %v931 = vld [vmem:[%s930] sm:$0x8]
    %vm932 = vcmask 1043459
    %v933 = vsel %vm932, %v931, %v929
    %s934 = scalar_lea.vmem [#allocation1], 277
    %v935 = vld [vmem:[%s934] sm:$0x10]
    %vm936 = vcmask 1044484
    %v937 = vsel %vm936, %v935, %v933
    %s938 = scalar_lea.vmem [#allocation1], 340
    %v939 = vld [vmem:[%s938] sm:$0x20]
    %vm940 = vcmask 1045509
    %v941 = vsel %vm940, %v939, %v937
    %s942 = scalar_lea.vmem [#allocation1], 403
    %v943 = vld [vmem:[%s942] sm:$0x40]
    %vm944 = vcmask 1046534
    %v945 = vsel %vm944, %v943, %v941
    %s946 = scalar_lea.vmem [#allocation1], 466
    %v947 = vld [vmem:[%s946] sm:$0x80]
    %vm948 = vcmask 1047559
    %v949 = vsel %vm948, %v947, %v945
    %950 = vrot.lane.b32.xlu0 %v949, 52
    %v951 = vpop.permute.xlu0 %950
    %vm952 = vcmask 458144
    %953 = vst.msk [vmem:[#allocation0] ss:$8 sm:$0xf] %vm952, %v951
    %954 = vst.msk [vmem:[#allocation0] ss:$8 sm:$0xf0] %vm952, %v951
    %s955 = scalar_lea.vmem [#allocation1], 24
    %v956 = vld [vmem:[%s955] sm:$0x1]
    %s957 = scalar_lea.vmem [#allocation1], 87
    %v958 = vld [vmem:[%s957] sm:$0x2]
    %vm959 = vcmask 1041409
    %v960 = vsel %vm959, %v958, %v956
    %s961 = scalar_lea.vmem [#allocation1], 150
    %v962 = vld [vmem:[%s961] sm:$0x4]
    %vm963 = vcmask 1042434
    %v964 = vsel %vm963, %v962, %v960
    %s965 = scalar_lea.vmem [#allocation1], 213
    %v966 = vld [vmem:[%s965] sm:$0x8]
    %vm967 = vcmask 1043459
    %v968 = vsel %vm967, %v966, %v964
    %s969 = scalar_lea.vmem [#allocation1], 276
    %v970 = vld [vmem:[%s969] sm:$0x10]
    %vm971 = vcmask 1044484
    %v972 = vsel %vm971, %v970, %v968
    %s973 = scalar_lea.vmem [#allocation1], 339
    %v974 = vld [vmem:[%s973] sm:$0x20]
    %vm975 = vcmask 1045509
    %v976 = vsel %vm975, %v974, %v972
    %s977 = scalar_lea.vmem [#allocation1], 402
    %v978 = vld [vmem:[%s977] sm:$0x40]
    %vm979 = vcmask 1046534
    %v980 = vsel %vm979, %v978, %v976
    %s981 = scalar_lea.vmem [#allocation1], 465
    %v982 = vld [vmem:[%s981] sm:$0x80]
    %vm983 = vcmask 1047559
    %v984 = vsel %vm983, %v982, %v980
    %985 = vrot.lane.b32.xlu0 %v984, 48
    %v986 = vpop.permute.xlu0 %985
    %vm987 = vcmask 425344
    %988 = vst.msk [vmem:[#allocation0] ss:$8 sm:$0xf] %vm987, %v986
    %989 = vst.msk [vmem:[#allocation0] ss:$8 sm:$0xf0] %vm987, %v986
    %s990 = scalar_lea.vmem [#allocation1], 19
    %v991 = vld [vmem:[%s990] sm:$0x1]
    %s992 = scalar_lea.vmem [#allocation1], 82
    %v993 = vld [vmem:[%s992] sm:$0x2]
    %vm994 = vcmask 1041409
    %v995 = vsel %vm994, %v993, %v991
    %s996 = scalar_lea.vmem [#allocation1], 145
    %v997 = vld [vmem:[%s996] sm:$0x4]
    %vm998 = vcmask 1042434
    %v999 = vsel %vm998, %v997, %v995
    %s1000 = scalar_lea.vmem [#allocation1], 208
    %v1001 = vld [vmem:[%s1000] sm:$0x8]
    %vm1002 = vcmask 1043459
    %v1003 = vsel %vm1002, %v1001, %v999
    %s1004 = scalar_lea.vmem [#allocation1], 271
    %v1005 = vld [vmem:[%s1004] sm:$0x10]
    %vm1006 = vcmask 1044484
    %v1007 = vsel %vm1006, %v1005, %v1003
    %s1008 = scalar_lea.vmem [#allocation1], 334
    %v1009 = vld [vmem:[%s1008] sm:$0x20]
    %vm1010 = vcmask 1045509
    %v1011 = vsel %vm1010, %v1009, %v1007
    %s1012 = scalar_lea.vmem [#allocation1], 397
    %v1013 = vld [vmem:[%s1012] sm:$0x40]
    %vm1014 = vcmask 1046534
    %v1015 = vsel %vm1014, %v1013, %v1011
    %s1016 = scalar_lea.vmem [#allocation1], 460
    %v1017 = vld [vmem:[%s1016] sm:$0x80]
    %vm1018 = vcmask 1047559
    %v1019 = vsel %vm1018, %v1017, %v1015
    %1020 = vrot.lane.b32.xlu0 %v1019, 44
    %v1021 = vpop.permute.xlu0 %1020
    %vm1022 = vcmask 392544
    %1023 = vst.msk [vmem:[#allocation0] ss:$8 sm:$0xf] %vm1022, %v1021
    %1024 = vst.msk [vmem:[#allocation0] ss:$8 sm:$0xf0] %vm1022, %v1021
    %s1025 = scalar_lea.vmem [#allocation1], 18
    %v1026 = vld [vmem:[%s1025] sm:$0x1]
    %s1027 = scalar_lea.vmem [#allocation1], 81
    %v1028 = vld [vmem:[%s1027] sm:$0x2]
    %vm1029 = vcmask 1041409
    %v1030 = vsel %vm1029, %v1028, %v1026
    %s1031 = scalar_lea.vmem [#allocation1], 144
    %v1032 = vld [vmem:[%s1031] sm:$0x4]
    %vm1033 = vcmask 1042434
    %v1034 = vsel %vm1033, %v1032, %v1030
    %s1035 = scalar_lea.vmem [#allocation1], 207
    %v1036 = vld [vmem:[%s1035] sm:$0x8]
    %vm1037 = vcmask 1043459
    %v1038 = vsel %vm1037, %v1036, %v1034
    %s1039 = scalar_lea.vmem [#allocation1], 270
    %v1040 = vld [vmem:[%s1039] sm:$0x10]
    %vm1041 = vcmask 1044484
    %v1042 = vsel %vm1041, %v1040, %v1038
    %s1043 = scalar_lea.vmem [#allocation1], 333
    %v1044 = vld [vmem:[%s1043] sm:$0x20]
    %vm1045 = vcmask 1045509
    %v1046 = vsel %vm1045, %v1044, %v1042
    %s1047 = scalar_lea.vmem [#allocation1], 396
    %v1048 = vld [vmem:[%s1047] sm:$0x40]
    %vm1049 = vcmask 1046534
    %v1050 = vsel %vm1049, %v1048, %v1046
    %s1051 = scalar_lea.vmem [#allocation1], 459
    %v1052 = vld [vmem:[%s1051] sm:$0x80]
    %vm1053 = vcmask 1047559
    %v1054 = vsel %vm1053, %v1052, %v1050
    %1055 = vrot.lane.b32.xlu0 %v1054, 40
    %v1056 = vpop.permute.xlu0 %1055
    %vm1057 = vcmask 359744
    %1058 = vst.msk [vmem:[#allocation0] ss:$8 sm:$0xf] %vm1057, %v1056
    %1059 = vst.msk [vmem:[#allocation0] ss:$8 sm:$0xf0] %vm1057, %v1056
    %s1060 = scalar_lea.vmem [#allocation1], 17
    %v1061 = vld [vmem:[%s1060] sm:$0x1]
    %s1062 = scalar_lea.vmem [#allocation1], 80
    %v1063 = vld [vmem:[%s1062] sm:$0x2]
    %vm1064 = vcmask 1041409
    %v1065 = vsel %vm1064, %v1063, %v1061
    %s1066 = scalar_lea.vmem [#allocation1], 143
    %v1067 = vld [vmem:[%s1066] sm:$0x4]
    %vm1068 = vcmask 1042434
    %v1069 = vsel %vm1068, %v1067, %v1065
    %s1070 = scalar_lea.vmem [#allocation1], 206
    %v1071 = vld [vmem:[%s1070] sm:$0x8]
    %vm1072 = vcmask 1043459
    %v1073 = vsel %vm1072, %v1071, %v1069
    %s1074 = scalar_lea.vmem [#allocation1], 269
    %v1075 = vld [vmem:[%s1074] sm:$0x10]
    %vm1076 = vcmask 1044484
    %v1077 = vsel %vm1076, %v1075, %v1073
    %s1078 = scalar_lea.vmem [#allocation1], 332
    %v1079 = vld [vmem:[%s1078] sm:$0x20]
    %vm1080 = vcmask 1045509
    %v1081 = vsel %vm1080, %v1079, %v1077
    %s1082 = scalar_lea.vmem [#allocation1], 395
    %v1083 = vld [vmem:[%s1082] sm:$0x40]
    %vm1084 = vcmask 1046534
    %v1085 = vsel %vm1084, %v1083, %v1081
    %s1086 = scalar_lea.vmem [#allocation1], 458
    %v1087 = vld [vmem:[%s1086] sm:$0x80]
    %vm1088 = vcmask 1047559
    %v1089 = vsel %vm1088, %v1087, %v1085
    %1090 = vrot.lane.b32.xlu0 %v1089, 36
    %v1091 = vpop.permute.xlu0 %1090
    %vm1092 = vcmask 326944
    %1093 = vst.msk [vmem:[#allocation0] ss:$8 sm:$0xf] %vm1092, %v1091
    %1094 = vst.msk [vmem:[#allocation0] ss:$8 sm:$0xf0] %vm1092, %v1091
    %s1095 = scalar_lea.vmem [#allocation1], 16
    %v1096 = vld [vmem:[%s1095] sm:$0x1]
    %s1097 = scalar_lea.vmem [#allocation1], 79
    %v1098 = vld [vmem:[%s1097] sm:$0x2]
    %vm1099 = vcmask 1041409
    %v1100 = vsel %vm1099, %v1098, %v1096
    %s1101 = scalar_lea.vmem [#allocation1], 142
    %v1102 = vld [vmem:[%s1101] sm:$0x4]
    %vm1103 = vcmask 1042434
    %v1104 = vsel %vm1103, %v1102, %v1100
    %s1105 = scalar_lea.vmem [#allocation1], 205
    %v1106 = vld [vmem:[%s1105] sm:$0x8]
    %vm1107 = vcmask 1043459
    %v1108 = vsel %vm1107, %v1106, %v1104
    %s1109 = scalar_lea.vmem [#allocation1], 268
    %v1110 = vld [vmem:[%s1109] sm:$0x10]
    %vm1111 = vcmask 1044484
    %v1112 = vsel %vm1111, %v1110, %v1108
    %s1113 = scalar_lea.vmem [#allocation1], 331
    %v1114 = vld [vmem:[%s1113] sm:$0x20]
    %vm1115 = vcmask 1045509
    %v1116 = vsel %vm1115, %v1114, %v1112
    %s1117 = scalar_lea.vmem [#allocation1], 394
    %v1118 = vld [vmem:[%s1117] sm:$0x40]
    %vm1119 = vcmask 1046534
    %v1120 = vsel %vm1119, %v1118, %v1116
    %s1121 = scalar_lea.vmem [#allocation1], 457
    %v1122 = vld [vmem:[%s1121] sm:$0x80]
    %vm1123 = vcmask 1047559
    %v1124 = vsel %vm1123, %v1122, %v1120
    %1125 = vrot.lane.b32.xlu0 %v1124, 32
    %v1126 = vpop.permute.xlu0 %1125
    %vm1127 = vcmask 294144
    %1128 = vst.msk [vmem:[#allocation0] ss:$8 sm:$0xf] %vm1127, %v1126
    %1129 = vst.msk [vmem:[#allocation0] ss:$8 sm:$0xf0] %vm1127, %v1126
    %s1130 = scalar_lea.vmem [#allocation1], 11
    %v1131 = vld [vmem:[%s1130] sm:$0x1]
    %s1132 = scalar_lea.vmem [#allocation1], 74
    %v1133 = vld [vmem:[%s1132] sm:$0x2]
    %vm1134 = vcmask 1041409
    %v1135 = vsel %vm1134, %v1133, %v1131
    %s1136 = scalar_lea.vmem [#allocation1], 137
    %v1137 = vld [vmem:[%s1136] sm:$0x4]
    %vm1138 = vcmask 1042434
    %v1139 = vsel %vm1138, %v1137, %v1135
    %s1140 = scalar_lea.vmem [#allocation1], 200
    %v1141 = vld [vmem:[%s1140] sm:$0x8]
    %vm1142 = vcmask 1043459
    %v1143 = vsel %vm1142, %v1141, %v1139
    %s1144 = scalar_lea.vmem [#allocation1], 263
    %v1145 = vld [vmem:[%s1144] sm:$0x10]
    %vm1146 = vcmask 1044484
    %v1147 = vsel %vm1146, %v1145, %v1143
    %s1148 = scalar_lea.vmem [#allocation1], 326
    %v1149 = vld [vmem:[%s1148] sm:$0x20]
    %vm1150 = vcmask 1045509
    %v1151 = vsel %vm1150, %v1149, %v1147
    %s1152 = scalar_lea.vmem [#allocation1], 389
    %v1153 = vld [vmem:[%s1152] sm:$0x40]
    %vm1154 = vcmask 1046534
    %v1155 = vsel %vm1154, %v1153, %v1151
    %s1156 = scalar_lea.vmem [#allocation1], 452
    %v1157 = vld [vmem:[%s1156] sm:$0x80]
    %vm1158 = vcmask 1047559
    %v1159 = vsel %vm1158, %v1157, %v1155
    %1160 = vrot.lane.b32.xlu0 %v1159, 28
    %v1161 = vpop.permute.xlu0 %1160
    %vm1162 = vcmask 261344
    %1163 = vst.msk [vmem:[#allocation0] ss:$8 sm:$0xf] %vm1162, %v1161
    %1164 = vst.msk [vmem:[#allocation0] ss:$8 sm:$0xf0] %vm1162, %v1161
    %s1165 = scalar_lea.vmem [#allocation1], 10
    %v1166 = vld [vmem:[%s1165] sm:$0x1]
    %s1167 = scalar_lea.vmem [#allocation1], 73
    %v1168 = vld [vmem:[%s1167] sm:$0x2]
    %vm1169 = vcmask 1041409
    %v1170 = vsel %vm1169, %v1168, %v1166
    %s1171 = scalar_lea.vmem [#allocation1], 136
    %v1172 = vld [vmem:[%s1171] sm:$0x4]
    %vm1173 = vcmask 1042434
    %v1174 = vsel %vm1173, %v1172, %v1170
    %s1175 = scalar_lea.vmem [#allocation1], 199
    %v1176 = vld [vmem:[%s1175] sm:$0x8]
    %vm1177 = vcmask 1043459
    %v1178 = vsel %vm1177, %v1176, %v1174
    %s1179 = scalar_lea.vmem [#allocation1], 262
    %v1180 = vld [vmem:[%s1179] sm:$0x10]
    %vm1181 = vcmask 1044484
    %v1182 = vsel %vm1181, %v1180, %v1178
    %s1183 = scalar_lea.vmem [#allocation1], 325
    %v1184 = vld [vmem:[%s1183] sm:$0x20]
    %vm1185 = vcmask 1045509
    %v1186 = vsel %vm1185, %v1184, %v1182
    %s1187 = scalar_lea.vmem [#allocation1], 388
    %v1188 = vld [vmem:[%s1187] sm:$0x40]
    %vm1189 = vcmask 1046534
    %v1190 = vsel %vm1189, %v1188, %v1186
    %s1191 = scalar_lea.vmem [#allocation1], 451
    %v1192 = vld [vmem:[%s1191] sm:$0x80]
    %vm1193 = vcmask 1047559
    %v1194 = vsel %vm1193, %v1192, %v1190
    %1195 = vrot.lane.b32.xlu0 %v1194, 24
    %v1196 = vpop.permute.xlu0 %1195
    %vm1197 = vcmask 228544
    %1198 = vst.msk [vmem:[#allocation0] ss:$8 sm:$0xf] %vm1197, %v1196
    %1199 = vst.msk [vmem:[#allocation0] ss:$8 sm:$0xf0] %vm1197, %v1196
    %s1200 = scalar_lea.vmem [#allocation1], 9
    %v1201 = vld [vmem:[%s1200] sm:$0x1]
    %s1202 = scalar_lea.vmem [#allocation1], 72
    %v1203 = vld [vmem:[%s1202] sm:$0x2]
    %vm1204 = vcmask 1041409
    %v1205 = vsel %vm1204, %v1203, %v1201
    %s1206 = scalar_lea.vmem [#allocation1], 135
    %v1207 = vld [vmem:[%s1206] sm:$0x4]
    %vm1208 = vcmask 1042434
    %v1209 = vsel %vm1208, %v1207, %v1205
    %s1210 = scalar_lea.vmem [#allocation1], 198
    %v1211 = vld [vmem:[%s1210] sm:$0x8]
    %vm1212 = vcmask 1043459
    %v1213 = vsel %vm1212, %v1211, %v1209
    %s1214 = scalar_lea.vmem [#allocation1], 261
    %v1215 = vld [vmem:[%s1214] sm:$0x10]
    %vm1216 = vcmask 1044484
    %v1217 = vsel %vm1216, %v1215, %v1213
    %s1218 = scalar_lea.vmem [#allocation1], 324
    %v1219 = vld [vmem:[%s1218] sm:$0x20]
    %vm1220 = vcmask 1045509
    %v1221 = vsel %vm1220, %v1219, %v1217
    %s1222 = scalar_lea.vmem [#allocation1], 387
    %v1223 = vld [vmem:[%s1222] sm:$0x40]
    %vm1224 = vcmask 1046534
    %v1225 = vsel %vm1224, %v1223, %v1221
    %s1226 = scalar_lea.vmem [#allocation1], 450
    %v1227 = vld [vmem:[%s1226] sm:$0x80]
    %vm1228 = vcmask 1047559
    %v1229 = vsel %vm1228, %v1227, %v1225
    %1230 = vrot.lane.b32.xlu0 %v1229, 20
    %v1231 = vpop.permute.xlu0 %1230
    %vm1232 = vcmask 195744
    %1233 = vst.msk [vmem:[#allocation0] ss:$8 sm:$0xf] %vm1232, %v1231
    %1234 = vst.msk [vmem:[#allocation0] ss:$8 sm:$0xf0] %vm1232, %v1231
    %s1235 = scalar_lea.vmem [#allocation1], 8
    %v1236 = vld [vmem:[%s1235] sm:$0x1]
    %s1237 = scalar_lea.vmem [#allocation1], 71
    %v1238 = vld [vmem:[%s1237] sm:$0x2]
    %vm1239 = vcmask 1041409
    %v1240 = vsel %vm1239, %v1238, %v1236
    %s1241 = scalar_lea.vmem [#allocation1], 134
    %v1242 = vld [vmem:[%s1241] sm:$0x4]
    %vm1243 = vcmask 1042434
    %v1244 = vsel %vm1243, %v1242, %v1240
    %s1245 = scalar_lea.vmem [#allocation1], 197
    %v1246 = vld [vmem:[%s1245] sm:$0x8]
    %vm1247 = vcmask 1043459
    %v1248 = vsel %vm1247, %v1246, %v1244
    %s1249 = scalar_lea.vmem [#allocation1], 260
    %v1250 = vld [vmem:[%s1249] sm:$0x10]
    %vm1251 = vcmask 1044484
    %v1252 = vsel %vm1251, %v1250, %v1248
    %s1253 = scalar_lea.vmem [#allocation1], 323
    %v1254 = vld [vmem:[%s1253] sm:$0x20]
    %vm1255 = vcmask 1045509
    %v1256 = vsel %vm1255, %v1254, %v1252
    %s1257 = scalar_lea.vmem [#allocation1], 386
    %v1258 = vld [vmem:[%s1257] sm:$0x40]
    %vm1259 = vcmask 1046534
    %v1260 = vsel %vm1259, %v1258, %v1256
    %s1261 = scalar_lea.vmem [#allocation1], 449
    %v1262 = vld [vmem:[%s1261] sm:$0x80]
    %vm1263 = vcmask 1047559
    %v1264 = vsel %vm1263, %v1262, %v1260
    %1265 = vrot.lane.b32.xlu0 %v1264, 16
    %v1266 = vpop.permute.xlu0 %1265
    %vm1267 = vcmask 162944
    %1268 = vst.msk [vmem:[#allocation0] ss:$8 sm:$0xf] %vm1267, %v1266
    %1269 = vst.msk [vmem:[#allocation0] ss:$8 sm:$0xf0] %vm1267, %v1266
    %s1270 = scalar_lea.vmem [#allocation1], 3
    %v1271 = vld [vmem:[%s1270] sm:$0x1]
    %s1272 = scalar_lea.vmem [#allocation1], 66
    %v1273 = vld [vmem:[%s1272] sm:$0x2]
    %vm1274 = vcmask 1041409
    %v1275 = vsel %vm1274, %v1273, %v1271
    %s1276 = scalar_lea.vmem [#allocation1], 129
    %v1277 = vld [vmem:[%s1276] sm:$0x4]
    %vm1278 = vcmask 1042434
    %v1279 = vsel %vm1278, %v1277, %v1275
    %s1280 = scalar_lea.vmem [#allocation1], 192
    %v1281 = vld [vmem:[%s1280] sm:$0x8]
    %vm1282 = vcmask 1043459
    %v1283 = vsel %vm1282, %v1281, %v1279
    %s1284 = scalar_lea.vmem [#allocation1], 255
    %v1285 = vld [vmem:[%s1284] sm:$0x10]
    %vm1286 = vcmask 1044484
    %v1287 = vsel %vm1286, %v1285, %v1283
    %s1288 = scalar_lea.vmem [#allocation1], 318
    %v1289 = vld [vmem:[%s1288] sm:$0x20]
    %vm1290 = vcmask 1045509
    %v1291 = vsel %vm1290, %v1289, %v1287
    %s1292 = scalar_lea.vmem [#allocation1], 381
    %v1293 = vld [vmem:[%s1292] sm:$0x40]
    %vm1294 = vcmask 1046534
    %v1295 = vsel %vm1294, %v1293, %v1291
    %s1296 = scalar_lea.vmem [#allocation1], 444
    %v1297 = vld [vmem:[%s1296] sm:$0x80]
    %vm1298 = vcmask 1047559
    %v1299 = vsel %vm1298, %v1297, %v1295
    %1300 = vrot.lane.b32.xlu0 %v1299, 12
    %v1301 = vpop.permute.xlu0 %1300
    %vm1302 = vcmask 130144
    %1303 = vst.msk [vmem:[#allocation0] ss:$8 sm:$0xf] %vm1302, %v1301
    %1304 = vst.msk [vmem:[#allocation0] ss:$8 sm:$0xf0] %vm1302, %v1301
    %s1305 = scalar_lea.vmem [#allocation1], 2
    %v1306 = vld [vmem:[%s1305] sm:$0x1]
    %s1307 = scalar_lea.vmem [#allocation1], 65
    %v1308 = vld [vmem:[%s1307] sm:$0x2]
    %vm1309 = vcmask 1041409
    %v1310 = vsel %vm1309, %v1308, %v1306
    %s1311 = scalar_lea.vmem [#allocation1], 128
    %v1312 = vld [vmem:[%s1311] sm:$0x4]
    %vm1313 = vcmask 1042434
    %v1314 = vsel %vm1313, %v1312, %v1310
    %s1315 = scalar_lea.vmem [#allocation1], 191
    %v1316 = vld [vmem:[%s1315] sm:$0x8]
    %vm1317 = vcmask 1043459
    %v1318 = vsel %vm1317, %v1316, %v1314
    %s1319 = scalar_lea.vmem [#allocation1], 254
    %v1320 = vld [vmem:[%s1319] sm:$0x10]
    %vm1321 = vcmask 1044484
    %v1322 = vsel %vm1321, %v1320, %v1318
    %s1323 = scalar_lea.vmem [#allocation1], 317
    %v1324 = vld [vmem:[%s1323] sm:$0x20]
    %vm1325 = vcmask 1045509
    %v1326 = vsel %vm1325, %v1324, %v1322
    %s1327 = scalar_lea.vmem [#allocation1], 380
    %v1328 = vld [vmem:[%s1327] sm:$0x40]
    %vm1329 = vcmask 1046534
    %v1330 = vsel %vm1329, %v1328, %v1326
    %s1331 = scalar_lea.vmem [#allocation1], 443
    %v1332 = vld [vmem:[%s1331] sm:$0x80]
    %vm1333 = vcmask 1047559
    %v1334 = vsel %vm1333, %v1332, %v1330
    %1335 = vrot.lane.b32.xlu0 %v1334, 8
    %v1336 = vpop.permute.xlu0 %1335
    %vm1337 = vcmask 97344
    %1338 = vst.msk [vmem:[#allocation0] ss:$8 sm:$0xf] %vm1337, %v1336
    %1339 = vst.msk [vmem:[#allocation0] ss:$8 sm:$0xf0] %vm1337, %v1336
    %s1340 = scalar_lea.vmem [#allocation1], 1
    %v1341 = vld [vmem:[%s1340] sm:$0x1]
    %s1342 = scalar_lea.vmem [#allocation1], 64
    %v1343 = vld [vmem:[%s1342] sm:$0x2]
    %vm1344 = vcmask 1041409
    %v1345 = vsel %vm1344, %v1343, %v1341
    %s1346 = scalar_lea.vmem [#allocation1], 127
    %v1347 = vld [vmem:[%s1346] sm:$0x4]
    %vm1348 = vcmask 1042434
    %v1349 = vsel %vm1348, %v1347, %v1345
    %s1350 = scalar_lea.vmem [#allocation1], 190
    %v1351 = vld [vmem:[%s1350] sm:$0x8]
    %vm1352 = vcmask 1043459
    %v1353 = vsel %vm1352, %v1351, %v1349
    %s1354 = scalar_lea.vmem [#allocation1], 253
    %v1355 = vld [vmem:[%s1354] sm:$0x10]
    %vm1356 = vcmask 1044484
    %v1357 = vsel %vm1356, %v1355, %v1353
    %s1358 = scalar_lea.vmem [#allocation1], 316
    %v1359 = vld [vmem:[%s1358] sm:$0x20]
    %vm1360 = vcmask 1045509
    %v1361 = vsel %vm1360, %v1359, %v1357
    %s1362 = scalar_lea.vmem [#allocation1], 379
    %v1363 = vld [vmem:[%s1362] sm:$0x40]
    %vm1364 = vcmask 1046534
    %v1365 = vsel %vm1364, %v1363, %v1361
    %s1366 = scalar_lea.vmem [#allocation1], 442
    %v1367 = vld [vmem:[%s1366] sm:$0x80]
    %vm1368 = vcmask 1047559
    %v1369 = vsel %vm1368, %v1367, %v1365
    %1370 = vrot.lane.b32.xlu0 %v1369, 4
    %v1371 = vpop.permute.xlu0 %1370
    %vm1372 = vcmask 64544
    %1373 = vst.msk [vmem:[#allocation0] ss:$8 sm:$0xf] %vm1372, %v1371
    %1374 = vst.msk [vmem:[#allocation0] ss:$8 sm:$0xf0] %vm1372, %v1371
    %s1376 = ssub.s32 2, 1
    %v1377 = vld [vmem:[#allocation0] sm:%s1376]
    %s1379 = ssub.s32 2, 1
    %1380 = vst [vmem:[%s1] sm:%s1379] %v1377
    %s1381 = scalar_lea.vmem [#allocation0], 8
    %v1382 = vld [vmem:[%s1381] sm:%s1376]
    %s1384 = ssub.s32 2, 1
    %s1385 = scalar_lea.vmem %s1, 1
    %1386 = vst [vmem:[%s1385] sm:%s1384] %v1382
    %s1387 = scalar_lea.vmem [#allocation0], 16
    %v1388 = vld [vmem:[%s1387] sm:%s1376]
    %s1390 = ssub.s32 2, 1
    %s1391 = scalar_lea.vmem %s1, 2
    %1392 = vst [vmem:[%s1391] sm:%s1390] %v1388
    %s1393 = scalar_lea.vmem [#allocation0], 24
    %v1394 = vld [vmem:[%s1393] sm:%s1376]
    %s1396 = ssub.s32 2, 1
    %s1397 = scalar_lea.vmem %s1, 3
    %1398 = vst [vmem:[%s1397] sm:%s1396] %v1394
    %s1399 = scalar_lea.vmem [#allocation0], 32
    %v1400 = vld [vmem:[%s1399] sm:%s1376]
    %s1402 = ssub.s32 2, 1
    %s1403 = scalar_lea.vmem %s1, 4
    %1404 = vst [vmem:[%s1403] sm:%s1402] %v1400
    %s1405 = scalar_lea.vmem [#allocation0], 40
    %v1406 = vld [vmem:[%s1405] sm:%s1376]
    %s1408 = ssub.s32 2, 1
    %s1409 = scalar_lea.vmem %s1, 5
    %1410 = vst [vmem:[%s1409] sm:%s1408] %v1406
    %s1411 = scalar_lea.vmem [#allocation0], 48
    %v1412 = vld [vmem:[%s1411] sm:%s1376]
    %s1414 = ssub.s32 2, 1
    %s1415 = scalar_lea.vmem %s1, 6
    %1416 = vst [vmem:[%s1415] sm:%s1414] %v1412
    %s1417 = scalar_lea.vmem [#allocation0], 56
    %v1418 = vld [vmem:[%s1417] sm:%s1376]
    %s1420 = ssub.s32 2, 1
    %s1421 = scalar_lea.vmem %s1, 7
    %1422 = vst [vmem:[%s1421] sm:%s1420] %v1418

// kernel: _lambda_.6
$region0: #{_lambda_.6}
  #allocation0 [shape = 'u32[]', space=smem, size = 0x4, offset = 0x4, fixed_abs, tag = 'smem constant byte address 0x4 - core index']
  #allocation1 [shape = 'u32[72,128]{1,0:T(1,128)}', space=vmem, size = 0x9000, scoped, tag = 'internal scratch']
  %s0 = inlined_call_operand.vmem [shape: f32[2,25,512], index: 0, kind: input, shape index: {}]
  %s1 = inlined_call_operand.vmem [shape: f32[2,1,512], index: 1, kind: input, shape index: {}]
  %s2 = inlined_call_operand.vmem [shape: f32[2,25], index: 2, kind: output, shape index: {}]
  %s3 = sld [smem:[#allocation0]]
  $region18: #{_lambda_.6} parent=0
    _
  %s5 = ssub.s32 1, %s3
  %s6 = scalar_select 0, %s5, %s3
  // Predicated region
  $region2: #{_lambda_.6} parent=0 // pred_check
    _
  $region3: #{_lambda_.6} parent=0 // pred_check_branch
    %8 = sbr.rel (0) target = $region5
  $region4: #{_lambda_.6} parent=0 // pred_region
    _
  $region5: #{_lambda_.6} parent=0 // pred_fallthru
    _
  // Predicated region
  $region6: #{_lambda_.6} parent=0 // pred_check
    _
  $region7: #{_lambda_.6} parent=0 // pred_check_branch
    %10 = sbr.rel (0) target = $region9
  $region8: #{_lambda_.6} parent=0 // pred_region
    _
  $region9: #{_lambda_.6} parent=0 // pred_fallthru
    _
  %v11 = vld [vmem:[%s0] sm:$0xff]
  %v12 = vld [vmem:[%s0 + $0x8] sm:$0xff]
  %v13 = vld [vmem:[%s0 + $0x10] sm:$0xff]
  %v14 = vld [vmem:[%s0 + $0x18] sm:$0xff]
  %v15 = vld [vmem:[%s0 + $0x20] sm:$0xff]
  %v16 = vld [vmem:[%s0 + $0x28] sm:$0xff]
  %v17 = vld [vmem:[%s0 + $0x30] sm:$0xff]
  %v18 = vld [vmem:[%s0 + $0x38] sm:$0xff]
  %v19 = vld [vmem:[%s0 + $0x40] sm:$0xff]
  %v20 = vld [vmem:[%s0 + $0x48] sm:$0xff]
  %v21 = vld [vmem:[%s0 + $0x50] sm:$0xff]
  %v22 = vld [vmem:[%s0 + $0x58] sm:$0xff]
  %v23 = vld [vmem:[%s0 + $0x60] sm:$0x1]
  %v24 = vld [vmem:[%s0 + $0x68] sm:$0x1]
  %v25 = vld [vmem:[%s0 + $0x70] sm:$0x1]
  %v26 = vld [vmem:[%s0 + $0x78] sm:$0x1]
  %v27 = vld [vmem:[%s0 + $0x80] sm:$0xff]
  %v28 = vld [vmem:[%s0 + $0x88] sm:$0xff]
  %v29 = vld [vmem:[%s0 + $0x90] sm:$0xff]
  %v30 = vld [vmem:[%s0 + $0x98] sm:$0xff]
  %v31 = vld [vmem:[%s0 + $0xa0] sm:$0xff]
  %v32 = vld [vmem:[%s0 + $0xa8] sm:$0xff]
  %v33 = vld [vmem:[%s0 + $0xb0] sm:$0xff]
  %v34 = vld [vmem:[%s0 + $0xb8] sm:$0xff]
  %v35 = vld [vmem:[%s0 + $0xc0] sm:$0xff]
  %v36 = vld [vmem:[%s0 + $0xc8] sm:$0xff]
  %v37 = vld [vmem:[%s0 + $0xd0] sm:$0xff]
  %v38 = vld [vmem:[%s0 + $0xd8] sm:$0xff]
  %v39 = vld [vmem:[%s0 + $0xe0] sm:$0x1]
  %v40 = vld [vmem:[%s0 + $0xe8] sm:$0x1]
  %v41 = vld [vmem:[%s0 + $0xf0] sm:$0x1]
  %v42 = vld [vmem:[%s0 + $0xf8] sm:$0x1]
  %v43 = vld [vmem:[%s1] sm:$0xf]
  %v44 = vld [vmem:[%s1 + $0x4] sm:$0xf]
  %v47 = vperm.slane %v43, 0
  %v48 = vperm.slane %v43, 1
  %v49 = vperm.slane %v43, 2
  %v50 = vperm.slane %v43, 3
  %v51 = vperm.slane %v44, 0
  %v52 = vperm.slane %v44, 1
  %v53 = vperm.slane %v44, 2
  %v54 = vperm.slane %v44, 3
  %v63 = vmul.f32 %v11, %v47
  %v64 = vmul.f32 %v12, %v48
  %v65 = vmul.f32 %v13, %v49
  %v66 = vmul.f32 %v14, %v50
  %v67 = vmul.f32 %v15, %v47
  %v68 = vmul.f32 %v16, %v48
  %v69 = vmul.f32 %v17, %v49
  %v70 = vmul.f32 %v18, %v50
  %v71 = vmul.f32 %v19, %v47
  %v72 = vmul.f32 %v20, %v48
  %v73 = vmul.f32 %v21, %v49
  %v74 = vmul.f32 %v22, %v50
  %v75 = vmul.f32 %v23, %v47
  %v76 = vmul.f32 %v24, %v48
  %v77 = vmul.f32 %v25, %v49
  %v78 = vmul.f32 %v26, %v50
  %v79 = vmul.f32 %v27, %v51
  %v80 = vmul.f32 %v28, %v52
  %v81 = vmul.f32 %v29, %v53
  %v82 = vmul.f32 %v30, %v54
  %v83 = vmul.f32 %v31, %v51
  %v84 = vmul.f32 %v32, %v52
  %v85 = vmul.f32 %v33, %v53
  %v86 = vmul.f32 %v34, %v54
  %v87 = vmul.f32 %v35, %v51
  %v88 = vmul.f32 %v36, %v52
  %v89 = vmul.f32 %v37, %v53
  %v90 = vmul.f32 %v38, %v54
  %v91 = vmul.f32 %v39, %v51
  %v92 = vmul.f32 %v40, %v52
  %v93 = vmul.f32 %v41, %v53
  %v94 = vmul.f32 %v42, %v54
  %v95 = vadd.f32 %v63, %v64
  %v96 = vadd.f32 %v95, %v65
  %v97 = vadd.f32 %v96, %v66
  %98 = vadd.xlane.f32.xlu0 %v97
  %v99 = vpop.xlane.xlu0 %98
  %v100 = vadd.f32 %v67, %v68
  %v101 = vadd.f32 %v100, %v69
  %v102 = vadd.f32 %v101, %v70
  %103 = vadd.xlane.f32.xlu0 %v102
  %v104 = vpop.xlane.xlu0 %103
  %v105 = vadd.f32 %v71, %v72
  %v106 = vadd.f32 %v105, %v73
  %v107 = vadd.f32 %v106, %v74
  %108 = vadd.xlane.f32.xlu0 %v107
  %v109 = vpop.xlane.xlu0 %108
  %vm110 = vcmask 1040384
  %v111 = vsel %vm110, %v75, 0.0
  %v112 = vsel %vm110, %v76, 0.0
  %v113 = vadd.f32 %v111, %v112
  %v114 = vsel %vm110, %v77, 0.0
  %v115 = vadd.f32 %v113, %v114
  %v116 = vsel %vm110, %v78, 0.0
  %v117 = vadd.f32 %v115, %v116
  %118 = vadd.xlane.f32.xlu0 %v117
  %v119 = vpop.xlane.xlu0 %118
  %v120 = vadd.f32 %v79, %v80
  %v121 = vadd.f32 %v120, %v81
  %v122 = vadd.f32 %v121, %v82
  %123 = vadd.xlane.f32.xlu0 %v122
  %v124 = vpop.xlane.xlu0 %123
  %v125 = vadd.f32 %v83, %v84
  %v126 = vadd.f32 %v125, %v85
  %v127 = vadd.f32 %v126, %v86
  %128 = vadd.xlane.f32.xlu0 %v127
  %v129 = vpop.xlane.xlu0 %128
  %v130 = vadd.f32 %v87, %v88
  %v131 = vadd.f32 %v130, %v89
  %v132 = vadd.f32 %v131, %v90
  %133 = vadd.xlane.f32.xlu0 %v132
  %v134 = vpop.xlane.xlu0 %133
  %v135 = vsel %vm110, %v91, 0.0
  %v136 = vsel %vm110, %v92, 0.0
  %v137 = vadd.f32 %v135, %v136
  %v138 = vsel %vm110, %v93, 0.0
  %v139 = vadd.f32 %v137, %v138
  %v140 = vsel %vm110, %v94, 0.0
  %v141 = vadd.f32 %v139, %v140
  %142 = vadd.xlane.f32.xlu0 %v141
  %v143 = vpop.xlane.xlu0 %142
  %v152 = vlaneseq
  %v153 = vand.u32 %v152, 127
  %v154 = vperm.slane %v99, %v153
  %v155 = vadd.s32 %v153, 4294967288
  %v156 = vperm.slane %v104, %v155
  %vm157 = vcmask 130112
  %v158 = vsel %vm157, %v156, %v154
  %v159 = vadd.s32 %v153, 4294967280
  %v160 = vperm.slane %v109, %v159
  %vm161 = vcmask 195712
  %v162 = vsel %vm161, %v160, %v158
  %v163 = vadd.s32 %v153, 4294967272
  %v164 = vperm.slane %v119, %v163
  %vm165 = vcmask 261312
  %v166 = vsel %vm165, %v164, %v162
  %v167 = vperm.slane %v124, %v153
  %v168 = vperm.slane %v129, %v155
  %v169 = vsel %vm157, %v168, %v167
  %v170 = vperm.slane %v134, %v159
  %v171 = vsel %vm161, %v170, %v169
  %v172 = vperm.slane %v143, %v163
  %v173 = vsel %vm165, %v172, %v171
  %vm174 = vcmask 1041409
  %v175 = vsel %vm174, %v173, %v166
  %vm177 = vcmask 197632
  %178 = vst.msk [vmem:[%s2] sm:$0x3] %vm177, %v175
  // Predicated region
  $region10: #{_lambda_.6} parent=0 // pred_check
    _
  $region11: #{_lambda_.6} parent=0 // pred_check_branch
    %180 = sbr.rel (0) target = $region13
  $region12: #{_lambda_.6} parent=0 // pred_region
    _
  $region13: #{_lambda_.6} parent=0 // pred_fallthru
    _
  // Predicated region
  $region14: #{_lambda_.6} parent=0 // pred_check
    _
  $region15: #{_lambda_.6} parent=0 // pred_check_branch
    %182 = sbr.rel (0) target = $region17
  $region16: #{_lambda_.6} parent=0 // pred_region
    _
  $region17: #{_lambda_.6} parent=0 // pred_fallthru
    _

// kernel: _lambda_.7
$region0: #{_lambda_.7}
  #allocation0 [shape = 'u32[]', space=smem, size = 0x4, offset = 0x4, fixed_abs, tag = 'smem constant byte address 0x4 - core index']
  #allocation1 [shape = 'u32[72,128]{1,0:T(1,128)}', space=vmem, size = 0x9000, scoped, tag = 'internal scratch']
  %s0 = inlined_call_operand.vmem [shape: f32[16,512], index: 0, kind: input, shape index: {}]
  %s1 = inlined_call_operand.vmem [shape: f32[16,512], index: 1, kind: input, shape index: {}]
  %s2 = inlined_call_operand.vmem [shape: bf16[512,128], index: 2, kind: input, shape index: {}]
  %s3 = inlined_call_operand.vmem [shape: bf16[512,128], index: 3, kind: input, shape index: {}]
  %s4 = inlined_call_operand.vmem [shape: f32[1,128], index: 4, kind: input, shape index: {}, may-alias: {4,6,8}]
  %s5 = inlined_call_operand.vmem [shape: f32[128,128], index: 5, kind: input, shape index: {}]
  %s6 = inlined_call_operand.vmem [shape: f32[1,128], index: 6, kind: input, shape index: {}, may-alias: {4,6,8}]
  %s7 = inlined_call_operand.vmem [shape: bf16[512,128], index: 7, kind: input, shape index: {}]
  %s8 = inlined_call_operand.vmem [shape: f32[1,128], index: 8, kind: input, shape index: {}, may-alias: {4,6,8}]
  %s9 = inlined_call_operand.vmem [shape: f32[16,128], index: 9, kind: output, shape index: {0}]
  %s10 = inlined_call_operand.vmem [shape: f32[48,128], index: 10, kind: output, shape index: {1}]
  %11 = xla_tuple %s9, %s10
  %s12 = sld [smem:[#allocation0]]
  $region54: #{_lambda_.7} parent=0
    _
  %s14 = ssub.s32 1, %s12
  %s15 = scalar_select 0, %s14, %s12
  // Predicated region
  $region2: #{_lambda_.7} parent=0 // pred_check
    _
  $region3: #{_lambda_.7} parent=0 // pred_check_branch
    %17 = sbr.rel (0) target = $region5
  $region4: #{_lambda_.7} parent=0 // pred_region
    _
  $region5: #{_lambda_.7} parent=0 // pred_fallthru
    _
  // Predicated region
  $region6: #{_lambda_.7} parent=0 // pred_check
    _
  $region7: #{_lambda_.7} parent=0 // pred_check_branch
    %19 = sbr.rel (0) target = $region9
  $region8: #{_lambda_.7} parent=0 // pred_region
    _
  $region9: #{_lambda_.7} parent=0 // pred_fallthru
    _
  // Predicated region
  $region10: #{_lambda_.7} parent=0 // pred_check
    _
  $region11: #{_lambda_.7} parent=0 // pred_check_branch
    %21 = sbr.rel (0) target = $region13
  $region12: #{_lambda_.7} parent=0 // pred_region
    _
  $region13: #{_lambda_.7} parent=0 // pred_fallthru
    _
  // Predicated region
  $region14: #{_lambda_.7} parent=0 // pred_check
    _
  $region15: #{_lambda_.7} parent=0 // pred_check_branch
    %23 = sbr.rel (0) target = $region17
  $region16: #{_lambda_.7} parent=0 // pred_region
    _
  $region17: #{_lambda_.7} parent=0 // pred_fallthru
    _
  // Predicated region
  $region18: #{_lambda_.7} parent=0 // pred_check
    _
  $region19: #{_lambda_.7} parent=0 // pred_check_branch
    %25 = sbr.rel (0) target = $region21
  $region20: #{_lambda_.7} parent=0 // pred_region
    _
  $region21: #{_lambda_.7} parent=0 // pred_fallthru
    _
  // Predicated region
  $region22: #{_lambda_.7} parent=0 // pred_check
    _
  $region23: #{_lambda_.7} parent=0 // pred_check_branch
    %27 = sbr.rel (0) target = $region25
  $region24: #{_lambda_.7} parent=0 // pred_region
    _
  $region25: #{_lambda_.7} parent=0 // pred_fallthru
    _
  // Predicated region
  $region26: #{_lambda_.7} parent=0 // pred_check
    _
  $region27: #{_lambda_.7} parent=0 // pred_check_branch
    %29 = sbr.rel (0) target = $region29
  $region28: #{_lambda_.7} parent=0 // pred_region
    _
  $region29: #{_lambda_.7} parent=0 // pred_fallthru
    _
  // Predicated region
  $region30: #{_lambda_.7} parent=0 // pred_check
    _
  $region31: #{_lambda_.7} parent=0 // pred_check_branch
    %31 = sbr.rel (0) target = $region33
  $region32: #{_lambda_.7} parent=0 // pred_region
    _
  $region33: #{_lambda_.7} parent=0 // pred_fallthru
    _
  // Predicated region
  $region34: #{_lambda_.7} parent=0 // pred_check
    _
  $region35: #{_lambda_.7} parent=0 // pred_check_branch
    %33 = sbr.rel (0) target = $region37
  $region36: #{_lambda_.7} parent=0 // pred_region
    _
  $region37: #{_lambda_.7} parent=0 // pred_fallthru
    _
  %v34 = vld [vmem:[%s0] sm:$0xff]
  %v35 = vld [vmem:[%s0 + $0x8] sm:$0xff]
  %v36 = vld [vmem:[%s0 + $0x10] sm:$0xff]
  %v37 = vld [vmem:[%s0 + $0x18] sm:$0xff]
  %v38 = vld [vmem:[%s0 + $0x20] sm:$0xff]
  %v39 = vld [vmem:[%s0 + $0x28] sm:$0xff]
  %v40 = vld [vmem:[%s0 + $0x30] sm:$0xff]
  %v41 = vld [vmem:[%s0 + $0x38] sm:$0xff]
  %v42 = vpack.c.bf16 %v38, %v34
  %v43 = vpack.c.bf16 %v39, %v35
  %v44 = vpack.c.bf16 %v40, %v36
  %v45 = vpack.c.bf16 %v41, %v37
  %v46 = vld [vmem:[%s1] sm:$0xff]
  %v47 = vld [vmem:[%s1 + $0x8] sm:$0xff]
  %v48 = vld [vmem:[%s1 + $0x10] sm:$0xff]
  %v49 = vld [vmem:[%s1 + $0x18] sm:$0xff]
  %v50 = vld [vmem:[%s1 + $0x20] sm:$0xff]
  %v51 = vld [vmem:[%s1 + $0x28] sm:$0xff]
  %v52 = vld [vmem:[%s1 + $0x30] sm:$0xff]
  %v53 = vld [vmem:[%s1 + $0x38] sm:$0xff]
  %v54 = vpack.c.bf16 %v50, %v46
  %v55 = vpack.c.bf16 %v51, %v47
  %v56 = vpack.c.bf16 %v52, %v48
  %v57 = vpack.c.bf16 %v53, %v49
  %v58 = vld [vmem:[%s7] sm:$0xf]
  %v59 = vld [vmem:[%s7 + $0x4] sm:$0xf]
  %v60 = vld [vmem:[%s7 + $0x8] sm:$0xf]
  %v61 = vld [vmem:[%s7 + $0xc] sm:$0xf]
  %v62 = vld [vmem:[%s7 + $0x10] sm:$0xf]
  %v63 = vld [vmem:[%s7 + $0x14] sm:$0xf]
  %v64 = vld [vmem:[%s7 + $0x18] sm:$0xf]
  %v65 = vld [vmem:[%s7 + $0x1c] sm:$0xf]
  %v66 = vld [vmem:[%s7 + $0x20] sm:$0xf]
  %v67 = vld [vmem:[%s7 + $0x24] sm:$0xf]
  %v68 = vld [vmem:[%s7 + $0x28] sm:$0xf]
  %v69 = vld [vmem:[%s7 + $0x2c] sm:$0xf]
  %v70 = vld [vmem:[%s7 + $0x30] sm:$0xf]
  %v71 = vld [vmem:[%s7 + $0x34] sm:$0xf]
  %v72 = vld [vmem:[%s7 + $0x38] sm:$0xf]
  %v73 = vld [vmem:[%s7 + $0x3c] sm:$0xf]
  %v74 = vld [vmem:[%s7 + $0x40] sm:$0xf]
  %v75 = vld [vmem:[%s7 + $0x44] sm:$0xf]
  %v76 = vld [vmem:[%s7 + $0x48] sm:$0xf]
  %v77 = vld [vmem:[%s7 + $0x4c] sm:$0xf]
  %v78 = vld [vmem:[%s7 + $0x50] sm:$0xf]
  %v79 = vld [vmem:[%s7 + $0x54] sm:$0xf]
  %v80 = vld [vmem:[%s7 + $0x58] sm:$0xf]
  %v81 = vld [vmem:[%s7 + $0x5c] sm:$0xf]
  %v82 = vld [vmem:[%s7 + $0x60] sm:$0xf]
  %v83 = vld [vmem:[%s7 + $0x64] sm:$0xf]
  %v84 = vld [vmem:[%s7 + $0x68] sm:$0xf]
  %v85 = vld [vmem:[%s7 + $0x6c] sm:$0xf]
  %v86 = vld [vmem:[%s7 + $0x70] sm:$0xf]
  %v87 = vld [vmem:[%s7 + $0x74] sm:$0xf]
  %v88 = vld [vmem:[%s7 + $0x78] sm:$0xf]
  %v89 = vld [vmem:[%s7 + $0x7c] sm:$0xf]
  %v90 = vld [vmem:[%s7 + $0x80] sm:$0xf]
  %v91 = vld [vmem:[%s7 + $0x84] sm:$0xf]
  %v92 = vld [vmem:[%s7 + $0x88] sm:$0xf]
  %v93 = vld [vmem:[%s7 + $0x8c] sm:$0xf]
  %v94 = vld [vmem:[%s7 + $0x90] sm:$0xf]
  %v95 = vld [vmem:[%s7 + $0x94] sm:$0xf]
  %v96 = vld [vmem:[%s7 + $0x98] sm:$0xf]
  %v97 = vld [vmem:[%s7 + $0x9c] sm:$0xf]
  %v98 = vld [vmem:[%s7 + $0xa0] sm:$0xf]
  %v99 = vld [vmem:[%s7 + $0xa4] sm:$0xf]
  %v100 = vld [vmem:[%s7 + $0xa8] sm:$0xf]
  %v101 = vld [vmem:[%s7 + $0xac] sm:$0xf]
  %v102 = vld [vmem:[%s7 + $0xb0] sm:$0xf]
  %v103 = vld [vmem:[%s7 + $0xb4] sm:$0xf]
  %v104 = vld [vmem:[%s7 + $0xb8] sm:$0xf]
  %v105 = vld [vmem:[%s7 + $0xbc] sm:$0xf]
  %v106 = vld [vmem:[%s7 + $0xc0] sm:$0xf]
  %v107 = vld [vmem:[%s7 + $0xc4] sm:$0xf]
  %v108 = vld [vmem:[%s7 + $0xc8] sm:$0xf]
  %v109 = vld [vmem:[%s7 + $0xcc] sm:$0xf]
  %v110 = vld [vmem:[%s7 + $0xd0] sm:$0xf]
  %v111 = vld [vmem:[%s7 + $0xd4] sm:$0xf]
  %v112 = vld [vmem:[%s7 + $0xd8] sm:$0xf]
  %v113 = vld [vmem:[%s7 + $0xdc] sm:$0xf]
  %v114 = vld [vmem:[%s7 + $0xe0] sm:$0xf]
  %v115 = vld [vmem:[%s7 + $0xe4] sm:$0xf]
  %v116 = vld [vmem:[%s7 + $0xe8] sm:$0xf]
  %v117 = vld [vmem:[%s7 + $0xec] sm:$0xf]
  %v118 = vld [vmem:[%s7 + $0xf0] sm:$0xf]
  %v119 = vld [vmem:[%s7 + $0xf4] sm:$0xf]
  %v120 = vld [vmem:[%s7 + $0xf8] sm:$0xf]
  %v121 = vld [vmem:[%s7 + $0xfc] sm:$0xf]
  %v122 = vld [vmem:[%s8] sm:$0x1]
  %v124 = vperm.slane %v122, 0
  %v190 = vunpack.c.l.b16 %v58
  %v191 = vunpack.c.l.b16 %v59
  %v192 = vunpack.c.l.b16 %v60
  %v193 = vunpack.c.l.b16 %v61
  %v194 = vunpack.c.l.b16 %v62
  %v195 = vunpack.c.l.b16 %v63
  %v196 = vunpack.c.l.b16 %v64
  %v197 = vunpack.c.l.b16 %v65
  %v198 = vunpack.c.l.b16 %v66
  %v199 = vunpack.c.l.b16 %v67
  %v200 = vunpack.c.l.b16 %v68
  %v201 = vunpack.c.l.b16 %v69
  %v202 = vunpack.c.l.b16 %v70
  %v203 = vunpack.c.l.b16 %v71
  %v204 = vunpack.c.l.b16 %v72
  %v205 = vunpack.c.l.b16 %v73
  %v206 = vunpack.c.l.b16 %v74
  %v207 = vunpack.c.l.b16 %v75
  %v208 = vunpack.c.l.b16 %v76
  %v209 = vunpack.c.l.b16 %v77
  %v210 = vunpack.c.l.b16 %v78
  %v211 = vunpack.c.l.b16 %v79
  %v212 = vunpack.c.l.b16 %v80
  %v213 = vunpack.c.l.b16 %v81
  %v214 = vunpack.c.l.b16 %v82
  %v215 = vunpack.c.l.b16 %v83
  %v216 = vunpack.c.l.b16 %v84
  %v217 = vunpack.c.l.b16 %v85
  %v218 = vunpack.c.l.b16 %v86
  %v219 = vunpack.c.l.b16 %v87
  %v220 = vunpack.c.l.b16 %v88
  %v221 = vunpack.c.l.b16 %v89
  %v222 = vunpack.c.l.b16 %v90
  %v223 = vunpack.c.l.b16 %v91
  %v224 = vunpack.c.l.b16 %v92
  %v225 = vunpack.c.l.b16 %v93
  %v226 = vunpack.c.l.b16 %v94
  %v227 = vunpack.c.l.b16 %v95
  %v228 = vunpack.c.l.b16 %v96
  %v229 = vunpack.c.l.b16 %v97
  %v230 = vunpack.c.l.b16 %v98
  %v231 = vunpack.c.l.b16 %v99
  %v232 = vunpack.c.l.b16 %v100
  %v233 = vunpack.c.l.b16 %v101
  %v234 = vunpack.c.l.b16 %v102
  %v235 = vunpack.c.l.b16 %v103
  %v236 = vunpack.c.l.b16 %v104
  %v237 = vunpack.c.l.b16 %v105
  %v238 = vunpack.c.l.b16 %v106
  %v239 = vunpack.c.l.b16 %v107
  %v240 = vunpack.c.l.b16 %v108
  %v241 = vunpack.c.l.b16 %v109
  %v242 = vunpack.c.l.b16 %v110
  %v243 = vunpack.c.l.b16 %v111
  %v244 = vunpack.c.l.b16 %v112
  %v245 = vunpack.c.l.b16 %v113
  %v246 = vunpack.c.l.b16 %v114
  %v247 = vunpack.c.l.b16 %v115
  %v248 = vunpack.c.l.b16 %v116
  %v249 = vunpack.c.l.b16 %v117
  %v250 = vunpack.c.l.b16 %v118
  %v251 = vunpack.c.l.b16 %v119
  %v252 = vunpack.c.l.b16 %v120
  %v253 = vunpack.c.l.b16 %v121
  %v254 = vpack.c.b16 %v191, %v190
  %v255 = vpack.c.b16 %v193, %v192
  %v256 = vpack.c.b16 %v195, %v194
  %v257 = vpack.c.b16 %v197, %v196
  %v258 = vpack.c.b16 %v199, %v198
  %v259 = vpack.c.b16 %v201, %v200
  %v260 = vpack.c.b16 %v203, %v202
  %v261 = vpack.c.b16 %v205, %v204
  %v262 = vpack.c.b16 %v207, %v206
  %v263 = vpack.c.b16 %v209, %v208
  %v264 = vpack.c.b16 %v211, %v210
  %v265 = vpack.c.b16 %v213, %v212
  %v266 = vpack.c.b16 %v215, %v214
  %v267 = vpack.c.b16 %v217, %v216
  %v268 = vpack.c.b16 %v219, %v218
  %v269 = vpack.c.b16 %v221, %v220
  %v270 = vpack.c.b16 %v223, %v222
  %v271 = vpack.c.b16 %v225, %v224
  %v272 = vpack.c.b16 %v227, %v226
  %v273 = vpack.c.b16 %v229, %v228
  %v274 = vpack.c.b16 %v231, %v230
  %v275 = vpack.c.b16 %v233, %v232
  %v276 = vpack.c.b16 %v235, %v234
  %v277 = vpack.c.b16 %v237, %v236
  %v278 = vpack.c.b16 %v239, %v238
  %v279 = vpack.c.b16 %v241, %v240
  %v280 = vpack.c.b16 %v243, %v242
  %v281 = vpack.c.b16 %v245, %v244
  %v282 = vpack.c.b16 %v247, %v246
  %v283 = vpack.c.b16 %v249, %v248
  %v284 = vpack.c.b16 %v251, %v250
  %v285 = vpack.c.b16 %v253, %v252
  %318 = vmatpush.bf16.msra.mxu0 %v261
  %319 = vmatpush.bf16.msra.mxu0 %v260
  %320 = vmatpush.bf16.msra.mxu0 %v259
  %321 = vmatpush.bf16.msra.mxu0 %v258
  %322 = vmatpush.bf16.msra.mxu0 %v257
  %323 = vmatpush.bf16.msra.mxu0 %v256
  %324 = vmatpush.bf16.msra.mxu0 %v255
  %325 = vmatpush.bf16.msra.mxu0 %v254
  %326 = vmatmul.bf16.gmra.mxu0 %v42
  %v327 = vpop.f32.mrf.mxu0
  %v328 = vadd.f32 %v124, %v327
  %v329 = vpop.f32.mrf.mxu0
  %v330 = vadd.f32 %v124, %v329
  %331 = vdwg.mxu0
  %332 = vmatpush.bf16.msra.mxu0 %v269
  %333 = vmatpush.bf16.msra.mxu0 %v268
  %334 = vmatpush.bf16.msra.mxu0 %v267
  %335 = vmatpush.bf16.msra.mxu0 %v266
  %336 = vmatpush.bf16.msra.mxu0 %v265
  %337 = vmatpush.bf16.msra.mxu0 %v264
  %338 = vmatpush.bf16.msra.mxu0 %v263
  %339 = vmatpush.bf16.msra.mxu0 %v262
  %340 = vmatmul.bf16.gmra.mxu0 %v43
  %v341 = vpop.f32.mrf.mxu0
  %v342 = vadd.f32 %v328, %v341
  %v343 = vpop.f32.mrf.mxu0
  %v344 = vadd.f32 %v330, %v343
  %345 = vdwg.mxu0
  %346 = vmatpush.bf16.msra.mxu0 %v277
  %347 = vmatpush.bf16.msra.mxu0 %v276
  %348 = vmatpush.bf16.msra.mxu0 %v275
  %349 = vmatpush.bf16.msra.mxu0 %v274
  %350 = vmatpush.bf16.msra.mxu0 %v273
  %351 = vmatpush.bf16.msra.mxu0 %v272
  %352 = vmatpush.bf16.msra.mxu0 %v271
  %353 = vmatpush.bf16.msra.mxu0 %v270
  %354 = vmatmul.bf16.gmra.mxu0 %v44
  %v355 = vpop.f32.mrf.mxu0
  %v356 = vadd.f32 %v342, %v355
  %v357 = vpop.f32.mrf.mxu0
  %v358 = vadd.f32 %v344, %v357
  %359 = vdwg.mxu0
  %360 = vmatpush.bf16.msra.mxu0 %v285
  %361 = vmatpush.bf16.msra.mxu0 %v284
  %362 = vmatpush.bf16.msra.mxu0 %v283
  %363 = vmatpush.bf16.msra.mxu0 %v282
  %364 = vmatpush.bf16.msra.mxu0 %v281
  %365 = vmatpush.bf16.msra.mxu0 %v280
  %366 = vmatpush.bf16.msra.mxu0 %v279
  %367 = vmatpush.bf16.msra.mxu0 %v278
  %368 = vmatmul.bf16.gmra.mxu0 %v45
  %v369 = vpop.f32.mrf.mxu0
  %v370 = vadd.f32 %v356, %v369
  %v371 = vpop.f32.mrf.mxu0
  %v372 = vadd.f32 %v358, %v371
  %373 = vdwg.mxu0
  %374 = vst [vmem:[%s9] sm:$0xff] %v370
  %375 = vst [vmem:[%s9 + $0x8] sm:$0xff] %v372
  %v376 = vld [vmem:[%s2] sm:$0xf]
  %v377 = vld [vmem:[%s2 + $0x4] sm:$0xf]
  %v378 = vld [vmem:[%s2 + $0x8] sm:$0xf]
  %v379 = vld [vmem:[%s2 + $0xc] sm:$0xf]
  %v380 = vld [vmem:[%s2 + $0x10] sm:$0xf]
  %v381 = vld [vmem:[%s2 + $0x14] sm:$0xf]
  %v382 = vld [vmem:[%s2 + $0x18] sm:$0xf]
  %v383 = vld [vmem:[%s2 + $0x1c] sm:$0xf]
  %v384 = vld [vmem:[%s2 + $0x20] sm:$0xf]
  %v385 = vld [vmem:[%s2 + $0x24] sm:$0xf]
  %v386 = vld [vmem:[%s2 + $0x28] sm:$0xf]
  %v387 = vld [vmem:[%s2 + $0x2c] sm:$0xf]
  %v388 = vld [vmem:[%s2 + $0x30] sm:$0xf]
  %v389 = vld [vmem:[%s2 + $0x34] sm:$0xf]
  %v390 = vld [vmem:[%s2 + $0x38] sm:$0xf]
  %v391 = vld [vmem:[%s2 + $0x3c] sm:$0xf]
  %v392 = vld [vmem:[%s2 + $0x40] sm:$0xf]
  %v393 = vld [vmem:[%s2 + $0x44] sm:$0xf]
  %v394 = vld [vmem:[%s2 + $0x48] sm:$0xf]
  %v395 = vld [vmem:[%s2 + $0x4c] sm:$0xf]
  %v396 = vld [vmem:[%s2 + $0x50] sm:$0xf]
  %v397 = vld [vmem:[%s2 + $0x54] sm:$0xf]
  %v398 = vld [vmem:[%s2 + $0x58] sm:$0xf]
  %v399 = vld [vmem:[%s2 + $0x5c] sm:$0xf]
  %v400 = vld [vmem:[%s2 + $0x60] sm:$0xf]
  %v401 = vld [vmem:[%s2 + $0x64] sm:$0xf]
  %v402 = vld [vmem:[%s2 + $0x68] sm:$0xf]
  %v403 = vld [vmem:[%s2 + $0x6c] sm:$0xf]
  %v404 = vld [vmem:[%s2 + $0x70] sm:$0xf]
  %v405 = vld [vmem:[%s2 + $0x74] sm:$0xf]
  %v406 = vld [vmem:[%s2 + $0x78] sm:$0xf]
  %v407 = vld [vmem:[%s2 + $0x7c] sm:$0xf]
  %v408 = vld [vmem:[%s2 + $0x80] sm:$0xf]
  %v409 = vld [vmem:[%s2 + $0x84] sm:$0xf]
  %v410 = vld [vmem:[%s2 + $0x88] sm:$0xf]
  %v411 = vld [vmem:[%s2 + $0x8c] sm:$0xf]
  %v412 = vld [vmem:[%s2 + $0x90] sm:$0xf]
  %v413 = vld [vmem:[%s2 + $0x94] sm:$0xf]
  %v414 = vld [vmem:[%s2 + $0x98] sm:$0xf]
  %v415 = vld [vmem:[%s2 + $0x9c] sm:$0xf]
  %v416 = vld [vmem:[%s2 + $0xa0] sm:$0xf]
  %v417 = vld [vmem:[%s2 + $0xa4] sm:$0xf]
  %v418 = vld [vmem:[%s2 + $0xa8] sm:$0xf]
  %v419 = vld [vmem:[%s2 + $0xac] sm:$0xf]
  %v420 = vld [vmem:[%s2 + $0xb0] sm:$0xf]
  %v421 = vld [vmem:[%s2 + $0xb4] sm:$0xf]
  %v422 = vld [vmem:[%s2 + $0xb8] sm:$0xf]
  %v423 = vld [vmem:[%s2 + $0xbc] sm:$0xf]
  %v424 = vld [vmem:[%s2 + $0xc0] sm:$0xf]
  %v425 = vld [vmem:[%s2 + $0xc4] sm:$0xf]
  %v426 = vld [vmem:[%s2 + $0xc8] sm:$0xf]
  %v427 = vld [vmem:[%s2 + $0xcc] sm:$0xf]
  %v428 = vld [vmem:[%s2 + $0xd0] sm:$0xf]
  %v429 = vld [vmem:[%s2 + $0xd4] sm:$0xf]
  %v430 = vld [vmem:[%s2 + $0xd8] sm:$0xf]
  %v431 = vld [vmem:[%s2 + $0xdc] sm:$0xf]
  %v432 = vld [vmem:[%s2 + $0xe0] sm:$0xf]
  %v433 = vld [vmem:[%s2 + $0xe4] sm:$0xf]
  %v434 = vld [vmem:[%s2 + $0xe8] sm:$0xf]
  %v435 = vld [vmem:[%s2 + $0xec] sm:$0xf]
  %v436 = vld [vmem:[%s2 + $0xf0] sm:$0xf]
  %v437 = vld [vmem:[%s2 + $0xf4] sm:$0xf]
  %v438 = vld [vmem:[%s2 + $0xf8] sm:$0xf]
  %v439 = vld [vmem:[%s2 + $0xfc] sm:$0xf]
  %v504 = vunpack.c.l.b16 %v376
  %v505 = vunpack.c.l.b16 %v377
  %v506 = vunpack.c.l.b16 %v378
  %v507 = vunpack.c.l.b16 %v379
  %v508 = vunpack.c.l.b16 %v380
  %v509 = vunpack.c.l.b16 %v381
  %v510 = vunpack.c.l.b16 %v382
  %v511 = vunpack.c.l.b16 %v383
  %v512 = vunpack.c.l.b16 %v384
  %v513 = vunpack.c.l.b16 %v385
  %v514 = vunpack.c.l.b16 %v386
  %v515 = vunpack.c.l.b16 %v387
  %v516 = vunpack.c.l.b16 %v388
  %v517 = vunpack.c.l.b16 %v389
  %v518 = vunpack.c.l.b16 %v390
  %v519 = vunpack.c.l.b16 %v391
  %v520 = vunpack.c.l.b16 %v392
  %v521 = vunpack.c.l.b16 %v393
  %v522 = vunpack.c.l.b16 %v394
  %v523 = vunpack.c.l.b16 %v395
  %v524 = vunpack.c.l.b16 %v396
  %v525 = vunpack.c.l.b16 %v397
  %v526 = vunpack.c.l.b16 %v398
  %v527 = vunpack.c.l.b16 %v399
  %v528 = vunpack.c.l.b16 %v400
  %v529 = vunpack.c.l.b16 %v401
  %v530 = vunpack.c.l.b16 %v402
  %v531 = vunpack.c.l.b16 %v403
  %v532 = vunpack.c.l.b16 %v404
  %v533 = vunpack.c.l.b16 %v405
  %v534 = vunpack.c.l.b16 %v406
  %v535 = vunpack.c.l.b16 %v407
  %v536 = vunpack.c.l.b16 %v408
  %v537 = vunpack.c.l.b16 %v409
  %v538 = vunpack.c.l.b16 %v410
  %v539 = vunpack.c.l.b16 %v411
  %v540 = vunpack.c.l.b16 %v412
  %v541 = vunpack.c.l.b16 %v413
  %v542 = vunpack.c.l.b16 %v414
  %v543 = vunpack.c.l.b16 %v415
  %v544 = vunpack.c.l.b16 %v416
  %v545 = vunpack.c.l.b16 %v417
  %v546 = vunpack.c.l.b16 %v418
  %v547 = vunpack.c.l.b16 %v419
  %v548 = vunpack.c.l.b16 %v420
  %v549 = vunpack.c.l.b16 %v421
  %v550 = vunpack.c.l.b16 %v422
  %v551 = vunpack.c.l.b16 %v423
  %v552 = vunpack.c.l.b16 %v424
  %v553 = vunpack.c.l.b16 %v425
  %v554 = vunpack.c.l.b16 %v426
  %v555 = vunpack.c.l.b16 %v427
  %v556 = vunpack.c.l.b16 %v428
  %v557 = vunpack.c.l.b16 %v429
  %v558 = vunpack.c.l.b16 %v430
  %v559 = vunpack.c.l.b16 %v431
  %v560 = vunpack.c.l.b16 %v432
  %v561 = vunpack.c.l.b16 %v433
  %v562 = vunpack.c.l.b16 %v434
  %v563 = vunpack.c.l.b16 %v435
  %v564 = vunpack.c.l.b16 %v436
  %v565 = vunpack.c.l.b16 %v437
  %v566 = vunpack.c.l.b16 %v438
  %v567 = vunpack.c.l.b16 %v439
  %v568 = vpack.c.b16 %v505, %v504
  %v569 = vpack.c.b16 %v507, %v506
  %v570 = vpack.c.b16 %v509, %v508
  %v571 = vpack.c.b16 %v511, %v510
  %v572 = vpack.c.b16 %v513, %v512
  %v573 = vpack.c.b16 %v515, %v514
  %v574 = vpack.c.b16 %v517, %v516
  %v575 = vpack.c.b16 %v519, %v518
  %v576 = vpack.c.b16 %v521, %v520
  %v577 = vpack.c.b16 %v523, %v522
  %v578 = vpack.c.b16 %v525, %v524
  %v579 = vpack.c.b16 %v527, %v526
  %v580 = vpack.c.b16 %v529, %v528
  %v581 = vpack.c.b16 %v531, %v530
  %v582 = vpack.c.b16 %v533, %v532
  %v583 = vpack.c.b16 %v535, %v534
  %v584 = vpack.c.b16 %v537, %v536
  %v585 = vpack.c.b16 %v539, %v538
  %v586 = vpack.c.b16 %v541, %v540
  %v587 = vpack.c.b16 %v543, %v542
  %v588 = vpack.c.b16 %v545, %v544
  %v589 = vpack.c.b16 %v547, %v546
  %v590 = vpack.c.b16 %v549, %v548
  %v591 = vpack.c.b16 %v551, %v550
  %v592 = vpack.c.b16 %v553, %v552
  %v593 = vpack.c.b16 %v555, %v554
  %v594 = vpack.c.b16 %v557, %v556
  %v595 = vpack.c.b16 %v559, %v558
  %v596 = vpack.c.b16 %v561, %v560
  %v597 = vpack.c.b16 %v563, %v562
  %v598 = vpack.c.b16 %v565, %v564
  %v599 = vpack.c.b16 %v567, %v566
  %632 = vmatpush.bf16.msra.mxu0 %v575
  %633 = vmatpush.bf16.msra.mxu0 %v574
  %634 = vmatpush.bf16.msra.mxu0 %v573
  %635 = vmatpush.bf16.msra.mxu0 %v572
  %636 = vmatpush.bf16.msra.mxu0 %v571
  %637 = vmatpush.bf16.msra.mxu0 %v570
  %638 = vmatpush.bf16.msra.mxu0 %v569
  %639 = vmatpush.bf16.msra.mxu0 %v568
  %640 = vmatmul.bf16.gmra.mxu0 %v42
  %v641 = vpop.f32.mrf.mxu0
  %v642 = vadd.f32 0.0, %v641
  %v643 = vpop.f32.mrf.mxu0
  %v644 = vadd.f32 0.0, %v643
  %645 = vdwg.mxu0
  %646 = vmatpush.bf16.msra.mxu0 %v583
  %647 = vmatpush.bf16.msra.mxu0 %v582
  %648 = vmatpush.bf16.msra.mxu0 %v581
  %649 = vmatpush.bf16.msra.mxu0 %v580
  %650 = vmatpush.bf16.msra.mxu0 %v579
  %651 = vmatpush.bf16.msra.mxu0 %v578
  %652 = vmatpush.bf16.msra.mxu0 %v577
  %653 = vmatpush.bf16.msra.mxu0 %v576
  %654 = vmatmul.bf16.gmra.mxu0 %v43
  %v655 = vpop.f32.mrf.mxu0
  %v656 = vadd.f32 %v642, %v655
  %v657 = vpop.f32.mrf.mxu0
  %v658 = vadd.f32 %v644, %v657
  %659 = vdwg.mxu0
  %660 = vmatpush.bf16.msra.mxu0 %v591
  %661 = vmatpush.bf16.msra.mxu0 %v590
  %662 = vmatpush.bf16.msra.mxu0 %v589
  %663 = vmatpush.bf16.msra.mxu0 %v588
  %664 = vmatpush.bf16.msra.mxu0 %v587
  %665 = vmatpush.bf16.msra.mxu0 %v586
  %666 = vmatpush.bf16.msra.mxu0 %v585
  %667 = vmatpush.bf16.msra.mxu0 %v584
  %668 = vmatmul.bf16.gmra.mxu0 %v44
  %v669 = vpop.f32.mrf.mxu0
  %v670 = vadd.f32 %v656, %v669
  %v671 = vpop.f32.mrf.mxu0
  %v672 = vadd.f32 %v658, %v671
  %673 = vdwg.mxu0
  %674 = vmatpush.bf16.msra.mxu0 %v599
  %675 = vmatpush.bf16.msra.mxu0 %v598
  %676 = vmatpush.bf16.msra.mxu0 %v597
  %677 = vmatpush.bf16.msra.mxu0 %v596
  %678 = vmatpush.bf16.msra.mxu0 %v595
  %679 = vmatpush.bf16.msra.mxu0 %v594
  %680 = vmatpush.bf16.msra.mxu0 %v593
  %681 = vmatpush.bf16.msra.mxu0 %v592
  %682 = vmatmul.bf16.gmra.mxu0 %v45
  %v683 = vpop.f32.mrf.mxu0
  %v684 = vadd.f32 %v670, %v683
  %v685 = vpop.f32.mrf.mxu0
  %v686 = vadd.f32 %v672, %v685
  %687 = vdwg.mxu0
  %v688 = vld [vmem:[%s3] sm:$0xf]
  %v689 = vld [vmem:[%s3 + $0x4] sm:$0xf]
  %v690 = vld [vmem:[%s3 + $0x8] sm:$0xf]
  %v691 = vld [vmem:[%s3 + $0xc] sm:$0xf]
  %v692 = vld [vmem:[%s3 + $0x10] sm:$0xf]
  %v693 = vld [vmem:[%s3 + $0x14] sm:$0xf]
  %v694 = vld [vmem:[%s3 + $0x18] sm:$0xf]
  %v695 = vld [vmem:[%s3 + $0x1c] sm:$0xf]
  %v696 = vld [vmem:[%s3 + $0x20] sm:$0xf]
  %v697 = vld [vmem:[%s3 + $0x24] sm:$0xf]
  %v698 = vld [vmem:[%s3 + $0x28] sm:$0xf]
  %v699 = vld [vmem:[%s3 + $0x2c] sm:$0xf]
  %v700 = vld [vmem:[%s3 + $0x30] sm:$0xf]
  %v701 = vld [vmem:[%s3 + $0x34] sm:$0xf]
  %v702 = vld [vmem:[%s3 + $0x38] sm:$0xf]
  %v703 = vld [vmem:[%s3 + $0x3c] sm:$0xf]
  %v704 = vld [vmem:[%s3 + $0x40] sm:$0xf]
  %v705 = vld [vmem:[%s3 + $0x44] sm:$0xf]
  %v706 = vld [vmem:[%s3 + $0x48] sm:$0xf]
  %v707 = vld [vmem:[%s3 + $0x4c] sm:$0xf]
  %v708 = vld [vmem:[%s3 + $0x50] sm:$0xf]
  %v709 = vld [vmem:[%s3 + $0x54] sm:$0xf]
  %v710 = vld [vmem:[%s3 + $0x58] sm:$0xf]
  %v711 = vld [vmem:[%s3 + $0x5c] sm:$0xf]
  %v712 = vld [vmem:[%s3 + $0x60] sm:$0xf]
  %v713 = vld [vmem:[%s3 + $0x64] sm:$0xf]
  %v714 = vld [vmem:[%s3 + $0x68] sm:$0xf]
  %v715 = vld [vmem:[%s3 + $0x6c] sm:$0xf]
  %v716 = vld [vmem:[%s3 + $0x70] sm:$0xf]
  %v717 = vld [vmem:[%s3 + $0x74] sm:$0xf]
  %v718 = vld [vmem:[%s3 + $0x78] sm:$0xf]
  %v719 = vld [vmem:[%s3 + $0x7c] sm:$0xf]
  %v720 = vld [vmem:[%s3 + $0x80] sm:$0xf]
  %v721 = vld [vmem:[%s3 + $0x84] sm:$0xf]
  %v722 = vld [vmem:[%s3 + $0x88] sm:$0xf]
  %v723 = vld [vmem:[%s3 + $0x8c] sm:$0xf]
  %v724 = vld [vmem:[%s3 + $0x90] sm:$0xf]
  %v725 = vld [vmem:[%s3 + $0x94] sm:$0xf]
  %v726 = vld [vmem:[%s3 + $0x98] sm:$0xf]
  %v727 = vld [vmem:[%s3 + $0x9c] sm:$0xf]
  %v728 = vld [vmem:[%s3 + $0xa0] sm:$0xf]
  %v729 = vld [vmem:[%s3 + $0xa4] sm:$0xf]
  %v730 = vld [vmem:[%s3 + $0xa8] sm:$0xf]
  %v731 = vld [vmem:[%s3 + $0xac] sm:$0xf]
  %v732 = vld [vmem:[%s3 + $0xb0] sm:$0xf]
  %v733 = vld [vmem:[%s3 + $0xb4] sm:$0xf]
  %v734 = vld [vmem:[%s3 + $0xb8] sm:$0xf]
  %v735 = vld [vmem:[%s3 + $0xbc] sm:$0xf]
  %v736 = vld [vmem:[%s3 + $0xc0] sm:$0xf]
  %v737 = vld [vmem:[%s3 + $0xc4] sm:$0xf]
  %v738 = vld [vmem:[%s3 + $0xc8] sm:$0xf]
  %v739 = vld [vmem:[%s3 + $0xcc] sm:$0xf]
  %v740 = vld [vmem:[%s3 + $0xd0] sm:$0xf]
  %v741 = vld [vmem:[%s3 + $0xd4] sm:$0xf]
  %v742 = vld [vmem:[%s3 + $0xd8] sm:$0xf]
  %v743 = vld [vmem:[%s3 + $0xdc] sm:$0xf]
  %v744 = vld [vmem:[%s3 + $0xe0] sm:$0xf]
  %v745 = vld [vmem:[%s3 + $0xe4] sm:$0xf]
  %v746 = vld [vmem:[%s3 + $0xe8] sm:$0xf]
  %v747 = vld [vmem:[%s3 + $0xec] sm:$0xf]
  %v748 = vld [vmem:[%s3 + $0xf0] sm:$0xf]
  %v749 = vld [vmem:[%s3 + $0xf4] sm:$0xf]
  %v750 = vld [vmem:[%s3 + $0xf8] sm:$0xf]
  %v751 = vld [vmem:[%s3 + $0xfc] sm:$0xf]
  %v816 = vunpack.c.l.b16 %v688
  %v817 = vunpack.c.l.b16 %v689
  %v818 = vunpack.c.l.b16 %v690
  %v819 = vunpack.c.l.b16 %v691
  %v820 = vunpack.c.l.b16 %v692
  %v821 = vunpack.c.l.b16 %v693
  %v822 = vunpack.c.l.b16 %v694
  %v823 = vunpack.c.l.b16 %v695
  %v824 = vunpack.c.l.b16 %v696
  %v825 = vunpack.c.l.b16 %v697
  %v826 = vunpack.c.l.b16 %v698
  %v827 = vunpack.c.l.b16 %v699
  %v828 = vunpack.c.l.b16 %v700
  %v829 = vunpack.c.l.b16 %v701
  %v830 = vunpack.c.l.b16 %v702
  %v831 = vunpack.c.l.b16 %v703
  %v832 = vunpack.c.l.b16 %v704
  %v833 = vunpack.c.l.b16 %v705
  %v834 = vunpack.c.l.b16 %v706
  %v835 = vunpack.c.l.b16 %v707
  %v836 = vunpack.c.l.b16 %v708
  %v837 = vunpack.c.l.b16 %v709
  %v838 = vunpack.c.l.b16 %v710
  %v839 = vunpack.c.l.b16 %v711
  %v840 = vunpack.c.l.b16 %v712
  %v841 = vunpack.c.l.b16 %v713
  %v842 = vunpack.c.l.b16 %v714
  %v843 = vunpack.c.l.b16 %v715
  %v844 = vunpack.c.l.b16 %v716
  %v845 = vunpack.c.l.b16 %v717
  %v846 = vunpack.c.l.b16 %v718
  %v847 = vunpack.c.l.b16 %v719
  %v848 = vunpack.c.l.b16 %v720
  %v849 = vunpack.c.l.b16 %v721
  %v850 = vunpack.c.l.b16 %v722
  %v851 = vunpack.c.l.b16 %v723
  %v852 = vunpack.c.l.b16 %v724
  %v853 = vunpack.c.l.b16 %v725
  %v854 = vunpack.c.l.b16 %v726
  %v855 = vunpack.c.l.b16 %v727
  %v856 = vunpack.c.l.b16 %v728
  %v857 = vunpack.c.l.b16 %v729
  %v858 = vunpack.c.l.b16 %v730
  %v859 = vunpack.c.l.b16 %v731
  %v860 = vunpack.c.l.b16 %v732
  %v861 = vunpack.c.l.b16 %v733
  %v862 = vunpack.c.l.b16 %v734
  %v863 = vunpack.c.l.b16 %v735
  %v864 = vunpack.c.l.b16 %v736
  %v865 = vunpack.c.l.b16 %v737
  %v866 = vunpack.c.l.b16 %v738
  %v867 = vunpack.c.l.b16 %v739
  %v868 = vunpack.c.l.b16 %v740
  %v869 = vunpack.c.l.b16 %v741
  %v870 = vunpack.c.l.b16 %v742
  %v871 = vunpack.c.l.b16 %v743
  %v872 = vunpack.c.l.b16 %v744
  %v873 = vunpack.c.l.b16 %v745
  %v874 = vunpack.c.l.b16 %v746
  %v875 = vunpack.c.l.b16 %v747
  %v876 = vunpack.c.l.b16 %v748
  %v877 = vunpack.c.l.b16 %v749
  %v878 = vunpack.c.l.b16 %v750
  %v879 = vunpack.c.l.b16 %v751
  %v880 = vpack.c.b16 %v817, %v816
  %v881 = vpack.c.b16 %v819, %v818
  %v882 = vpack.c.b16 %v821, %v820
  %v883 = vpack.c.b16 %v823, %v822
  %v884 = vpack.c.b16 %v825, %v824
  %v885 = vpack.c.b16 %v827, %v826
  %v886 = vpack.c.b16 %v829, %v828
  %v887 = vpack.c.b16 %v831, %v830
  %v888 = vpack.c.b16 %v833, %v832
  %v889 = vpack.c.b16 %v835, %v834
  %v890 = vpack.c.b16 %v837, %v836
  %v891 = vpack.c.b16 %v839, %v838
  %v892 = vpack.c.b16 %v841, %v840
  %v893 = vpack.c.b16 %v843, %v842
  %v894 = vpack.c.b16 %v845, %v844
  %v895 = vpack.c.b16 %v847, %v846
  %v896 = vpack.c.b16 %v849, %v848
  %v897 = vpack.c.b16 %v851, %v850
  %v898 = vpack.c.b16 %v853, %v852
  %v899 = vpack.c.b16 %v855, %v854
  %v900 = vpack.c.b16 %v857, %v856
  %v901 = vpack.c.b16 %v859, %v858
  %v902 = vpack.c.b16 %v861, %v860
  %v903 = vpack.c.b16 %v863, %v862
  %v904 = vpack.c.b16 %v865, %v864
  %v905 = vpack.c.b16 %v867, %v866
  %v906 = vpack.c.b16 %v869, %v868
  %v907 = vpack.c.b16 %v871, %v870
  %v908 = vpack.c.b16 %v873, %v872
  %v909 = vpack.c.b16 %v875, %v874
  %v910 = vpack.c.b16 %v877, %v876
  %v911 = vpack.c.b16 %v879, %v878
  %944 = vmatpush.bf16.msra.mxu0 %v887
  %945 = vmatpush.bf16.msra.mxu0 %v886
  %946 = vmatpush.bf16.msra.mxu0 %v885
  %947 = vmatpush.bf16.msra.mxu0 %v884
  %948 = vmatpush.bf16.msra.mxu0 %v883
  %949 = vmatpush.bf16.msra.mxu0 %v882
  %950 = vmatpush.bf16.msra.mxu0 %v881
  %951 = vmatpush.bf16.msra.mxu0 %v880
  %952 = vmatmul.bf16.gmra.mxu0 %v54
  %v953 = vpop.f32.mrf.mxu0
  %v954 = vadd.f32 0.0, %v953
  %v955 = vpop.f32.mrf.mxu0
  %v956 = vadd.f32 0.0, %v955
  %957 = vdwg.mxu0
  %958 = vmatpush.bf16.msra.mxu0 %v895
  %959 = vmatpush.bf16.msra.mxu0 %v894
  %960 = vmatpush.bf16.msra.mxu0 %v893
  %961 = vmatpush.bf16.msra.mxu0 %v892
  %962 = vmatpush.bf16.msra.mxu0 %v891
  %963 = vmatpush.bf16.msra.mxu0 %v890
  %964 = vmatpush.bf16.msra.mxu0 %v889
  %965 = vmatpush.bf16.msra.mxu0 %v888
  %966 = vmatmul.bf16.gmra.mxu0 %v55
  %v967 = vpop.f32.mrf.mxu0
  %v968 = vadd.f32 %v954, %v967
  %v969 = vpop.f32.mrf.mxu0
  %v970 = vadd.f32 %v956, %v969
  %971 = vdwg.mxu0
  %972 = vmatpush.bf16.msra.mxu0 %v903
  %973 = vmatpush.bf16.msra.mxu0 %v902
  %974 = vmatpush.bf16.msra.mxu0 %v901
  %975 = vmatpush.bf16.msra.mxu0 %v900
  %976 = vmatpush.bf16.msra.mxu0 %v899
  %977 = vmatpush.bf16.msra.mxu0 %v898
  %978 = vmatpush.bf16.msra.mxu0 %v897
  %979 = vmatpush.bf16.msra.mxu0 %v896
  %980 = vmatmul.bf16.gmra.mxu0 %v56
  %v981 = vpop.f32.mrf.mxu0
  %v982 = vadd.f32 %v968, %v981
  %v983 = vpop.f32.mrf.mxu0
  %v984 = vadd.f32 %v970, %v983
  %985 = vdwg.mxu0
  %986 = vmatpush.bf16.msra.mxu0 %v911
  %987 = vmatpush.bf16.msra.mxu0 %v910
  %988 = vmatpush.bf16.msra.mxu0 %v909
  %989 = vmatpush.bf16.msra.mxu0 %v908
  %990 = vmatpush.bf16.msra.mxu0 %v907
  %991 = vmatpush.bf16.msra.mxu0 %v906
  %992 = vmatpush.bf16.msra.mxu0 %v905
  %993 = vmatpush.bf16.msra.mxu0 %v904
  %994 = vmatmul.bf16.gmra.mxu0 %v57
  %v995 = vpop.f32.mrf.mxu0
  %v996 = vadd.f32 %v982, %v995
  %v997 = vpop.f32.mrf.mxu0
  %v998 = vadd.f32 %v984, %v997
  %999 = vdwg.mxu0
  %v1000 = vld [vmem:[%s4] sm:$0x1]
  %v1001 = vperm.slane %v996, 0
  %v1002 = vadd.f32 %v684, %v1001
  %v1003 = vperm.slane %v998, 0
  %v1004 = vadd.f32 %v686, %v1003
  %v1006 = vperm.slane %v1000, 0
  %v1008 = vadd.f32 %v1002, %v1006
  %v1009 = vadd.f32 %v1004, %v1006
  %v1010 = vmax.f32 %v1008, 0.0
  %v1011 = vmax.f32 %v1009, 0.0
  %v1012 = vld [vmem:[%s5] sm:$0xff]
  %v1013 = vld [vmem:[%s5 + $0x8] sm:$0xff]
  %v1014 = vld [vmem:[%s5 + $0x10] sm:$0xff]
  %v1015 = vld [vmem:[%s5 + $0x18] sm:$0xff]
  %v1016 = vld [vmem:[%s5 + $0x20] sm:$0xff]
  %v1017 = vld [vmem:[%s5 + $0x28] sm:$0xff]
  %v1018 = vld [vmem:[%s5 + $0x30] sm:$0xff]
  %v1019 = vld [vmem:[%s5 + $0x38] sm:$0xff]
  %v1020 = vld [vmem:[%s5 + $0x40] sm:$0xff]
  %v1021 = vld [vmem:[%s5 + $0x48] sm:$0xff]
  %v1022 = vld [vmem:[%s5 + $0x50] sm:$0xff]
  %v1023 = vld [vmem:[%s5 + $0x58] sm:$0xff]
  %v1024 = vld [vmem:[%s5 + $0x60] sm:$0xff]
  %v1025 = vld [vmem:[%s5 + $0x68] sm:$0xff]
  %v1026 = vld [vmem:[%s5 + $0x70] sm:$0xff]
  %v1027 = vld [vmem:[%s5 + $0x78] sm:$0xff]
  %v1028 = vld [vmem:[%s6] sm:$0x1]
  %v1030 = vperm.slane %v1028, 0
  %1032 = vmatpush.msra.mxu0 %v1027
  %1033 = vmatpush.msra.mxu0 %v1026
  %1034 = vmatpush.msra.mxu0 %v1025
  %1035 = vmatpush.msra.mxu0 %v1024
  %1036 = vmatpush.msra.mxu0 %v1023
  %1037 = vmatpush.msra.mxu0 %v1022
  %1038 = vmatpush.msra.mxu0 %v1021
  %1039 = vmatpush.msra.mxu0 %v1020
  %1040 = vmatpush.msra.mxu0 %v1019
  %1041 = vmatpush.msra.mxu0 %v1018
  %1042 = vmatpush.msra.mxu0 %v1017
  %1043 = vmatpush.msra.mxu0 %v1016
  %1044 = vmatpush.msra.mxu0 %v1015
  %1045 = vmatpush.msra.mxu0 %v1014
  %1046 = vmatpush.msra.mxu0 %v1013
  %1047 = vmatpush.msra.mxu0 %v1012
  %1048 = vmatmul.f32.gmra.mxu0 %v1010
  %v1049 = vpop.f32.mrf.mxu0
  %v1050 = vadd.f32 %v1030, %v1049
  %1051 = vmatmul.f32.gmra.mxu0 %v1011
  %v1052 = vpop.f32.mrf.mxu0
  %v1053 = vadd.f32 %v1030, %v1052
  %1054 = vdwg.mxu0
  %1055 = vst [vmem:[%s10] sm:$0xff] %v1050
  %1056 = vst [vmem:[%s10 + $0x8] sm:$0xff] %v1053
  %v1057 = vperm.slane %v996, 1
  %v1058 = vadd.f32 %v684, %v1057
  %v1059 = vperm.slane %v998, 1
  %v1060 = vadd.f32 %v686, %v1059
  %v1061 = vadd.f32 %v1058, %v1006
  %v1062 = vadd.f32 %v1060, %v1006
  %v1063 = vmax.f32 %v1061, 0.0
  %v1064 = vmax.f32 %v1062, 0.0
  %v1065 = vld [vmem:[%s5] sm:$0xff]
  %v1066 = vld [vmem:[%s5 + $0x8] sm:$0xff]
  %v1067 = vld [vmem:[%s5 + $0x10] sm:$0xff]
  %v1068 = vld [vmem:[%s5 + $0x18] sm:$0xff]
  %v1069 = vld [vmem:[%s5 + $0x20] sm:$0xff]
  %v1070 = vld [vmem:[%s5 + $0x28] sm:$0xff]
  %v1071 = vld [vmem:[%s5 + $0x30] sm:$0xff]
  %v1072 = vld [vmem:[%s5 + $0x38] sm:$0xff]
  %v1073 = vld [vmem:[%s5 + $0x40] sm:$0xff]
  %v1074 = vld [vmem:[%s5 + $0x48] sm:$0xff]
  %v1075 = vld [vmem:[%s5 + $0x50] sm:$0xff]
  %v1076 = vld [vmem:[%s5 + $0x58] sm:$0xff]
  %v1077 = vld [vmem:[%s5 + $0x60] sm:$0xff]
  %v1078 = vld [vmem:[%s5 + $0x68] sm:$0xff]
  %v1079 = vld [vmem:[%s5 + $0x70] sm:$0xff]
  %v1080 = vld [vmem:[%s5 + $0x78] sm:$0xff]
  %v1081 = vld [vmem:[%s6] sm:$0x1]
  %v1083 = vperm.slane %v1081, 0
  %1085 = vmatpush.msra.mxu0 %v1080
  %1086 = vmatpush.msra.mxu0 %v1079
  %1087 = vmatpush.msra.mxu0 %v1078
  %1088 = vmatpush.msra.mxu0 %v1077
  %1089 = vmatpush.msra.mxu0 %v1076
  %1090 = vmatpush.msra.mxu0 %v1075
  %1091 = vmatpush.msra.mxu0 %v1074
  %1092 = vmatpush.msra.mxu0 %v1073
  %1093 = vmatpush.msra.mxu0 %v1072
  %1094 = vmatpush.msra.mxu0 %v1071
  %1095 = vmatpush.msra.mxu0 %v1070
  %1096 = vmatpush.msra.mxu0 %v1069
  %1097 = vmatpush.msra.mxu0 %v1068
  %1098 = vmatpush.msra.mxu0 %v1067
  %1099 = vmatpush.msra.mxu0 %v1066
  %1100 = vmatpush.msra.mxu0 %v1065
  %1101 = vmatmul.f32.gmra.mxu0 %v1063
  %v1102 = vpop.f32.mrf.mxu0
  %v1103 = vadd.f32 %v1083, %v1102
  %1104 = vmatmul.f32.gmra.mxu0 %v1064
  %v1105 = vpop.f32.mrf.mxu0
  %v1106 = vadd.f32 %v1083, %v1105
  %1107 = vdwg.mxu0
  %1108 = vst [vmem:[%s10 + $0x10] sm:$0xff] %v1103
  %1109 = vst [vmem:[%s10 + $0x18] sm:$0xff] %v1106
  %v1110 = vperm.slane %v996, 2
  %v1111 = vadd.f32 %v684, %v1110
  %v1112 = vperm.slane %v998, 2
  %v1113 = vadd.f32 %v686, %v1112
  %v1114 = vadd.f32 %v1111, %v1006
  %v1115 = vadd.f32 %v1113, %v1006
  %v1116 = vmax.f32 %v1114, 0.0
  %v1117 = vmax.f32 %v1115, 0.0
  %v1118 = vld [vmem:[%s5] sm:$0xff]
  %v1119 = vld [vmem:[%s5 + $0x8] sm:$0xff]
  %v1120 = vld [vmem:[%s5 + $0x10] sm:$0xff]
  %v1121 = vld [vmem:[%s5 + $0x18] sm:$0xff]
  %v1122 = vld [vmem:[%s5 + $0x20] sm:$0xff]
  %v1123 = vld [vmem:[%s5 + $0x28] sm:$0xff]
  %v1124 = vld [vmem:[%s5 + $0x30] sm:$0xff]
  %v1125 = vld [vmem:[%s5 + $0x38] sm:$0xff]
  %v1126 = vld [vmem:[%s5 + $0x40] sm:$0xff]
  %v1127 = vld [vmem:[%s5 + $0x48] sm:$0xff]
  %v1128 = vld [vmem:[%s5 + $0x50] sm:$0xff]
  %v1129 = vld [vmem:[%s5 + $0x58] sm:$0xff]
  %v1130 = vld [vmem:[%s5 + $0x60] sm:$0xff]
  %v1131 = vld [vmem:[%s5 + $0x68] sm:$0xff]
  %v1132 = vld [vmem:[%s5 + $0x70] sm:$0xff]
  %v1133 = vld [vmem:[%s5 + $0x78] sm:$0xff]
  %v1134 = vld [vmem:[%s6] sm:$0x1]
  %v1136 = vperm.slane %v1134, 0
  %1138 = vmatpush.msra.mxu0 %v1133
  %1139 = vmatpush.msra.mxu0 %v1132
  %1140 = vmatpush.msra.mxu0 %v1131
  %1141 = vmatpush.msra.mxu0 %v1130
  %1142 = vmatpush.msra.mxu0 %v1129
  %1143 = vmatpush.msra.mxu0 %v1128
  %1144 = vmatpush.msra.mxu0 %v1127
  %1145 = vmatpush.msra.mxu0 %v1126
  %1146 = vmatpush.msra.mxu0 %v1125
  %1147 = vmatpush.msra.mxu0 %v1124
  %1148 = vmatpush.msra.mxu0 %v1123
  %1149 = vmatpush.msra.mxu0 %v1122
  %1150 = vmatpush.msra.mxu0 %v1121
  %1151 = vmatpush.msra.mxu0 %v1120
  %1152 = vmatpush.msra.mxu0 %v1119
  %1153 = vmatpush.msra.mxu0 %v1118
  %1154 = vmatmul.f32.gmra.mxu0 %v1116
  %v1155 = vpop.f32.mrf.mxu0
  %v1156 = vadd.f32 %v1136, %v1155
  %1157 = vmatmul.f32.gmra.mxu0 %v1117
  %v1158 = vpop.f32.mrf.mxu0
  %v1159 = vadd.f32 %v1136, %v1158
  %1160 = vdwg.mxu0
  %1161 = vst [vmem:[%s10 + $0x20] sm:$0xff] %v1156
  %1162 = vst [vmem:[%s10 + $0x28] sm:$0xff] %v1159
  // Predicated region
  $region38: #{_lambda_.7} parent=0 // pred_check
    _
  $region39: #{_lambda_.7} parent=0 // pred_check_branch
    %1164 = sbr.rel (0) target = $region41
  $region40: #{_lambda_.7} parent=0 // pred_region
    _
  $region41: #{_lambda_.7} parent=0 // pred_fallthru
    _
  // Predicated region
  $region42: #{_lambda_.7} parent=0 // pred_check
    _
  $region43: #{_lambda_.7} parent=0 // pred_check_branch
    %1166 = sbr.rel (0) target = $region45
  $region44: #{_lambda_.7} parent=0 // pred_region
    _
  $region45: #{_lambda_.7} parent=0 // pred_fallthru
    _
  // Predicated region
  $region46: #{_lambda_.7} parent=0 // pred_check
    _
  $region47: #{_lambda_.7} parent=0 // pred_check_branch
    %1168 = sbr.rel (0) target = $region49
  $region48: #{_lambda_.7} parent=0 // pred_region
    _
  $region49: #{_lambda_.7} parent=0 // pred_fallthru
    _
  // Predicated region
  $region50: #{_lambda_.7} parent=0 // pred_check
    _
  $region51: #{_lambda_.7} parent=0 // pred_check_branch
    %1170 = sbr.rel (0) target = $region53
  $region52: #{_lambda_.7} parent=0 // pred_region
    _
  $region53: #{_lambda_.7} parent=0 // pred_fallthru
    _

</llo_original>
